<compile_context>
chip_gen: v6e
topology: v6e:2x2x1
jax: 0.10.0
libtpu: 0.0.40
codegen_flags: <defaults>
</compile_context>

<pallas_src>
import jax
import jax.numpy as jnp
from jax.experimental import pallas as pl
from jax.experimental.pallas import tpu as pltpu


def self_attention_kernel(x_ref, wq_ref, wk_ref, wv_ref, wo_ref, bo_ref,
                          out_ref, attn_ref):
    # One grid point = one batch row, all heads at once.
    x = x_ref[0]                                   # (N, D)
    N, D = x.shape
    H = wq_ref.shape[0]                            # heads
    dt = x.dtype

    # Broadcast x over the head axis once; every per-head op below is then a
    # single batched einsum with a leading batch dim (no lane-dim relayouts).
    x_b = jnp.broadcast_to(x[None], (H, N, D))     # (H, N, D)

    # QKV projections per head (softmax scale pre-folded into Wq), fp32 MXU acc.
    q = jnp.einsum('hnd,hdk->hnk', x_b, wq_ref[...],
                   preferred_element_type=jnp.float32)        # (H, N, dh)
    k = jnp.einsum('hnd,hdk->hnk', x_b, wk_ref[...],
                   preferred_element_type=jnp.float32)        # (H, N, dh)
    v = jnp.einsum('hnd,hdk->hnk', x_b, wv_ref[...],
                   preferred_element_type=jnp.float32)        # (H, N, dh)

    # Scores + numerically stable softmax over keys (fp32 throughout).
    sim = jnp.einsum('hik,hjk->hij', q, k,
                     preferred_element_type=jnp.float32)      # (H, N, N)
    sim = sim - jnp.max(sim, axis=-1, keepdims=True)
    p = jnp.exp(sim)
    inv_den = pl.reciprocal(jnp.sum(p, axis=-1, keepdims=True), approx=False)
    attn = p * inv_den
    attn_ref[0] = attn.astype(attn_ref.dtype)

    # ctx = attn @ v  -> (H, N, dh); operands cast to input dtype for the MXU.
    ctx = jnp.einsum('hij,hjk->hik', attn.astype(dt), v.astype(dt),
                     preferred_element_type=jnp.float32)

    # Per-head slice of the output projection, reduced over heads
    # (leading-dim sum = plain vector adds), plus bias.
    partial = jnp.einsum('hik,hko->hio', ctx.astype(dt), wo_ref[...],
                         preferred_element_type=jnp.float32)  # (H, N, D)
    out = jnp.sum(partial, axis=0) + bo_ref[...].astype(jnp.float32)
    out_ref[0] = out.astype(out_ref.dtype)


def prepare_params(wqkv, wout, bout, *, heads, dim_head, dtype):
    """One-time host-side weight prep (hoisted out of the per-call path).

    wqkv: (D, 3*inner) [pre-transposed for x @ W]; wout: (inner, D); bout: (D,).
    Returns per-head weight stacks; the softmax scale is folded into Wq.
    """
    D = wqkv.shape[0]
    inner = heads * dim_head
    scale = dim_head ** (-0.5)
    wq = wqkv[:, 0 * inner:1 * inner].reshape(D, heads, dim_head).transpose(1, 0, 2)
    wk = wqkv[:, 1 * inner:2 * inner].reshape(D, heads, dim_head).transpose(1, 0, 2)
    wv = wqkv[:, 2 * inner:3 * inner].reshape(D, heads, dim_head).transpose(1, 0, 2)
    wq = (wq * scale).astype(dtype)            # fold softmax scale into Q projection
    wk = wk.astype(dtype)
    wv = wv.astype(dtype)
    wo = wout.reshape(heads, dim_head, D).astype(dtype)
    bo = bout.reshape(1, D).astype(dtype)
    return wq, wk, wv, wo, bo


def self_attention_forward(x, params, *, heads, dim_head):
    """x: (B, N, D); params from prepare_params(). Returns (out, attn)."""
    B, N, D = x.shape
    inner = heads * dim_head
    wq, wk, wv, wo, bo = params
    dt = x.dtype

    itemsize = jnp.dtype(dt).itemsize
    flops = (2 * B * N * D * 3 * inner            # qkv projections
             + 4 * B * heads * N * N * dim_head   # scores + attn @ v
             + 2 * B * N * inner * D)             # output projection
    bytes_accessed = ((B * N * D) * 2 * itemsize                   # x in, out
                      + (3 * D * inner + inner * D + D) * itemsize  # weights
                      + B * heads * N * N * 4)                     # attn out (fp32)

    out, attn = pl.pallas_call(
        self_attention_kernel,
        out_shape=(
            jax.ShapeDtypeStruct((B, N, D), dt),
            jax.ShapeDtypeStruct((B, heads, N, N), jnp.float32),
        ),
        grid_spec=pltpu.PrefetchScalarGridSpec(
            num_scalar_prefetch=0,
            grid=(B,),
            in_specs=[
                pl.BlockSpec((1, N, D), lambda b: (b, 0, 0)),               # x row
                pl.BlockSpec((heads, D, dim_head), lambda b: (0, 0, 0)),    # Wq
                pl.BlockSpec((heads, D, dim_head), lambda b: (0, 0, 0)),    # Wk
                pl.BlockSpec((heads, D, dim_head), lambda b: (0, 0, 0)),    # Wv
                pl.BlockSpec((heads, dim_head, D), lambda b: (0, 0, 0)),    # Wout
                pl.BlockSpec((1, D), lambda b: (0, 0)),                     # bias
            ],
            out_specs=(
                pl.BlockSpec((1, N, D), lambda b: (b, 0, 0)),               # out
                pl.BlockSpec((1, heads, N, N), lambda b: (b, 0, 0, 0)),     # attn
            ),
        ),
        compiler_params=pltpu.CompilerParams(
            dimension_semantics=("parallel",),        # batch rows -> both TCs on v7x
            vmem_limit_bytes=32 * 1024 * 1024,
        ),
        cost_estimate=pl.CostEstimate(
            flops=flops,
            transcendentals=B * heads * N * N,
            bytes_accessed=bytes_accessed),
    )(x, wq, wk, wv, wo, bo)
    return out, attn


def reference(x, wqkv, wout, bout, heads, dim_head):
    B, N, D = x.shape
    inner = heads * dim_head
    scale = dim_head ** (-0.5)
    qkv = x @ wqkv
    q, k, v = jnp.split(qkv, 3, axis=-1)

    def rearr(t):
        return t.reshape(B, N, heads, dim_head).transpose(0, 2, 1, 3)

    q, k, v = rearr(q), rearr(k), rearr(v)
    sim = jnp.einsum('bhid,bhjd->bhij', q, k) * scale
    attn = jax.nn.softmax(sim, axis=-1)
    out = jnp.einsum('bhij,bhjd->bhid', attn, v)
    out = out.transpose(0, 2, 1, 3).reshape(B, N, inner)
    return out @ wout + bout, attn


if __name__ == "__main__":
    key = jax.random.PRNGKey(0)
    B, N, D = 2, 8, 32          # batch, table columns (seq), channel dim
    heads, dim_head = 8, 16     # module defaults
    inner = heads * dim_head

    kx, kqkv, ko, kb = jax.random.split(key, 4)
    x = jax.random.normal(kx, (B, N, D), dtype=jnp.float32)
    # to_qkv: Linear(D, 3*inner, bias=False), stored pre-transposed for x @ W.
    wqkv = jax.random.normal(kqkv, (D, 3 * inner), dtype=jnp.float32) / jnp.sqrt(D)
    # to_out: Linear(inner, D) with bias.
    wout = jax.random.normal(ko, (inner, D), dtype=jnp.float32) / jnp.sqrt(inner)
    bout = jax.random.normal(kb, (D,), dtype=jnp.float32) * 0.01

    # One-time weight prep (module init time), not in the per-forward path.
    params = prepare_params(wqkv, wout, bout,
                            heads=heads, dim_head=dim_head, dtype=x.dtype)

    out, attn = self_attention_forward(x, params, heads=heads, dim_head=dim_head)
    out = jax.block_until_ready(out)
    attn = jax.block_until_ready(attn)

    ref_out, ref_attn = reference(x, wqkv, wout, bout, heads, dim_head)
    assert out.shape == (B, N, D)
    assert attn.shape == (B, heads, N, N)
    assert jnp.max(jnp.abs(out - ref_out)) < 2e-4, "output mismatch vs reference"
    assert jnp.max(jnp.abs(attn - ref_attn)) < 2e-5, "attn mismatch vs reference"

    print("KERNEL_OK")
</pallas_src>

<mosaic_0001>
module attributes {stable_mosaic.version = 11 : i64} {
  func.func @self_attention_kernel(%arg0: i32, %arg1: memref<1x8x32xf32, #tpu.memory_space<vmem>>, %arg2: memref<8x32x16xf32, #tpu.memory_space<vmem>>, %arg3: memref<8x32x16xf32, #tpu.memory_space<vmem>>, %arg4: memref<8x32x16xf32, #tpu.memory_space<vmem>>, %arg5: memref<8x16x32xf32, #tpu.memory_space<vmem>>, %arg6: memref<1x32xf32, #tpu.memory_space<vmem>>, %arg7: memref<1x8x32xf32, #tpu.memory_space<vmem>>, %arg8: memref<1x8x8x8xf32, #tpu.memory_space<vmem>>) attributes {dimension_semantics = [#tpu.dimension_semantics<parallel>], iteration_bounds = array<i64: 2>, scalar_prefetch = 0 : i64, scratch_operands = 0 : i64, tpu.core_type = #tpu.core_type<tc>, window_params = [{transform_indices = @transform_0, window_bounds = array<i64: 1, 8, 32>}, {pipeline_mode = #tpu.pipeline_mode<synchronous>, transform_indices = @transform_1, window_bounds = array<i64: 8, 32, 16>}, {pipeline_mode = #tpu.pipeline_mode<synchronous>, transform_indices = @transform_2, window_bounds = array<i64: 8, 32, 16>}, {pipeline_mode = #tpu.pipeline_mode<synchronous>, transform_indices = @transform_3, window_bounds = array<i64: 8, 32, 16>}, {pipeline_mode = #tpu.pipeline_mode<synchronous>, transform_indices = @transform_4, window_bounds = array<i64: 8, 16, 32>}, {pipeline_mode = #tpu.pipeline_mode<synchronous>, transform_indices = @transform_5, window_bounds = array<i64: 1, 32>}, {transform_indices = @transform_6, window_bounds = array<i64: 1, 8, 32>}, {transform_indices = @transform_7, window_bounds = array<i64: 1, 8, 8, 8>}]} {
    %c0 = arith.constant 0 : index
    %c0_0 = arith.constant 0 : index
    %c0_1 = arith.constant 0 : index
    %0 = vector.load %arg1[%c0, %c0_0, %c0_1] : memref<1x8x32xf32, #tpu.memory_space<vmem>>, vector<1x8x32xf32>
    %1 = vector.shape_cast %0 : vector<1x8x32xf32> to vector<8x32xf32>
    %2 = vector.shape_cast %1 : vector<8x32xf32> to vector<1x8x32xf32>
    %3 = vector.shape_cast %2 : vector<1x8x32xf32> to vector<1x8x32xf32>
    %4 = vector.broadcast %3 : vector<1x8x32xf32> to vector<8x8x32xf32>
    %c0_2 = arith.constant 0 : index
    %c0_3 = arith.constant 0 : index
    %c0_4 = arith.constant 0 : index
    %5 = vector.load %arg2[%c0_2, %c0_3, %c0_4] : memref<8x32x16xf32, #tpu.memory_space<vmem>>, vector<8x32x16xf32>
    "tpu.trace_start"() <{level = 10 : i32, message = "hnd,hdk->hnk"}> : () -> ()
    %cst = arith.constant dense<0.000000e+00> : vector<8x8x16xf32>
    %6 = tpu.matmul %4, %5, %cst {dimension_numbers = #tpu.dot_dimension_numbers<[2], [1], [1], [2], [0, 0, 0, 1, 1, 2], [0], [0]>} : vector<8x8x32xf32>, vector<8x32x16xf32>, vector<8x8x16xf32> -> vector<8x8x16xf32>
    "tpu.trace_stop"() : () -> ()
    %c0_5 = arith.constant 0 : index
    %c0_6 = arith.constant 0 : index
    %c0_7 = arith.constant 0 : index
    %7 = vector.load %arg3[%c0_5, %c0_6, %c0_7] : memref<8x32x16xf32, #tpu.memory_space<vmem>>, vector<8x32x16xf32>
    "tpu.trace_start"() <{level = 10 : i32, message = "hnd,hdk->hnk"}> : () -> ()
    %cst_8 = arith.constant dense<0.000000e+00> : vector<8x8x16xf32>
    %8 = tpu.matmul %4, %7, %cst_8 {dimension_numbers = #tpu.dot_dimension_numbers<[2], [1], [1], [2], [0, 0, 0, 1, 1, 2], [0], [0]>} : vector<8x8x32xf32>, vector<8x32x16xf32>, vector<8x8x16xf32> -> vector<8x8x16xf32>
    "tpu.trace_stop"() : () -> ()
    %c0_9 = arith.constant 0 : index
    %c0_10 = arith.constant 0 : index
    %c0_11 = arith.constant 0 : index
    %9 = vector.load %arg4[%c0_9, %c0_10, %c0_11] : memref<8x32x16xf32, #tpu.memory_space<vmem>>, vector<8x32x16xf32>
    "tpu.trace_start"() <{level = 10 : i32, message = "hnd,hdk->hnk"}> : () -> ()
    %cst_12 = arith.constant dense<0.000000e+00> : vector<8x8x16xf32>
    %10 = tpu.matmul %4, %9, %cst_12 {dimension_numbers = #tpu.dot_dimension_numbers<[2], [1], [1], [2], [0, 0, 0, 1, 1, 2], [0], [0]>} : vector<8x8x32xf32>, vector<8x32x16xf32>, vector<8x8x16xf32> -> vector<8x8x16xf32>
    "tpu.trace_stop"() : () -> ()
    "tpu.trace_start"() <{level = 10 : i32, message = "hik,hjk->hij"}> : () -> ()
    %cst_13 = arith.constant dense<0.000000e+00> : vector<8x8x8xf32>
    %11 = tpu.matmul %6, %8, %cst_13 {dimension_numbers = #tpu.dot_dimension_numbers<[2], [2], [1], [1], [0, 0, 0, 1, 1, 1], [0], [0]>} : vector<8x8x16xf32>, vector<8x8x16xf32>, vector<8x8x8xf32> -> vector<8x8x8xf32>
    "tpu.trace_stop"() : () -> ()
    %cst_14 = arith.constant dense<0xFF800000> : vector<8x8xf32>
    %12 = vector.multi_reduction <maximumf>, %11, %cst_14 [2] : vector<8x8x8xf32> to vector<8x8xf32>
    %13 = vector.shape_cast %12 : vector<8x8xf32> to vector<8x8x1xf32>
    %14 = vector.broadcast %13 : vector<8x8x1xf32> to vector<8x8x8xf32>
    %15 = arith.subf %11, %14 : vector<8x8x8xf32>
    %16 = math.exp %15 : vector<8x8x8xf32>
    %cst_15 = arith.constant dense<0.000000e+00> : vector<8x8xf32>
    %17 = vector.multi_reduction <add>, %16, %cst_15 [2] : vector<8x8x8xf32> to vector<8x8xf32>
    %18 = vector.shape_cast %17 : vector<8x8xf32> to vector<8x8x1xf32>
    %19 = tpu.reciprocal %18 : vector<8x8x1xf32> -> vector<8x8x1xf32>
    %20 = vector.broadcast %19 : vector<8x8x1xf32> to vector<8x8x8xf32>
    %21 = arith.mulf %16, %20 : vector<8x8x8xf32>
    %c0_16 = arith.constant 0 : index
    %c0_17 = arith.constant 0 : index
    %c0_18 = arith.constant 0 : index
    %c0_19 = arith.constant 0 : index
    %22 = vector.load %arg8[%c0_16, %c0_17, %c0_18, %c0_19] : memref<1x8x8x8xf32, #tpu.memory_space<vmem>>, vector<1x8x8x8xf32>
    %23 = vector.shape_cast %22 : vector<1x8x8x8xf32> to vector<8x8x8xf32>
    %24 = vector.shape_cast %21 : vector<8x8x8xf32> to vector<1x8x8x8xf32>
    tpu.vector_store %arg8[%c0_16, %c0_17, %c0_18, %c0_19], %24 {strides = array<i32>} : memref<1x8x8x8xf32, #tpu.memory_space<vmem>>, vector<1x8x8x8xf32>,
    "tpu.trace_start"() <{level = 10 : i32, message = "hij,hjk->hik"}> : () -> ()
    %cst_20 = arith.constant dense<0.000000e+00> : vector<8x8x16xf32>
    %25 = tpu.matmul %21, %10, %cst_20 {dimension_numbers = #tpu.dot_dimension_numbers<[2], [1], [1], [2], [0, 0, 0, 1, 1, 2], [0], [0]>} : vector<8x8x8xf32>, vector<8x8x16xf32>, vector<8x8x16xf32> -> vector<8x8x16xf32>
    "tpu.trace_stop"() : () -> ()
    %c0_21 = arith.constant 0 : index
    %c0_22 = arith.constant 0 : index
    %c0_23 = arith.constant 0 : index
    %26 = vector.load %arg5[%c0_21, %c0_22, %c0_23] : memref<8x16x32xf32, #tpu.memory_space<vmem>>, vector<8x16x32xf32>
    "tpu.trace_start"() <{level = 10 : i32, message = "hik,hko->hio"}> : () -> ()
    %cst_24 = arith.constant dense<0.000000e+00> : vector<8x8x32xf32>
    %27 = tpu.matmul %25, %26, %cst_24 {dimension_numbers = #tpu.dot_dimension_numbers<[2], [1], [1], [2], [0, 0, 0, 1, 1, 2], [0], [0]>} : vector<8x8x16xf32>, vector<8x16x32xf32>, vector<8x8x32xf32> -> vector<8x8x32xf32>
    "tpu.trace_stop"() : () -> ()
    %cst_25 = arith.constant dense<0.000000e+00> : vector<8x32xf32>
    %28 = vector.multi_reduction <add>, %27, %cst_25 [0] : vector<8x8x32xf32> to vector<8x32xf32>
    %c0_26 = arith.constant 0 : index
    %c0_27 = arith.constant 0 : index
    %29 = vector.load %arg6[%c0_26, %c0_27] : memref<1x32xf32, #tpu.memory_space<vmem>>, vector<1x32xf32>
    %30 = vector.broadcast %29 : vector<1x32xf32> to vector<8x32xf32>
    %31 = arith.addf %28, %30 : vector<8x32xf32>
    %c0_28 = arith.constant 0 : index
    %c0_29 = arith.constant 0 : index
    %c0_30 = arith.constant 0 : index
    %32 = vector.load %arg7[%c0_28, %c0_29, %c0_30] : memref<1x8x32xf32, #tpu.memory_space<vmem>>, vector<1x8x32xf32>
    %33 = vector.shape_cast %32 : vector<1x8x32xf32> to vector<8x32xf32>
    %34 = vector.shape_cast %31 : vector<8x32xf32> to vector<1x8x32xf32>
    tpu.vector_store %arg7[%c0_28, %c0_29, %c0_30], %34 {strides = array<i32>} : memref<1x8x32xf32, #tpu.memory_space<vmem>>, vector<1x8x32xf32>,
    return
  }
  func.func @transform_0(%arg0: i32) -> (i32, i32, i32) {
    %c0_i32 = arith.constant 0 : i32
    %c0_i32_0 = arith.constant 0 : i32
    %c0_i32_1 = arith.constant 0 : i32
    return %arg0, %c0_i32, %c0_i32_0 : i32, i32, i32
  }
  func.func @transform_1(%arg0: i32) -> (i32, i32, i32) {
    %c0_i32 = arith.constant 0 : i32
    %c0_i32_0 = arith.constant 0 : i32
    %c0_i32_1 = arith.constant 0 : i32
    %c0_i32_2 = arith.constant 0 : i32
    return %c0_i32, %c0_i32_0, %c0_i32_1 : i32, i32, i32
  }
  func.func @transform_2(%arg0: i32) -> (i32, i32, i32) {
    %c0_i32 = arith.constant 0 : i32
    %c0_i32_0 = arith.constant 0 : i32
    %c0_i32_1 = arith.constant 0 : i32
    %c0_i32_2 = arith.constant 0 : i32
    return %c0_i32, %c0_i32_0, %c0_i32_1 : i32, i32, i32
  }
  func.func @transform_3(%arg0: i32) -> (i32, i32, i32) {
    %c0_i32 = arith.constant 0 : i32
    %c0_i32_0 = arith.constant 0 : i32
    %c0_i32_1 = arith.constant 0 : i32
    %c0_i32_2 = arith.constant 0 : i32
    return %c0_i32, %c0_i32_0, %c0_i32_1 : i32, i32, i32
  }
  func.func @transform_4(%arg0: i32) -> (i32, i32, i32) {
    %c0_i32 = arith.constant 0 : i32
    %c0_i32_0 = arith.constant 0 : i32
    %c0_i32_1 = arith.constant 0 : i32
    %c0_i32_2 = arith.constant 0 : i32
    return %c0_i32, %c0_i32_0, %c0_i32_1 : i32, i32, i32
  }
  func.func @transform_5(%arg0: i32) -> (i32, i32) {
    %c0_i32 = arith.constant 0 : i32
    %c0_i32_0 = arith.constant 0 : i32
    %c0_i32_1 = arith.constant 0 : i32
    return %c0_i32, %c0_i32_0 : i32, i32
  }
  func.func @transform_6(%arg0: i32) -> (i32, i32, i32) {
    %c0_i32 = arith.constant 0 : i32
    %c0_i32_0 = arith.constant 0 : i32
    %c0_i32_1 = arith.constant 0 : i32
    return %arg0, %c0_i32, %c0_i32_0 : i32, i32, i32
  }
  func.func @transform_7(%arg0: i32) -> (i32, i32, i32, i32) {
    %c0_i32 = arith.constant 0 : i32
    %c0_i32_0 = arith.constant 0 : i32
    %c0_i32_1 = arith.constant 0 : i32
    %c0_i32_2 = arith.constant 0 : i32
    return %arg0, %c0_i32, %c0_i32_0, %c0_i32_1 : i32, i32, i32, i32
  }
}

</mosaic_0001>

<llo_original>
// kernel: tpu_custom_call.1
$region0: #{tpu_custom_call.1}
  #allocation0 [shape = 'u32[]', space=smem, size = 0x4, offset = 0x4, fixed_abs, tag = 'smem constant byte address 0x4 - core index']
  #allocation1 [shape = 'u32[144,128]{1,0:T(1,128)}', space=vmem, size = 0x12000, scoped, tag = 'internal scratch']
  %s0 = inlined_call_operand.vmem [shape: f32[2,8,32], index: 0, kind: input, shape index: {}]
  %s1 = inlined_call_operand.vmem [shape: f32[8,32,16], index: 1, kind: input, shape index: {}]
  %s2 = inlined_call_operand.vmem [shape: f32[8,32,16], index: 2, kind: input, shape index: {}]
  %s3 = inlined_call_operand.vmem [shape: f32[8,32,16], index: 3, kind: input, shape index: {}]
  %s4 = inlined_call_operand.vmem [shape: f32[8,16,32], index: 4, kind: input, shape index: {}]
  %s5 = inlined_call_operand.vmem [shape: f32[1,32], index: 5, kind: input, shape index: {}]
  %s6 = inlined_call_operand.hbm [shape: f32[2,8,32], index: 6, kind: output, shape index: {0}]
  %s7 = inlined_call_operand.hbm [shape: f32[2,8,8,8], index: 7, kind: output, shape index: {1}]
  %8 = xla_tuple %s6, %s7
  %s9 = sld [smem:[#allocation0]]
  $region65: #{tpu_custom_call.1} parent=0
    _
  %s11 = ssub.s32 1, %s9
  %s12 = scalar_select 0, %s11, %s9
  $region1: #{tpu_custom_call.1} parent=0
    #allocation2 [shape = 'u8[8192]{0}', space=vmem, size = 0x2000, scoped, tag = 'output window, operand 0']
    #allocation3 [shape = 's32[2]{0}', space=sflag, size = 0x8, scoped, tag = 'scoped memory for tpu_custom_call.1']
    #allocation4 [shape = 'u8[65536]{0}', space=vmem, size = 0x10000, scoped, tag = 'output window, operand 1']
    #allocation5 [shape = 's32[2]{0}', space=sflag, size = 0x8, scoped, tag = 'scoped memory for tpu_custom_call.1']
    %13 = vsyncpa [#allocation3], 0
    %s14 = scalar_lea.sflag [#allocation3], 1
    %15 = vsyncpa %s14, 0
    %16 = vsyncpa [#allocation5], 0
    %s17 = scalar_lea.sflag [#allocation5], 1
    %18 = vsyncpa %s17, 0
    loop: start=0, step=1, limit=4
    $region2: #{tpu_custom_call.1} parent=1 // loop_pre_header
      _
    $region3: #{tpu_custom_call.1} parent=1 // loop_header
      %s20 = sphi 0, %s24
      %p21 = scmp.ge.s32.totalorder %s20, 4
      %s30 = sphi 0, %s32
      %s33 = sphi 0, %s30
      %s34 = sphi 0, %s33
      %s50 = sphi 0, %s34
      %s54 = sphi 0, %s54
      %s56 = sphi 0, %s54
      %s57 = sphi 0, %s56
      %s71 = sphi 0, %s57
      %s75 = sphi 0, %s75
      %s77 = sphi 0, %s75
      %s78 = sphi 0, %s77
      %s92 = sphi 0, %s78
      %s96 = sphi 0, %s96
      %s98 = sphi 0, %s96
      %s99 = sphi 0, %s98
      %s113 = sphi 0, %s99
      %s117 = sphi 0, %s117
      %s119 = sphi 0, %s117
      %s120 = sphi 0, %s119
      %s134 = sphi 0, %s120
      %s138 = sphi 0, %s138
      %s140 = sphi 0, %s138
      %s141 = sphi 0, %s140
      %s155 = sphi 0, %s141
      %s161 = sphi 0, %s163
      %s164 = sphi 0, %s161
      %s165 = sphi 0, %s164
      %s181 = sphi 0, %s165
      %s187 = sphi 0, %s189
      %s190 = sphi 0, %s187
      %s191 = sphi 0, %s190
      %s207 = sphi 0, %s191
    $region4: #{tpu_custom_call.1} parent=1 // loop_header_branch
      %23 = sbr.rel (%p21) target = $region8
    $region5: #{tpu_custom_call.1} parent=1 // loop_body
      %s25 = ssub.s32 %s20, 1
      %s26 = ssub.s32 %s20, 2
      %s27 = sadd.s32 %s20, 1
      %s28 = ssub.s32 %s20, %s27
      %p29 = scmp.eq.s32.totalorder %s28, 0
      %s31 = sadd.s32 %s30, 1
      %s32 = scalar_select %p29, %s30, %s31
      %p35 = pneg %p29
      %p36 = scmp.eq.s32.totalorder %s20, 1
      %p37 = por %p35, %p36
      %p38 = scmp.ne.s32.totalorder %s30, %s33
      %p39 = scmp.eq.s32.totalorder %s20, 0
      %p40 = por %p38, %p39
      %p41 = scmp.ne.s32.totalorder %s30, %s33
      %p42 = scmp.eq.s32.totalorder %s25, 1
      %p43 = por %p41, %p42
      %p44 = scmp.ne.s32.totalorder %s33, %s34
      %p45 = scmp.eq.s32.totalorder %s25, 0
      %p46 = por %p44, %p45
      %p47 = scmp.ne.s32.totalorder %s33, %s34
      %p48 = scmp.eq.s32.totalorder %s26, 1
      %p49 = por %p47, %p48
      %p51 = scmp.ne.s32.totalorder %s34, %s50
      %p52 = scmp.eq.s32.totalorder %s26, 0
      %p53 = por %p51, %p52
      %s55 = sadd.s32 %s54, 1
      %p58 = scmp.eq.s32.totalorder %s20, 1
      %p59 = scmp.ne.s32.totalorder %s54, %s56
      %p60 = scmp.eq.s32.totalorder %s20, 0
      %p61 = por %p59, %p60
      %p62 = scmp.ne.s32.totalorder %s54, %s56
      %p63 = scmp.eq.s32.totalorder %s25, 1
      %p64 = por %p62, %p63
      %p65 = scmp.ne.s32.totalorder %s56, %s57
      %p66 = scmp.eq.s32.totalorder %s25, 0
      %p67 = por %p65, %p66
      %p68 = scmp.ne.s32.totalorder %s56, %s57
      %p69 = scmp.eq.s32.totalorder %s26, 1
      %p70 = por %p68, %p69
      %p72 = scmp.ne.s32.totalorder %s57, %s71
      %p73 = scmp.eq.s32.totalorder %s26, 0
      %p74 = por %p72, %p73
      %s76 = sadd.s32 %s75, 1
      %p79 = scmp.eq.s32.totalorder %s20, 1
      %p80 = scmp.ne.s32.totalorder %s75, %s77
      %p81 = scmp.eq.s32.totalorder %s20, 0
      %p82 = por %p80, %p81
      %p83 = scmp.ne.s32.totalorder %s75, %s77
      %p84 = scmp.eq.s32.totalorder %s25, 1
      %p85 = por %p83, %p84
      %p86 = scmp.ne.s32.totalorder %s77, %s78
      %p87 = scmp.eq.s32.totalorder %s25, 0
      %p88 = por %p86, %p87
      %p89 = scmp.ne.s32.totalorder %s77, %s78
      %p90 = scmp.eq.s32.totalorder %s26, 1
      %p91 = por %p89, %p90
      %p93 = scmp.ne.s32.totalorder %s78, %s92
      %p94 = scmp.eq.s32.totalorder %s26, 0
      %p95 = por %p93, %p94
      %s97 = sadd.s32 %s96, 1
      %p100 = scmp.eq.s32.totalorder %s20, 1
      %p101 = scmp.ne.s32.totalorder %s96, %s98
      %p102 = scmp.eq.s32.totalorder %s20, 0
      %p103 = por %p101, %p102
      %p104 = scmp.ne.s32.totalorder %s96, %s98
      %p105 = scmp.eq.s32.totalorder %s25, 1
      %p106 = por %p104, %p105
      %p107 = scmp.ne.s32.totalorder %s98, %s99
      %p108 = scmp.eq.s32.totalorder %s25, 0
      %p109 = por %p107, %p108
      %p110 = scmp.ne.s32.totalorder %s98, %s99
      %p111 = scmp.eq.s32.totalorder %s26, 1
      %p112 = por %p110, %p111
      %p114 = scmp.ne.s32.totalorder %s99, %s113
      %p115 = scmp.eq.s32.totalorder %s26, 0
      %p116 = por %p114, %p115
      %s118 = sadd.s32 %s117, 1
      %p121 = scmp.eq.s32.totalorder %s20, 1
      %p122 = scmp.ne.s32.totalorder %s117, %s119
      %p123 = scmp.eq.s32.totalorder %s20, 0
      %p124 = por %p122, %p123
      %p125 = scmp.ne.s32.totalorder %s117, %s119
      %p126 = scmp.eq.s32.totalorder %s25, 1
      %p127 = por %p125, %p126
      %p128 = scmp.ne.s32.totalorder %s119, %s120
      %p129 = scmp.eq.s32.totalorder %s25, 0
      %p130 = por %p128, %p129
      %p131 = scmp.ne.s32.totalorder %s119, %s120
      %p132 = scmp.eq.s32.totalorder %s26, 1
      %p133 = por %p131, %p132
      %p135 = scmp.ne.s32.totalorder %s120, %s134
      %p136 = scmp.eq.s32.totalorder %s26, 0
      %p137 = por %p135, %p136
      %s139 = sadd.s32 %s138, 1
      %p142 = scmp.eq.s32.totalorder %s20, 1
      %p143 = scmp.ne.s32.totalorder %s138, %s140
      %p144 = scmp.eq.s32.totalorder %s20, 0
      %p145 = por %p143, %p144
      %p146 = scmp.ne.s32.totalorder %s138, %s140
      %p147 = scmp.eq.s32.totalorder %s25, 1
      %p148 = por %p146, %p147
      %p149 = scmp.ne.s32.totalorder %s140, %s141
      %p150 = scmp.eq.s32.totalorder %s25, 0
      %p151 = por %p149, %p150
      %p152 = scmp.ne.s32.totalorder %s140, %s141
      %p153 = scmp.eq.s32.totalorder %s26, 1
      %p154 = por %p152, %p153
      %p156 = scmp.ne.s32.totalorder %s141, %s155
      %p157 = scmp.eq.s32.totalorder %s26, 0
      %p158 = por %p156, %p157
      %s159 = ssub.s32 %s20, %s27
      %p160 = scmp.eq.s32.totalorder %s159, 0
      %s162 = sadd.s32 %s161, 1
      %s163 = scalar_select %p160, %s161, %s162
      %p166 = pneg %p160
      %p167 = scmp.eq.s32.totalorder %s20, 1
      %p168 = por %p166, %p167
      %p169 = scmp.ne.s32.totalorder %s161, %s164
      %p170 = scmp.eq.s32.totalorder %s20, 0
      %p171 = por %p169, %p170
      %p172 = scmp.ne.s32.totalorder %s161, %s164
      %p173 = scmp.eq.s32.totalorder %s25, 1
      %p174 = por %p172, %p173
      %p175 = scmp.ne.s32.totalorder %s164, %s165
      %p176 = scmp.eq.s32.totalorder %s25, 0
      %p177 = por %p175, %p176
      %p178 = scmp.ne.s32.totalorder %s164, %s165
      %p179 = scmp.eq.s32.totalorder %s26, 1
      %p180 = por %p178, %p179
      %p182 = scmp.ne.s32.totalorder %s165, %s181
      %p183 = scmp.eq.s32.totalorder %s26, 0
      %p184 = por %p182, %p183
      %s185 = ssub.s32 %s20, %s27
      %p186 = scmp.eq.s32.totalorder %s185, 0
      %s188 = sadd.s32 %s187, 1
      %s189 = scalar_select %p186, %s187, %s188
      %p192 = pneg %p186
      %p193 = scmp.eq.s32.totalorder %s20, 1
      %p194 = por %p192, %p193
      %p195 = scmp.ne.s32.totalorder %s187, %s190
      %p196 = scmp.eq.s32.totalorder %s20, 0
      %p197 = por %p195, %p196
      %p198 = scmp.ne.s32.totalorder %s187, %s190
      %p199 = scmp.eq.s32.totalorder %s25, 1
      %p200 = por %p198, %p199
      %p201 = scmp.ne.s32.totalorder %s190, %s191
      %p202 = scmp.eq.s32.totalorder %s25, 0
      %p203 = por %p201, %p202
      %p204 = scmp.ne.s32.totalorder %s190, %s191
      %p205 = scmp.eq.s32.totalorder %s26, 1
      %p206 = por %p204, %p205
      %p208 = scmp.ne.s32.totalorder %s191, %s207
      %p209 = scmp.eq.s32.totalorder %s26, 0
      %p210 = por %p208, %p209
      %p211 = scmp.le.s32.totalorder 1, %s20
      %p212 = scmp.lt.s32.totalorder %s20, 3
      %p213 = pnand %p211, %p212
      %p214 = pneg %p213
      // Predicated region
      $region9: #{tpu_custom_call.1} parent=5 // pred_check
        _
      $region10: #{tpu_custom_call.1} parent=5 // pred_check_branch
        %216 = sbr.rel (%p213) target = $region12
      $region11: #{tpu_custom_call.1} parent=5 // pred_region
        %s217 = ssub.s32 %s20, 1
        // Predicated region
        $region13: #{tpu_custom_call.1} parent=11 // pred_check
          %p218 = pneg %p67
        $region14: #{tpu_custom_call.1} parent=11 // pred_check_branch
          %220 = sbr.rel (%p218) target = $region16
        $region15: #{tpu_custom_call.1} parent=11 // pred_region
          _
        $region16: #{tpu_custom_call.1} parent=11 // pred_fallthru
          _
        // Predicated region
        $region17: #{tpu_custom_call.1} parent=11 // pred_check
          %p221 = pneg %p88
        $region18: #{tpu_custom_call.1} parent=11 // pred_check_branch
          %223 = sbr.rel (%p221) target = $region20
        $region19: #{tpu_custom_call.1} parent=11 // pred_region
          _
        $region20: #{tpu_custom_call.1} parent=11 // pred_fallthru
          _
        // Predicated region
        $region21: #{tpu_custom_call.1} parent=11 // pred_check
          %p224 = pneg %p109
        $region22: #{tpu_custom_call.1} parent=11 // pred_check_branch
          %226 = sbr.rel (%p224) target = $region24
        $region23: #{tpu_custom_call.1} parent=11 // pred_region
          _
        $region24: #{tpu_custom_call.1} parent=11 // pred_fallthru
          _
        // Predicated region
        $region25: #{tpu_custom_call.1} parent=11 // pred_check
          %p227 = pneg %p130
        $region26: #{tpu_custom_call.1} parent=11 // pred_check_branch
          %229 = sbr.rel (%p227) target = $region28
        $region27: #{tpu_custom_call.1} parent=11 // pred_region
          _
        $region28: #{tpu_custom_call.1} parent=11 // pred_fallthru
          _
        // Predicated region
        $region29: #{tpu_custom_call.1} parent=11 // pred_check
          %p230 = pneg %p151
        $region30: #{tpu_custom_call.1} parent=11 // pred_check_branch
          %232 = sbr.rel (%p230) target = $region32
        $region31: #{tpu_custom_call.1} parent=11 // pred_region
          _
        $region32: #{tpu_custom_call.1} parent=11 // pred_fallthru
          _
      $region12: #{tpu_custom_call.1} parent=5 // pred_fallthru
        _
      %p233 = scmp.lt.s32.totalorder %s20, 2
      // Predicated region
      $region33: #{tpu_custom_call.1} parent=5 // pred_check
        %p234 = pneg %p233
      $region34: #{tpu_custom_call.1} parent=5 // pred_check_branch
        %236 = sbr.rel (%p234) target = $region36
      $region35: #{tpu_custom_call.1} parent=5 // pred_region
        // Predicated region
        $region37: #{tpu_custom_call.1} parent=35 // pred_check
          %p237 = pneg %p40
        $region38: #{tpu_custom_call.1} parent=35 // pred_check_branch
          %239 = sbr.rel (%p237) target = $region40
        $region39: #{tpu_custom_call.1} parent=35 // pred_region
          %p240 = scmp.lt.s32.totalorder %s20, 1
          %s241 = scalar_select %p240, %s20, 1
          %s242 = smul.addr %s241, 8
          %s243 = scalar_lea.vmem %s0, %s242
        $region40: #{tpu_custom_call.1} parent=35 // pred_fallthru
          _
      $region36: #{tpu_custom_call.1} parent=5 // pred_fallthru
        _
      %p244 = scmp.le.s32.totalorder 1, %s20
      %p245 = scmp.lt.s32.totalorder %s20, 3
      %p246 = pnand %p244, %p245
      %p247 = pneg %p246
      // Predicated region
      $region41: #{tpu_custom_call.1} parent=5 // pred_check
        _
      $region42: #{tpu_custom_call.1} parent=5 // pred_check_branch
        %249 = sbr.rel (%p246) target = $region44
      $region43: #{tpu_custom_call.1} parent=5 // pred_region
        %s250 = ssub.s32 %s20, 1
        %p251 = scmp.lt.s32.totalorder %s25, 1
        %s252 = scalar_select %p251, %s25, 1
        %s253 = smul.addr %s252, 8
        %s254 = scalar_lea.vmem %s0, %s253
        %p255 = pneg %p46
        %p256 = pneg %p43
        %p257 = pneg %p67
        %p258 = pneg %p64
        %p259 = pneg %p88
        %p260 = pneg %p85
        %p261 = pneg %p109
        %p262 = pneg %p106
        %p263 = pneg %p130
        %p264 = pneg %p127
        %p265 = pneg %p151
        %p266 = pneg %p148
        %p267 = pneg %p177
        %p268 = pneg %p174
        %s269 = sand.u32 %s164, 1
        %s270 = scalar_lea.sflag [#allocation3], %s269
        %s271 = sand.u32 %s164, 1
        %s272 = smul.addr %s271, 8
        %s273 = scalar_lea.vmem [#allocation2], %s272
        %p274 = pneg %p203
        %p275 = pneg %p200
        %s276 = sand.u32 %s190, 1
        %s277 = scalar_lea.sflag [#allocation5], %s276
        %s278 = sand.u32 %s190, 1
        %s279 = smul.addr %s278, 64
        %s280 = scalar_lea.vmem [#allocation4], %s279
        %p281 = scmp.lt.s32.totalorder %s25, 1
        %s282 = scalar_select %p281, %s25, 1
        %s283 = smul.addr %s282, 8
        %s284 = scalar_lea.vmem %s0, %s283
        %v285 = vld [vmem:[%s284] sm:$0xff]
        %v286 = vld [vmem:[%s1] sm:$0xff]
        %v287 = vld [vmem:[%s1 + $0x8] sm:$0xff]
        %v288 = vld [vmem:[%s1 + $0x10] sm:$0xff]
        %v289 = vld [vmem:[%s1 + $0x18] sm:$0xff]
        %v290 = vld [vmem:[%s1 + $0x20] sm:$0xff]
        %v291 = vld [vmem:[%s1 + $0x28] sm:$0xff]
        %v292 = vld [vmem:[%s1 + $0x30] sm:$0xff]
        %v293 = vld [vmem:[%s1 + $0x38] sm:$0xff]
        %v294 = vld [vmem:[%s1 + $0x40] sm:$0xff]
        %v295 = vld [vmem:[%s1 + $0x48] sm:$0xff]
        %v296 = vld [vmem:[%s1 + $0x50] sm:$0xff]
        %v297 = vld [vmem:[%s1 + $0x58] sm:$0xff]
        %v298 = vld [vmem:[%s1 + $0x60] sm:$0xff]
        %v299 = vld [vmem:[%s1 + $0x68] sm:$0xff]
        %v300 = vld [vmem:[%s1 + $0x70] sm:$0xff]
        %v301 = vld [vmem:[%s1 + $0x78] sm:$0xff]
        %v302 = vld [vmem:[%s1 + $0x80] sm:$0xff]
        %v303 = vld [vmem:[%s1 + $0x88] sm:$0xff]
        %v304 = vld [vmem:[%s1 + $0x90] sm:$0xff]
        %v305 = vld [vmem:[%s1 + $0x98] sm:$0xff]
        %v306 = vld [vmem:[%s1 + $0xa0] sm:$0xff]
        %v307 = vld [vmem:[%s1 + $0xa8] sm:$0xff]
        %v308 = vld [vmem:[%s1 + $0xb0] sm:$0xff]
        %v309 = vld [vmem:[%s1 + $0xb8] sm:$0xff]
        %v310 = vld [vmem:[%s1 + $0xc0] sm:$0xff]
        %v311 = vld [vmem:[%s1 + $0xc8] sm:$0xff]
        %v312 = vld [vmem:[%s1 + $0xd0] sm:$0xff]
        %v313 = vld [vmem:[%s1 + $0xd8] sm:$0xff]
        %v314 = vld [vmem:[%s1 + $0xe0] sm:$0xff]
        %v315 = vld [vmem:[%s1 + $0xe8] sm:$0xff]
        %v316 = vld [vmem:[%s1 + $0xf0] sm:$0xff]
        %v317 = vld [vmem:[%s1 + $0xf8] sm:$0xff]
        %vm318 = vcmask 261120
        %v320 = vsel %vm318, %v285, 0
        %322 = vmatprep.subr.mxu0 0.0
        %323 = vmatpush1.msra.mxu0 0.0
        %324 = vmatprep.subr.mxu0 0.0
        %325 = vmatpush1.msra.mxu0 0.0
        %326 = vmatprep.subr.mxu0 0.0
        %327 = vmatpush1.msra.mxu0 0.0
        %328 = vmatprep.subr.mxu0 0.0
        %329 = vmatpush1.msra.mxu0 0.0
        %330 = vmatprep.subr.mxu0 0.0
        %331 = vmatpush1.msra.mxu0 0.0
        %332 = vmatprep.subr.mxu0 0.0
        %333 = vmatpush1.msra.mxu0 0.0
        %334 = vmatprep.subr.mxu0 0.0
        %335 = vmatpush1.msra.mxu0 0.0
        %336 = vmatprep.subr.mxu0 0.0
        %337 = vmatpush1.msra.mxu0 0.0
        %338 = vmatprep.subr.mxu0 0.0
        %339 = vmatpush1.msra.mxu0 0.0
        %340 = vmatprep.subr.mxu0 0.0
        %341 = vmatpush1.msra.mxu0 0.0
        %342 = vmatprep.subr.mxu0 0.0
        %343 = vmatpush1.msra.mxu0 0.0
        %344 = vmatprep.subr.mxu0 0.0
        %345 = vmatpush1.msra.mxu0 0.0
        %346 = vmatprep.subr.mxu0 0.0
        %347 = vmatpush1.msra.mxu0 %v289
        %348 = vmatprep.subr.mxu0 0.0
        %349 = vmatpush1.msra.mxu0 %v288
        %350 = vmatprep.subr.mxu0 0.0
        %351 = vmatpush1.msra.mxu0 %v287
        %352 = vmatprep.subr.mxu0 0.0
        %353 = vmatpush1.msra.mxu0 %v286
        %354 = vmatprep.subr.mxu0 0.0
        %355 = vmatpush2.msra.mxu0 0.0
        %356 = vmatprep.subr.mxu0 0.0
        %357 = vmatpush2.msra.mxu0 0.0
        %358 = vmatprep.subr.mxu0 0.0
        %359 = vmatpush2.msra.mxu0 0.0
        %360 = vmatprep.subr.mxu0 0.0
        %361 = vmatpush2.msra.mxu0 0.0
        %362 = vmatprep.subr.mxu0 0.0
        %363 = vmatpush2.msra.mxu0 0.0
        %364 = vmatprep.subr.mxu0 0.0
        %365 = vmatpush2.msra.mxu0 0.0
        %366 = vmatprep.subr.mxu0 0.0
        %367 = vmatpush2.msra.mxu0 0.0
        %368 = vmatprep.subr.mxu0 0.0
        %369 = vmatpush2.msra.mxu0 0.0
        %370 = vmatprep.subr.mxu0 0.0
        %371 = vmatpush2.msra.mxu0 0.0
        %372 = vmatprep.subr.mxu0 0.0
        %373 = vmatpush2.msra.mxu0 0.0
        %374 = vmatprep.subr.mxu0 0.0
        %375 = vmatpush2.msra.mxu0 0.0
        %376 = vmatprep.subr.mxu0 0.0
        %377 = vmatpush2.msra.mxu0 0.0
        %378 = vmatprep.subr.mxu0 0.0
        %379 = vmatpush2.msra.mxu0 0.0
        %380 = vmatprep.subr.mxu0 0.0
        %381 = vmatpush2.msra.mxu0 0.0
        %382 = vmatprep.subr.mxu0 0.0
        %383 = vmatpush2.msra.mxu0 0.0
        %384 = vmatprep.subr.mxu0 0.0
        %385 = vmatpush2.msra.mxu0 0.0
        %386 = vmatprep.mubr.f32.mxu0 0.0
        %387 = vmatmul.mubr.f32.gmra.mxu0 %v320
        %v388 = vpop.f32.mrf.mxu0
        %v389 = vadd.f32 0.0, %v388
        %v390 = vpop.f32.mrf.mxu0
        %391 = vdwg.mxu0
        %392 = vmatprep.subr.mxu0 0.0
        %393 = vmatpush1.msra.mxu0 0.0
        %394 = vmatprep.subr.mxu0 0.0
        %395 = vmatpush1.msra.mxu0 0.0
        %396 = vmatprep.subr.mxu0 0.0
        %397 = vmatpush1.msra.mxu0 0.0
        %398 = vmatprep.subr.mxu0 0.0
        %399 = vmatpush1.msra.mxu0 0.0
        %400 = vmatprep.subr.mxu0 0.0
        %401 = vmatpush1.msra.mxu0 0.0
        %402 = vmatprep.subr.mxu0 0.0
        %403 = vmatpush1.msra.mxu0 0.0
        %404 = vmatprep.subr.mxu0 0.0
        %405 = vmatpush1.msra.mxu0 0.0
        %406 = vmatprep.subr.mxu0 0.0
        %407 = vmatpush1.msra.mxu0 0.0
        %408 = vmatprep.subr.mxu0 0.0
        %409 = vmatpush1.msra.mxu0 0.0
        %410 = vmatprep.subr.mxu0 0.0
        %411 = vmatpush1.msra.mxu0 0.0
        %412 = vmatprep.subr.mxu0 0.0
        %413 = vmatpush1.msra.mxu0 0.0
        %414 = vmatprep.subr.mxu0 0.0
        %415 = vmatpush1.msra.mxu0 0.0
        %416 = vmatprep.subr.mxu0 0.0
        %417 = vmatpush1.msra.mxu0 %v293
        %418 = vmatprep.subr.mxu0 0.0
        %419 = vmatpush1.msra.mxu0 %v292
        %420 = vmatprep.subr.mxu0 0.0
        %421 = vmatpush1.msra.mxu0 %v291
        %422 = vmatprep.subr.mxu0 0.0
        %423 = vmatpush1.msra.mxu0 %v290
        %424 = vmatprep.subr.mxu0 0.0
        %425 = vmatpush2.msra.mxu0 0.0
        %426 = vmatprep.subr.mxu0 0.0
        %427 = vmatpush2.msra.mxu0 0.0
        %428 = vmatprep.subr.mxu0 0.0
        %429 = vmatpush2.msra.mxu0 0.0
        %430 = vmatprep.subr.mxu0 0.0
        %431 = vmatpush2.msra.mxu0 0.0
        %432 = vmatprep.subr.mxu0 0.0
        %433 = vmatpush2.msra.mxu0 0.0
        %434 = vmatprep.subr.mxu0 0.0
        %435 = vmatpush2.msra.mxu0 0.0
        %436 = vmatprep.subr.mxu0 0.0
        %437 = vmatpush2.msra.mxu0 0.0
        %438 = vmatprep.subr.mxu0 0.0
        %439 = vmatpush2.msra.mxu0 0.0
        %440 = vmatprep.subr.mxu0 0.0
        %441 = vmatpush2.msra.mxu0 0.0
        %442 = vmatprep.subr.mxu0 0.0
        %443 = vmatpush2.msra.mxu0 0.0
        %444 = vmatprep.subr.mxu0 0.0
        %445 = vmatpush2.msra.mxu0 0.0
        %446 = vmatprep.subr.mxu0 0.0
        %447 = vmatpush2.msra.mxu0 0.0
        %448 = vmatprep.subr.mxu0 0.0
        %449 = vmatpush2.msra.mxu0 0.0
        %450 = vmatprep.subr.mxu0 0.0
        %451 = vmatpush2.msra.mxu0 0.0
        %452 = vmatprep.subr.mxu0 0.0
        %453 = vmatpush2.msra.mxu0 0.0
        %454 = vmatprep.subr.mxu0 0.0
        %455 = vmatpush2.msra.mxu0 0.0
        %456 = vmatprep.mubr.f32.mxu0 0.0
        %457 = vmatmul.mubr.f32.gmra.mxu0 %v320
        %v458 = vpop.f32.mrf.mxu0
        %v459 = vadd.f32 0.0, %v458
        %v460 = vpop.f32.mrf.mxu0
        %461 = vdwg.mxu0
        %462 = vmatprep.subr.mxu0 0.0
        %463 = vmatpush1.msra.mxu0 0.0
        %464 = vmatprep.subr.mxu0 0.0
        %465 = vmatpush1.msra.mxu0 0.0
        %466 = vmatprep.subr.mxu0 0.0
        %467 = vmatpush1.msra.mxu0 0.0
        %468 = vmatprep.subr.mxu0 0.0
        %469 = vmatpush1.msra.mxu0 0.0
        %470 = vmatprep.subr.mxu0 0.0
        %471 = vmatpush1.msra.mxu0 0.0
        %472 = vmatprep.subr.mxu0 0.0
        %473 = vmatpush1.msra.mxu0 0.0
        %474 = vmatprep.subr.mxu0 0.0
        %475 = vmatpush1.msra.mxu0 0.0
        %476 = vmatprep.subr.mxu0 0.0
        %477 = vmatpush1.msra.mxu0 0.0
        %478 = vmatprep.subr.mxu0 0.0
        %479 = vmatpush1.msra.mxu0 0.0
        %480 = vmatprep.subr.mxu0 0.0
        %481 = vmatpush1.msra.mxu0 0.0
        %482 = vmatprep.subr.mxu0 0.0
        %483 = vmatpush1.msra.mxu0 0.0
        %484 = vmatprep.subr.mxu0 0.0
        %485 = vmatpush1.msra.mxu0 0.0
        %486 = vmatprep.subr.mxu0 0.0
        %487 = vmatpush1.msra.mxu0 %v297
        %488 = vmatprep.subr.mxu0 0.0
        %489 = vmatpush1.msra.mxu0 %v296
        %490 = vmatprep.subr.mxu0 0.0
        %491 = vmatpush1.msra.mxu0 %v295
        %492 = vmatprep.subr.mxu0 0.0
        %493 = vmatpush1.msra.mxu0 %v294
        %494 = vmatprep.subr.mxu0 0.0
        %495 = vmatpush2.msra.mxu0 0.0
        %496 = vmatprep.subr.mxu0 0.0
        %497 = vmatpush2.msra.mxu0 0.0
        %498 = vmatprep.subr.mxu0 0.0
        %499 = vmatpush2.msra.mxu0 0.0
        %500 = vmatprep.subr.mxu0 0.0
        %501 = vmatpush2.msra.mxu0 0.0
        %502 = vmatprep.subr.mxu0 0.0
        %503 = vmatpush2.msra.mxu0 0.0
        %504 = vmatprep.subr.mxu0 0.0
        %505 = vmatpush2.msra.mxu0 0.0
        %506 = vmatprep.subr.mxu0 0.0
        %507 = vmatpush2.msra.mxu0 0.0
        %508 = vmatprep.subr.mxu0 0.0
        %509 = vmatpush2.msra.mxu0 0.0
        %510 = vmatprep.subr.mxu0 0.0
        %511 = vmatpush2.msra.mxu0 0.0
        %512 = vmatprep.subr.mxu0 0.0
        %513 = vmatpush2.msra.mxu0 0.0
        %514 = vmatprep.subr.mxu0 0.0
        %515 = vmatpush2.msra.mxu0 0.0
        %516 = vmatprep.subr.mxu0 0.0
        %517 = vmatpush2.msra.mxu0 0.0
        %518 = vmatprep.subr.mxu0 0.0
        %519 = vmatpush2.msra.mxu0 0.0
        %520 = vmatprep.subr.mxu0 0.0
        %521 = vmatpush2.msra.mxu0 0.0
        %522 = vmatprep.subr.mxu0 0.0
        %523 = vmatpush2.msra.mxu0 0.0
        %524 = vmatprep.subr.mxu0 0.0
        %525 = vmatpush2.msra.mxu0 0.0
        %526 = vmatprep.mubr.f32.mxu0 0.0
        %527 = vmatmul.mubr.f32.gmra.mxu0 %v320
        %v528 = vpop.f32.mrf.mxu0
        %v529 = vadd.f32 0.0, %v528
        %v530 = vpop.f32.mrf.mxu0
        %531 = vdwg.mxu0
        %532 = vmatprep.subr.mxu0 0.0
        %533 = vmatpush1.msra.mxu0 0.0
        %534 = vmatprep.subr.mxu0 0.0
        %535 = vmatpush1.msra.mxu0 0.0
        %536 = vmatprep.subr.mxu0 0.0
        %537 = vmatpush1.msra.mxu0 0.0
        %538 = vmatprep.subr.mxu0 0.0
        %539 = vmatpush1.msra.mxu0 0.0
        %540 = vmatprep.subr.mxu0 0.0
        %541 = vmatpush1.msra.mxu0 0.0
        %542 = vmatprep.subr.mxu0 0.0
        %543 = vmatpush1.msra.mxu0 0.0
        %544 = vmatprep.subr.mxu0 0.0
        %545 = vmatpush1.msra.mxu0 0.0
        %546 = vmatprep.subr.mxu0 0.0
        %547 = vmatpush1.msra.mxu0 0.0
        %548 = vmatprep.subr.mxu0 0.0
        %549 = vmatpush1.msra.mxu0 0.0
        %550 = vmatprep.subr.mxu0 0.0
        %551 = vmatpush1.msra.mxu0 0.0
        %552 = vmatprep.subr.mxu0 0.0
        %553 = vmatpush1.msra.mxu0 0.0
        %554 = vmatprep.subr.mxu0 0.0
        %555 = vmatpush1.msra.mxu0 0.0
        %556 = vmatprep.subr.mxu0 0.0
        %557 = vmatpush1.msra.mxu0 %v301
        %558 = vmatprep.subr.mxu0 0.0
        %559 = vmatpush1.msra.mxu0 %v300
        %560 = vmatprep.subr.mxu0 0.0
        %561 = vmatpush1.msra.mxu0 %v299
        %562 = vmatprep.subr.mxu0 0.0
        %563 = vmatpush1.msra.mxu0 %v298
        %564 = vmatprep.subr.mxu0 0.0
        %565 = vmatpush2.msra.mxu0 0.0
        %566 = vmatprep.subr.mxu0 0.0
        %567 = vmatpush2.msra.mxu0 0.0
        %568 = vmatprep.subr.mxu0 0.0
        %569 = vmatpush2.msra.mxu0 0.0
        %570 = vmatprep.subr.mxu0 0.0
        %571 = vmatpush2.msra.mxu0 0.0
        %572 = vmatprep.subr.mxu0 0.0
        %573 = vmatpush2.msra.mxu0 0.0
        %574 = vmatprep.subr.mxu0 0.0
        %575 = vmatpush2.msra.mxu0 0.0
        %576 = vmatprep.subr.mxu0 0.0
        %577 = vmatpush2.msra.mxu0 0.0
        %578 = vmatprep.subr.mxu0 0.0
        %579 = vmatpush2.msra.mxu0 0.0
        %580 = vmatprep.subr.mxu0 0.0
        %581 = vmatpush2.msra.mxu0 0.0
        %582 = vmatprep.subr.mxu0 0.0
        %583 = vmatpush2.msra.mxu0 0.0
        %584 = vmatprep.subr.mxu0 0.0
        %585 = vmatpush2.msra.mxu0 0.0
        %586 = vmatprep.subr.mxu0 0.0
        %587 = vmatpush2.msra.mxu0 0.0
        %588 = vmatprep.subr.mxu0 0.0
        %589 = vmatpush2.msra.mxu0 0.0
        %590 = vmatprep.subr.mxu0 0.0
        %591 = vmatpush2.msra.mxu0 0.0
        %592 = vmatprep.subr.mxu0 0.0
        %593 = vmatpush2.msra.mxu0 0.0
        %594 = vmatprep.subr.mxu0 0.0
        %595 = vmatpush2.msra.mxu0 0.0
        %596 = vmatprep.mubr.f32.mxu0 0.0
        %597 = vmatmul.mubr.f32.gmra.mxu0 %v320
        %v598 = vpop.f32.mrf.mxu0
        %v599 = vadd.f32 0.0, %v598
        %v600 = vpop.f32.mrf.mxu0
        %601 = vdwg.mxu0
        %602 = vmatprep.subr.mxu0 0.0
        %603 = vmatpush1.msra.mxu0 0.0
        %604 = vmatprep.subr.mxu0 0.0
        %605 = vmatpush1.msra.mxu0 0.0
        %606 = vmatprep.subr.mxu0 0.0
        %607 = vmatpush1.msra.mxu0 0.0
        %608 = vmatprep.subr.mxu0 0.0
        %609 = vmatpush1.msra.mxu0 0.0
        %610 = vmatprep.subr.mxu0 0.0
        %611 = vmatpush1.msra.mxu0 0.0
        %612 = vmatprep.subr.mxu0 0.0
        %613 = vmatpush1.msra.mxu0 0.0
        %614 = vmatprep.subr.mxu0 0.0
        %615 = vmatpush1.msra.mxu0 0.0
        %616 = vmatprep.subr.mxu0 0.0
        %617 = vmatpush1.msra.mxu0 0.0
        %618 = vmatprep.subr.mxu0 0.0
        %619 = vmatpush1.msra.mxu0 0.0
        %620 = vmatprep.subr.mxu0 0.0
        %621 = vmatpush1.msra.mxu0 0.0
        %622 = vmatprep.subr.mxu0 0.0
        %623 = vmatpush1.msra.mxu0 0.0
        %624 = vmatprep.subr.mxu0 0.0
        %625 = vmatpush1.msra.mxu0 0.0
        %626 = vmatprep.subr.mxu0 0.0
        %627 = vmatpush1.msra.mxu0 %v305
        %628 = vmatprep.subr.mxu0 0.0
        %629 = vmatpush1.msra.mxu0 %v304
        %630 = vmatprep.subr.mxu0 0.0
        %631 = vmatpush1.msra.mxu0 %v303
        %632 = vmatprep.subr.mxu0 0.0
        %633 = vmatpush1.msra.mxu0 %v302
        %634 = vmatprep.subr.mxu0 0.0
        %635 = vmatpush2.msra.mxu0 0.0
        %636 = vmatprep.subr.mxu0 0.0
        %637 = vmatpush2.msra.mxu0 0.0
        %638 = vmatprep.subr.mxu0 0.0
        %639 = vmatpush2.msra.mxu0 0.0
        %640 = vmatprep.subr.mxu0 0.0
        %641 = vmatpush2.msra.mxu0 0.0
        %642 = vmatprep.subr.mxu0 0.0
        %643 = vmatpush2.msra.mxu0 0.0
        %644 = vmatprep.subr.mxu0 0.0
        %645 = vmatpush2.msra.mxu0 0.0
        %646 = vmatprep.subr.mxu0 0.0
        %647 = vmatpush2.msra.mxu0 0.0
        %648 = vmatprep.subr.mxu0 0.0
        %649 = vmatpush2.msra.mxu0 0.0
        %650 = vmatprep.subr.mxu0 0.0
        %651 = vmatpush2.msra.mxu0 0.0
        %652 = vmatprep.subr.mxu0 0.0
        %653 = vmatpush2.msra.mxu0 0.0
        %654 = vmatprep.subr.mxu0 0.0
        %655 = vmatpush2.msra.mxu0 0.0
        %656 = vmatprep.subr.mxu0 0.0
        %657 = vmatpush2.msra.mxu0 0.0
        %658 = vmatprep.subr.mxu0 0.0
        %659 = vmatpush2.msra.mxu0 0.0
        %660 = vmatprep.subr.mxu0 0.0
        %661 = vmatpush2.msra.mxu0 0.0
        %662 = vmatprep.subr.mxu0 0.0
        %663 = vmatpush2.msra.mxu0 0.0
        %664 = vmatprep.subr.mxu0 0.0
        %665 = vmatpush2.msra.mxu0 0.0
        %666 = vmatprep.mubr.f32.mxu0 0.0
        %667 = vmatmul.mubr.f32.gmra.mxu0 %v320
        %v668 = vpop.f32.mrf.mxu0
        %v669 = vadd.f32 0.0, %v668
        %v670 = vpop.f32.mrf.mxu0
        %671 = vdwg.mxu0
        %672 = vmatprep.subr.mxu0 0.0
        %673 = vmatpush1.msra.mxu0 0.0
        %674 = vmatprep.subr.mxu0 0.0
        %675 = vmatpush1.msra.mxu0 0.0
        %676 = vmatprep.subr.mxu0 0.0
        %677 = vmatpush1.msra.mxu0 0.0
        %678 = vmatprep.subr.mxu0 0.0
        %679 = vmatpush1.msra.mxu0 0.0
        %680 = vmatprep.subr.mxu0 0.0
        %681 = vmatpush1.msra.mxu0 0.0
        %682 = vmatprep.subr.mxu0 0.0
        %683 = vmatpush1.msra.mxu0 0.0
        %684 = vmatprep.subr.mxu0 0.0
        %685 = vmatpush1.msra.mxu0 0.0
        %686 = vmatprep.subr.mxu0 0.0
        %687 = vmatpush1.msra.mxu0 0.0
        %688 = vmatprep.subr.mxu0 0.0
        %689 = vmatpush1.msra.mxu0 0.0
        %690 = vmatprep.subr.mxu0 0.0
        %691 = vmatpush1.msra.mxu0 0.0
        %692 = vmatprep.subr.mxu0 0.0
        %693 = vmatpush1.msra.mxu0 0.0
        %694 = vmatprep.subr.mxu0 0.0
        %695 = vmatpush1.msra.mxu0 0.0
        %696 = vmatprep.subr.mxu0 0.0
        %697 = vmatpush1.msra.mxu0 %v309
        %698 = vmatprep.subr.mxu0 0.0
        %699 = vmatpush1.msra.mxu0 %v308
        %700 = vmatprep.subr.mxu0 0.0
        %701 = vmatpush1.msra.mxu0 %v307
        %702 = vmatprep.subr.mxu0 0.0
        %703 = vmatpush1.msra.mxu0 %v306
        %704 = vmatprep.subr.mxu0 0.0
        %705 = vmatpush2.msra.mxu0 0.0
        %706 = vmatprep.subr.mxu0 0.0
        %707 = vmatpush2.msra.mxu0 0.0
        %708 = vmatprep.subr.mxu0 0.0
        %709 = vmatpush2.msra.mxu0 0.0
        %710 = vmatprep.subr.mxu0 0.0
        %711 = vmatpush2.msra.mxu0 0.0
        %712 = vmatprep.subr.mxu0 0.0
        %713 = vmatpush2.msra.mxu0 0.0
        %714 = vmatprep.subr.mxu0 0.0
        %715 = vmatpush2.msra.mxu0 0.0
        %716 = vmatprep.subr.mxu0 0.0
        %717 = vmatpush2.msra.mxu0 0.0
        %718 = vmatprep.subr.mxu0 0.0
        %719 = vmatpush2.msra.mxu0 0.0
        %720 = vmatprep.subr.mxu0 0.0
        %721 = vmatpush2.msra.mxu0 0.0
        %722 = vmatprep.subr.mxu0 0.0
        %723 = vmatpush2.msra.mxu0 0.0
        %724 = vmatprep.subr.mxu0 0.0
        %725 = vmatpush2.msra.mxu0 0.0
        %726 = vmatprep.subr.mxu0 0.0
        %727 = vmatpush2.msra.mxu0 0.0
        %728 = vmatprep.subr.mxu0 0.0
        %729 = vmatpush2.msra.mxu0 0.0
        %730 = vmatprep.subr.mxu0 0.0
        %731 = vmatpush2.msra.mxu0 0.0
        %732 = vmatprep.subr.mxu0 0.0
        %733 = vmatpush2.msra.mxu0 0.0
        %734 = vmatprep.subr.mxu0 0.0
        %735 = vmatpush2.msra.mxu0 0.0
        %736 = vmatprep.mubr.f32.mxu0 0.0
        %737 = vmatmul.mubr.f32.gmra.mxu0 %v320
        %v738 = vpop.f32.mrf.mxu0
        %v739 = vadd.f32 0.0, %v738
        %v740 = vpop.f32.mrf.mxu0
        %741 = vdwg.mxu0
        %742 = vmatprep.subr.mxu0 0.0
        %743 = vmatpush1.msra.mxu0 0.0
        %744 = vmatprep.subr.mxu0 0.0
        %745 = vmatpush1.msra.mxu0 0.0
        %746 = vmatprep.subr.mxu0 0.0
        %747 = vmatpush1.msra.mxu0 0.0
        %748 = vmatprep.subr.mxu0 0.0
        %749 = vmatpush1.msra.mxu0 0.0
        %750 = vmatprep.subr.mxu0 0.0
        %751 = vmatpush1.msra.mxu0 0.0
        %752 = vmatprep.subr.mxu0 0.0
        %753 = vmatpush1.msra.mxu0 0.0
        %754 = vmatprep.subr.mxu0 0.0
        %755 = vmatpush1.msra.mxu0 0.0
        %756 = vmatprep.subr.mxu0 0.0
        %757 = vmatpush1.msra.mxu0 0.0
        %758 = vmatprep.subr.mxu0 0.0
        %759 = vmatpush1.msra.mxu0 0.0
        %760 = vmatprep.subr.mxu0 0.0
        %761 = vmatpush1.msra.mxu0 0.0
        %762 = vmatprep.subr.mxu0 0.0
        %763 = vmatpush1.msra.mxu0 0.0
        %764 = vmatprep.subr.mxu0 0.0
        %765 = vmatpush1.msra.mxu0 0.0
        %766 = vmatprep.subr.mxu0 0.0
        %767 = vmatpush1.msra.mxu0 %v313
        %768 = vmatprep.subr.mxu0 0.0
        %769 = vmatpush1.msra.mxu0 %v312
        %770 = vmatprep.subr.mxu0 0.0
        %771 = vmatpush1.msra.mxu0 %v311
        %772 = vmatprep.subr.mxu0 0.0
        %773 = vmatpush1.msra.mxu0 %v310
        %774 = vmatprep.subr.mxu0 0.0
        %775 = vmatpush2.msra.mxu0 0.0
        %776 = vmatprep.subr.mxu0 0.0
        %777 = vmatpush2.msra.mxu0 0.0
        %778 = vmatprep.subr.mxu0 0.0
        %779 = vmatpush2.msra.mxu0 0.0
        %780 = vmatprep.subr.mxu0 0.0
        %781 = vmatpush2.msra.mxu0 0.0
        %782 = vmatprep.subr.mxu0 0.0
        %783 = vmatpush2.msra.mxu0 0.0
        %784 = vmatprep.subr.mxu0 0.0
        %785 = vmatpush2.msra.mxu0 0.0
        %786 = vmatprep.subr.mxu0 0.0
        %787 = vmatpush2.msra.mxu0 0.0
        %788 = vmatprep.subr.mxu0 0.0
        %789 = vmatpush2.msra.mxu0 0.0
        %790 = vmatprep.subr.mxu0 0.0
        %791 = vmatpush2.msra.mxu0 0.0
        %792 = vmatprep.subr.mxu0 0.0
        %793 = vmatpush2.msra.mxu0 0.0
        %794 = vmatprep.subr.mxu0 0.0
        %795 = vmatpush2.msra.mxu0 0.0
        %796 = vmatprep.subr.mxu0 0.0
        %797 = vmatpush2.msra.mxu0 0.0
        %798 = vmatprep.subr.mxu0 0.0
        %799 = vmatpush2.msra.mxu0 0.0
        %800 = vmatprep.subr.mxu0 0.0
        %801 = vmatpush2.msra.mxu0 0.0
        %802 = vmatprep.subr.mxu0 0.0
        %803 = vmatpush2.msra.mxu0 0.0
        %804 = vmatprep.subr.mxu0 0.0
        %805 = vmatpush2.msra.mxu0 0.0
        %806 = vmatprep.mubr.f32.mxu0 0.0
        %807 = vmatmul.mubr.f32.gmra.mxu0 %v320
        %v808 = vpop.f32.mrf.mxu0
        %v809 = vadd.f32 0.0, %v808
        %v810 = vpop.f32.mrf.mxu0
        %811 = vdwg.mxu0
        %812 = vmatprep.subr.mxu0 0.0
        %813 = vmatpush1.msra.mxu0 0.0
        %814 = vmatprep.subr.mxu0 0.0
        %815 = vmatpush1.msra.mxu0 0.0
        %816 = vmatprep.subr.mxu0 0.0
        %817 = vmatpush1.msra.mxu0 0.0
        %818 = vmatprep.subr.mxu0 0.0
        %819 = vmatpush1.msra.mxu0 0.0
        %820 = vmatprep.subr.mxu0 0.0
        %821 = vmatpush1.msra.mxu0 0.0
        %822 = vmatprep.subr.mxu0 0.0
        %823 = vmatpush1.msra.mxu0 0.0
        %824 = vmatprep.subr.mxu0 0.0
        %825 = vmatpush1.msra.mxu0 0.0
        %826 = vmatprep.subr.mxu0 0.0
        %827 = vmatpush1.msra.mxu0 0.0
        %828 = vmatprep.subr.mxu0 0.0
        %829 = vmatpush1.msra.mxu0 0.0
        %830 = vmatprep.subr.mxu0 0.0
        %831 = vmatpush1.msra.mxu0 0.0
        %832 = vmatprep.subr.mxu0 0.0
        %833 = vmatpush1.msra.mxu0 0.0
        %834 = vmatprep.subr.mxu0 0.0
        %835 = vmatpush1.msra.mxu0 0.0
        %836 = vmatprep.subr.mxu0 0.0
        %837 = vmatpush1.msra.mxu0 %v317
        %838 = vmatprep.subr.mxu0 0.0
        %839 = vmatpush1.msra.mxu0 %v316
        %840 = vmatprep.subr.mxu0 0.0
        %841 = vmatpush1.msra.mxu0 %v315
        %842 = vmatprep.subr.mxu0 0.0
        %843 = vmatpush1.msra.mxu0 %v314
        %844 = vmatprep.subr.mxu0 0.0
        %845 = vmatpush2.msra.mxu0 0.0
        %846 = vmatprep.subr.mxu0 0.0
        %847 = vmatpush2.msra.mxu0 0.0
        %848 = vmatprep.subr.mxu0 0.0
        %849 = vmatpush2.msra.mxu0 0.0
        %850 = vmatprep.subr.mxu0 0.0
        %851 = vmatpush2.msra.mxu0 0.0
        %852 = vmatprep.subr.mxu0 0.0
        %853 = vmatpush2.msra.mxu0 0.0
        %854 = vmatprep.subr.mxu0 0.0
        %855 = vmatpush2.msra.mxu0 0.0
        %856 = vmatprep.subr.mxu0 0.0
        %857 = vmatpush2.msra.mxu0 0.0
        %858 = vmatprep.subr.mxu0 0.0
        %859 = vmatpush2.msra.mxu0 0.0
        %860 = vmatprep.subr.mxu0 0.0
        %861 = vmatpush2.msra.mxu0 0.0
        %862 = vmatprep.subr.mxu0 0.0
        %863 = vmatpush2.msra.mxu0 0.0
        %864 = vmatprep.subr.mxu0 0.0
        %865 = vmatpush2.msra.mxu0 0.0
        %866 = vmatprep.subr.mxu0 0.0
        %867 = vmatpush2.msra.mxu0 0.0
        %868 = vmatprep.subr.mxu0 0.0
        %869 = vmatpush2.msra.mxu0 0.0
        %870 = vmatprep.subr.mxu0 0.0
        %871 = vmatpush2.msra.mxu0 0.0
        %872 = vmatprep.subr.mxu0 0.0
        %873 = vmatpush2.msra.mxu0 0.0
        %874 = vmatprep.subr.mxu0 0.0
        %875 = vmatpush2.msra.mxu0 0.0
        %876 = vmatprep.mubr.f32.mxu0 0.0
        %877 = vmatmul.mubr.f32.gmra.mxu0 %v320
        %v878 = vpop.f32.mrf.mxu0
        %v879 = vadd.f32 0.0, %v878
        %v880 = vpop.f32.mrf.mxu0
        %881 = vdwg.mxu0
        %v882 = vld [vmem:[%s2] sm:$0xff]
        %v883 = vld [vmem:[%s2 + $0x8] sm:$0xff]
        %v884 = vld [vmem:[%s2 + $0x10] sm:$0xff]
        %v885 = vld [vmem:[%s2 + $0x18] sm:$0xff]
        %v886 = vld [vmem:[%s2 + $0x20] sm:$0xff]
        %v887 = vld [vmem:[%s2 + $0x28] sm:$0xff]
        %v888 = vld [vmem:[%s2 + $0x30] sm:$0xff]
        %v889 = vld [vmem:[%s2 + $0x38] sm:$0xff]
        %v890 = vld [vmem:[%s2 + $0x40] sm:$0xff]
        %v891 = vld [vmem:[%s2 + $0x48] sm:$0xff]
        %v892 = vld [vmem:[%s2 + $0x50] sm:$0xff]
        %v893 = vld [vmem:[%s2 + $0x58] sm:$0xff]
        %v894 = vld [vmem:[%s2 + $0x60] sm:$0xff]
        %v895 = vld [vmem:[%s2 + $0x68] sm:$0xff]
        %v896 = vld [vmem:[%s2 + $0x70] sm:$0xff]
        %v897 = vld [vmem:[%s2 + $0x78] sm:$0xff]
        %v898 = vld [vmem:[%s2 + $0x80] sm:$0xff]
        %v899 = vld [vmem:[%s2 + $0x88] sm:$0xff]
        %v900 = vld [vmem:[%s2 + $0x90] sm:$0xff]
        %v901 = vld [vmem:[%s2 + $0x98] sm:$0xff]
        %v902 = vld [vmem:[%s2 + $0xa0] sm:$0xff]
        %v903 = vld [vmem:[%s2 + $0xa8] sm:$0xff]
        %v904 = vld [vmem:[%s2 + $0xb0] sm:$0xff]
        %v905 = vld [vmem:[%s2 + $0xb8] sm:$0xff]
        %v906 = vld [vmem:[%s2 + $0xc0] sm:$0xff]
        %v907 = vld [vmem:[%s2 + $0xc8] sm:$0xff]
        %v908 = vld [vmem:[%s2 + $0xd0] sm:$0xff]
        %v909 = vld [vmem:[%s2 + $0xd8] sm:$0xff]
        %v910 = vld [vmem:[%s2 + $0xe0] sm:$0xff]
        %v911 = vld [vmem:[%s2 + $0xe8] sm:$0xff]
        %v912 = vld [vmem:[%s2 + $0xf0] sm:$0xff]
        %v913 = vld [vmem:[%s2 + $0xf8] sm:$0xff]
        %914 = vmatprep.subr.mxu0 0.0
        %915 = vmatpush1.msra.mxu0 0.0
        %916 = vmatprep.subr.mxu0 0.0
        %917 = vmatpush1.msra.mxu0 0.0
        %918 = vmatprep.subr.mxu0 0.0
        %919 = vmatpush1.msra.mxu0 0.0
        %920 = vmatprep.subr.mxu0 0.0
        %921 = vmatpush1.msra.mxu0 0.0
        %922 = vmatprep.subr.mxu0 0.0
        %923 = vmatpush1.msra.mxu0 0.0
        %924 = vmatprep.subr.mxu0 0.0
        %925 = vmatpush1.msra.mxu0 0.0
        %926 = vmatprep.subr.mxu0 0.0
        %927 = vmatpush1.msra.mxu0 0.0
        %928 = vmatprep.subr.mxu0 0.0
        %929 = vmatpush1.msra.mxu0 0.0
        %930 = vmatprep.subr.mxu0 0.0
        %931 = vmatpush1.msra.mxu0 0.0
        %932 = vmatprep.subr.mxu0 0.0
        %933 = vmatpush1.msra.mxu0 0.0
        %934 = vmatprep.subr.mxu0 0.0
        %935 = vmatpush1.msra.mxu0 0.0
        %936 = vmatprep.subr.mxu0 0.0
        %937 = vmatpush1.msra.mxu0 0.0
        %938 = vmatprep.subr.mxu0 0.0
        %939 = vmatpush1.msra.mxu0 %v885
        %940 = vmatprep.subr.mxu0 0.0
        %941 = vmatpush1.msra.mxu0 %v884
        %942 = vmatprep.subr.mxu0 0.0
        %943 = vmatpush1.msra.mxu0 %v883
        %944 = vmatprep.subr.mxu0 0.0
        %945 = vmatpush1.msra.mxu0 %v882
        %946 = vmatprep.subr.mxu0 0.0
        %947 = vmatpush2.msra.mxu0 0.0
        %948 = vmatprep.subr.mxu0 0.0
        %949 = vmatpush2.msra.mxu0 0.0
        %950 = vmatprep.subr.mxu0 0.0
        %951 = vmatpush2.msra.mxu0 0.0
        %952 = vmatprep.subr.mxu0 0.0
        %953 = vmatpush2.msra.mxu0 0.0
        %954 = vmatprep.subr.mxu0 0.0
        %955 = vmatpush2.msra.mxu0 0.0
        %956 = vmatprep.subr.mxu0 0.0
        %957 = vmatpush2.msra.mxu0 0.0
        %958 = vmatprep.subr.mxu0 0.0
        %959 = vmatpush2.msra.mxu0 0.0
        %960 = vmatprep.subr.mxu0 0.0
        %961 = vmatpush2.msra.mxu0 0.0
        %962 = vmatprep.subr.mxu0 0.0
        %963 = vmatpush2.msra.mxu0 0.0
        %964 = vmatprep.subr.mxu0 0.0
        %965 = vmatpush2.msra.mxu0 0.0
        %966 = vmatprep.subr.mxu0 0.0
        %967 = vmatpush2.msra.mxu0 0.0
        %968 = vmatprep.subr.mxu0 0.0
        %969 = vmatpush2.msra.mxu0 0.0
        %970 = vmatprep.subr.mxu0 0.0
        %971 = vmatpush2.msra.mxu0 0.0
        %972 = vmatprep.subr.mxu0 0.0
        %973 = vmatpush2.msra.mxu0 0.0
        %974 = vmatprep.subr.mxu0 0.0
        %975 = vmatpush2.msra.mxu0 0.0
        %976 = vmatprep.subr.mxu0 0.0
        %977 = vmatpush2.msra.mxu0 0.0
        %978 = vmatprep.mubr.f32.mxu0 0.0
        %979 = vmatmul.mubr.f32.gmra.mxu0 %v320
        %v980 = vpop.f32.mrf.mxu0
        %v981 = vadd.f32 0.0, %v980
        %v982 = vpop.f32.mrf.mxu0
        %983 = vdwg.mxu0
        %984 = vmatprep.subr.mxu0 0.0
        %985 = vmatpush1.msra.mxu0 0.0
        %986 = vmatprep.subr.mxu0 0.0
        %987 = vmatpush1.msra.mxu0 0.0
        %988 = vmatprep.subr.mxu0 0.0
        %989 = vmatpush1.msra.mxu0 0.0
        %990 = vmatprep.subr.mxu0 0.0
        %991 = vmatpush1.msra.mxu0 0.0
        %992 = vmatprep.subr.mxu0 0.0
        %993 = vmatpush1.msra.mxu0 0.0
        %994 = vmatprep.subr.mxu0 0.0
        %995 = vmatpush1.msra.mxu0 0.0
        %996 = vmatprep.subr.mxu0 0.0
        %997 = vmatpush1.msra.mxu0 0.0
        %998 = vmatprep.subr.mxu0 0.0
        %999 = vmatpush1.msra.mxu0 0.0
        %1000 = vmatprep.subr.mxu0 0.0
        %1001 = vmatpush1.msra.mxu0 0.0
        %1002 = vmatprep.subr.mxu0 0.0
        %1003 = vmatpush1.msra.mxu0 0.0
        %1004 = vmatprep.subr.mxu0 0.0
        %1005 = vmatpush1.msra.mxu0 0.0
        %1006 = vmatprep.subr.mxu0 0.0
        %1007 = vmatpush1.msra.mxu0 0.0
        %1008 = vmatprep.subr.mxu0 0.0
        %1009 = vmatpush1.msra.mxu0 %v889
        %1010 = vmatprep.subr.mxu0 0.0
        %1011 = vmatpush1.msra.mxu0 %v888
        %1012 = vmatprep.subr.mxu0 0.0
        %1013 = vmatpush1.msra.mxu0 %v887
        %1014 = vmatprep.subr.mxu0 0.0
        %1015 = vmatpush1.msra.mxu0 %v886
        %1016 = vmatprep.subr.mxu0 0.0
        %1017 = vmatpush2.msra.mxu0 0.0
        %1018 = vmatprep.subr.mxu0 0.0
        %1019 = vmatpush2.msra.mxu0 0.0
        %1020 = vmatprep.subr.mxu0 0.0
        %1021 = vmatpush2.msra.mxu0 0.0
        %1022 = vmatprep.subr.mxu0 0.0
        %1023 = vmatpush2.msra.mxu0 0.0
        %1024 = vmatprep.subr.mxu0 0.0
        %1025 = vmatpush2.msra.mxu0 0.0
        %1026 = vmatprep.subr.mxu0 0.0
        %1027 = vmatpush2.msra.mxu0 0.0
        %1028 = vmatprep.subr.mxu0 0.0
        %1029 = vmatpush2.msra.mxu0 0.0
        %1030 = vmatprep.subr.mxu0 0.0
        %1031 = vmatpush2.msra.mxu0 0.0
        %1032 = vmatprep.subr.mxu0 0.0
        %1033 = vmatpush2.msra.mxu0 0.0
        %1034 = vmatprep.subr.mxu0 0.0
        %1035 = vmatpush2.msra.mxu0 0.0
        %1036 = vmatprep.subr.mxu0 0.0
        %1037 = vmatpush2.msra.mxu0 0.0
        %1038 = vmatprep.subr.mxu0 0.0
        %1039 = vmatpush2.msra.mxu0 0.0
        %1040 = vmatprep.subr.mxu0 0.0
        %1041 = vmatpush2.msra.mxu0 0.0
        %1042 = vmatprep.subr.mxu0 0.0
        %1043 = vmatpush2.msra.mxu0 0.0
        %1044 = vmatprep.subr.mxu0 0.0
        %1045 = vmatpush2.msra.mxu0 0.0
        %1046 = vmatprep.subr.mxu0 0.0
        %1047 = vmatpush2.msra.mxu0 0.0
        %1048 = vmatprep.mubr.f32.mxu0 0.0
        %1049 = vmatmul.mubr.f32.gmra.mxu0 %v320
        %v1050 = vpop.f32.mrf.mxu0
        %v1051 = vadd.f32 0.0, %v1050
        %v1052 = vpop.f32.mrf.mxu0
        %1053 = vdwg.mxu0
        %1054 = vmatprep.subr.mxu0 0.0
        %1055 = vmatpush1.msra.mxu0 0.0
        %1056 = vmatprep.subr.mxu0 0.0
        %1057 = vmatpush1.msra.mxu0 0.0
        %1058 = vmatprep.subr.mxu0 0.0
        %1059 = vmatpush1.msra.mxu0 0.0
        %1060 = vmatprep.subr.mxu0 0.0
        %1061 = vmatpush1.msra.mxu0 0.0
        %1062 = vmatprep.subr.mxu0 0.0
        %1063 = vmatpush1.msra.mxu0 0.0
        %1064 = vmatprep.subr.mxu0 0.0
        %1065 = vmatpush1.msra.mxu0 0.0
        %1066 = vmatprep.subr.mxu0 0.0
        %1067 = vmatpush1.msra.mxu0 0.0
        %1068 = vmatprep.subr.mxu0 0.0
        %1069 = vmatpush1.msra.mxu0 0.0
        %1070 = vmatprep.subr.mxu0 0.0
        %1071 = vmatpush1.msra.mxu0 0.0
        %1072 = vmatprep.subr.mxu0 0.0
        %1073 = vmatpush1.msra.mxu0 0.0
        %1074 = vmatprep.subr.mxu0 0.0
        %1075 = vmatpush1.msra.mxu0 0.0
        %1076 = vmatprep.subr.mxu0 0.0
        %1077 = vmatpush1.msra.mxu0 0.0
        %1078 = vmatprep.subr.mxu0 0.0
        %1079 = vmatpush1.msra.mxu0 %v893
        %1080 = vmatprep.subr.mxu0 0.0
        %1081 = vmatpush1.msra.mxu0 %v892
        %1082 = vmatprep.subr.mxu0 0.0
        %1083 = vmatpush1.msra.mxu0 %v891
        %1084 = vmatprep.subr.mxu0 0.0
        %1085 = vmatpush1.msra.mxu0 %v890
        %1086 = vmatprep.subr.mxu0 0.0
        %1087 = vmatpush2.msra.mxu0 0.0
        %1088 = vmatprep.subr.mxu0 0.0
        %1089 = vmatpush2.msra.mxu0 0.0
        %1090 = vmatprep.subr.mxu0 0.0
        %1091 = vmatpush2.msra.mxu0 0.0
        %1092 = vmatprep.subr.mxu0 0.0
        %1093 = vmatpush2.msra.mxu0 0.0
        %1094 = vmatprep.subr.mxu0 0.0
        %1095 = vmatpush2.msra.mxu0 0.0
        %1096 = vmatprep.subr.mxu0 0.0
        %1097 = vmatpush2.msra.mxu0 0.0
        %1098 = vmatprep.subr.mxu0 0.0
        %1099 = vmatpush2.msra.mxu0 0.0
        %1100 = vmatprep.subr.mxu0 0.0
        %1101 = vmatpush2.msra.mxu0 0.0
        %1102 = vmatprep.subr.mxu0 0.0
        %1103 = vmatpush2.msra.mxu0 0.0
        %1104 = vmatprep.subr.mxu0 0.0
        %1105 = vmatpush2.msra.mxu0 0.0
        %1106 = vmatprep.subr.mxu0 0.0
        %1107 = vmatpush2.msra.mxu0 0.0
        %1108 = vmatprep.subr.mxu0 0.0
        %1109 = vmatpush2.msra.mxu0 0.0
        %1110 = vmatprep.subr.mxu0 0.0
        %1111 = vmatpush2.msra.mxu0 0.0
        %1112 = vmatprep.subr.mxu0 0.0
        %1113 = vmatpush2.msra.mxu0 0.0
        %1114 = vmatprep.subr.mxu0 0.0
        %1115 = vmatpush2.msra.mxu0 0.0
        %1116 = vmatprep.subr.mxu0 0.0
        %1117 = vmatpush2.msra.mxu0 0.0
        %1118 = vmatprep.mubr.f32.mxu0 0.0
        %1119 = vmatmul.mubr.f32.gmra.mxu0 %v320
        %v1120 = vpop.f32.mrf.mxu0
        %v1121 = vadd.f32 0.0, %v1120
        %v1122 = vpop.f32.mrf.mxu0
        %1123 = vdwg.mxu0
        %1124 = vmatprep.subr.mxu0 0.0
        %1125 = vmatpush1.msra.mxu0 0.0
        %1126 = vmatprep.subr.mxu0 0.0
        %1127 = vmatpush1.msra.mxu0 0.0
        %1128 = vmatprep.subr.mxu0 0.0
        %1129 = vmatpush1.msra.mxu0 0.0
        %1130 = vmatprep.subr.mxu0 0.0
        %1131 = vmatpush1.msra.mxu0 0.0
        %1132 = vmatprep.subr.mxu0 0.0
        %1133 = vmatpush1.msra.mxu0 0.0
        %1134 = vmatprep.subr.mxu0 0.0
        %1135 = vmatpush1.msra.mxu0 0.0
        %1136 = vmatprep.subr.mxu0 0.0
        %1137 = vmatpush1.msra.mxu0 0.0
        %1138 = vmatprep.subr.mxu0 0.0
        %1139 = vmatpush1.msra.mxu0 0.0
        %1140 = vmatprep.subr.mxu0 0.0
        %1141 = vmatpush1.msra.mxu0 0.0
        %1142 = vmatprep.subr.mxu0 0.0
        %1143 = vmatpush1.msra.mxu0 0.0
        %1144 = vmatprep.subr.mxu0 0.0
        %1145 = vmatpush1.msra.mxu0 0.0
        %1146 = vmatprep.subr.mxu0 0.0
        %1147 = vmatpush1.msra.mxu0 0.0
        %1148 = vmatprep.subr.mxu0 0.0
        %1149 = vmatpush1.msra.mxu0 %v897
        %1150 = vmatprep.subr.mxu0 0.0
        %1151 = vmatpush1.msra.mxu0 %v896
        %1152 = vmatprep.subr.mxu0 0.0
        %1153 = vmatpush1.msra.mxu0 %v895
        %1154 = vmatprep.subr.mxu0 0.0
        %1155 = vmatpush1.msra.mxu0 %v894
        %1156 = vmatprep.subr.mxu0 0.0
        %1157 = vmatpush2.msra.mxu0 0.0
        %1158 = vmatprep.subr.mxu0 0.0
        %1159 = vmatpush2.msra.mxu0 0.0
        %1160 = vmatprep.subr.mxu0 0.0
        %1161 = vmatpush2.msra.mxu0 0.0
        %1162 = vmatprep.subr.mxu0 0.0
        %1163 = vmatpush2.msra.mxu0 0.0
        %1164 = vmatprep.subr.mxu0 0.0
        %1165 = vmatpush2.msra.mxu0 0.0
        %1166 = vmatprep.subr.mxu0 0.0
        %1167 = vmatpush2.msra.mxu0 0.0
        %1168 = vmatprep.subr.mxu0 0.0
        %1169 = vmatpush2.msra.mxu0 0.0
        %1170 = vmatprep.subr.mxu0 0.0
        %1171 = vmatpush2.msra.mxu0 0.0
        %1172 = vmatprep.subr.mxu0 0.0
        %1173 = vmatpush2.msra.mxu0 0.0
        %1174 = vmatprep.subr.mxu0 0.0
        %1175 = vmatpush2.msra.mxu0 0.0
        %1176 = vmatprep.subr.mxu0 0.0
        %1177 = vmatpush2.msra.mxu0 0.0
        %1178 = vmatprep.subr.mxu0 0.0
        %1179 = vmatpush2.msra.mxu0 0.0
        %1180 = vmatprep.subr.mxu0 0.0
        %1181 = vmatpush2.msra.mxu0 0.0
        %1182 = vmatprep.subr.mxu0 0.0
        %1183 = vmatpush2.msra.mxu0 0.0
        %1184 = vmatprep.subr.mxu0 0.0
        %1185 = vmatpush2.msra.mxu0 0.0
        %1186 = vmatprep.subr.mxu0 0.0
        %1187 = vmatpush2.msra.mxu0 0.0
        %1188 = vmatprep.mubr.f32.mxu0 0.0
        %1189 = vmatmul.mubr.f32.gmra.mxu0 %v320
        %v1190 = vpop.f32.mrf.mxu0
        %v1191 = vadd.f32 0.0, %v1190
        %v1192 = vpop.f32.mrf.mxu0
        %1193 = vdwg.mxu0
        %1194 = vmatprep.subr.mxu0 0.0
        %1195 = vmatpush1.msra.mxu0 0.0
        %1196 = vmatprep.subr.mxu0 0.0
        %1197 = vmatpush1.msra.mxu0 0.0
        %1198 = vmatprep.subr.mxu0 0.0
        %1199 = vmatpush1.msra.mxu0 0.0
        %1200 = vmatprep.subr.mxu0 0.0
        %1201 = vmatpush1.msra.mxu0 0.0
        %1202 = vmatprep.subr.mxu0 0.0
        %1203 = vmatpush1.msra.mxu0 0.0
        %1204 = vmatprep.subr.mxu0 0.0
        %1205 = vmatpush1.msra.mxu0 0.0
        %1206 = vmatprep.subr.mxu0 0.0
        %1207 = vmatpush1.msra.mxu0 0.0
        %1208 = vmatprep.subr.mxu0 0.0
        %1209 = vmatpush1.msra.mxu0 0.0
        %1210 = vmatprep.subr.mxu0 0.0
        %1211 = vmatpush1.msra.mxu0 0.0
        %1212 = vmatprep.subr.mxu0 0.0
        %1213 = vmatpush1.msra.mxu0 0.0
        %1214 = vmatprep.subr.mxu0 0.0
        %1215 = vmatpush1.msra.mxu0 0.0
        %1216 = vmatprep.subr.mxu0 0.0
        %1217 = vmatpush1.msra.mxu0 0.0
        %1218 = vmatprep.subr.mxu0 0.0
        %1219 = vmatpush1.msra.mxu0 %v901
        %1220 = vmatprep.subr.mxu0 0.0
        %1221 = vmatpush1.msra.mxu0 %v900
        %1222 = vmatprep.subr.mxu0 0.0
        %1223 = vmatpush1.msra.mxu0 %v899
        %1224 = vmatprep.subr.mxu0 0.0
        %1225 = vmatpush1.msra.mxu0 %v898
        %1226 = vmatprep.subr.mxu0 0.0
        %1227 = vmatpush2.msra.mxu0 0.0
        %1228 = vmatprep.subr.mxu0 0.0
        %1229 = vmatpush2.msra.mxu0 0.0
        %1230 = vmatprep.subr.mxu0 0.0
        %1231 = vmatpush2.msra.mxu0 0.0
        %1232 = vmatprep.subr.mxu0 0.0
        %1233 = vmatpush2.msra.mxu0 0.0
        %1234 = vmatprep.subr.mxu0 0.0
        %1235 = vmatpush2.msra.mxu0 0.0
        %1236 = vmatprep.subr.mxu0 0.0
        %1237 = vmatpush2.msra.mxu0 0.0
        %1238 = vmatprep.subr.mxu0 0.0
        %1239 = vmatpush2.msra.mxu0 0.0
        %1240 = vmatprep.subr.mxu0 0.0
        %1241 = vmatpush2.msra.mxu0 0.0
        %1242 = vmatprep.subr.mxu0 0.0
        %1243 = vmatpush2.msra.mxu0 0.0
        %1244 = vmatprep.subr.mxu0 0.0
        %1245 = vmatpush2.msra.mxu0 0.0
        %1246 = vmatprep.subr.mxu0 0.0
        %1247 = vmatpush2.msra.mxu0 0.0
        %1248 = vmatprep.subr.mxu0 0.0
        %1249 = vmatpush2.msra.mxu0 0.0
        %1250 = vmatprep.subr.mxu0 0.0
        %1251 = vmatpush2.msra.mxu0 0.0
        %1252 = vmatprep.subr.mxu0 0.0
        %1253 = vmatpush2.msra.mxu0 0.0
        %1254 = vmatprep.subr.mxu0 0.0
        %1255 = vmatpush2.msra.mxu0 0.0
        %1256 = vmatprep.subr.mxu0 0.0
        %1257 = vmatpush2.msra.mxu0 0.0
        %1258 = vmatprep.mubr.f32.mxu0 0.0
        %1259 = vmatmul.mubr.f32.gmra.mxu0 %v320
        %v1260 = vpop.f32.mrf.mxu0
        %v1261 = vadd.f32 0.0, %v1260
        %v1262 = vpop.f32.mrf.mxu0
        %1263 = vdwg.mxu0
        %1264 = vmatprep.subr.mxu0 0.0
        %1265 = vmatpush1.msra.mxu0 0.0
        %1266 = vmatprep.subr.mxu0 0.0
        %1267 = vmatpush1.msra.mxu0 0.0
        %1268 = vmatprep.subr.mxu0 0.0
        %1269 = vmatpush1.msra.mxu0 0.0
        %1270 = vmatprep.subr.mxu0 0.0
        %1271 = vmatpush1.msra.mxu0 0.0
        %1272 = vmatprep.subr.mxu0 0.0
        %1273 = vmatpush1.msra.mxu0 0.0
        %1274 = vmatprep.subr.mxu0 0.0
        %1275 = vmatpush1.msra.mxu0 0.0
        %1276 = vmatprep.subr.mxu0 0.0
        %1277 = vmatpush1.msra.mxu0 0.0
        %1278 = vmatprep.subr.mxu0 0.0
        %1279 = vmatpush1.msra.mxu0 0.0
        %1280 = vmatprep.subr.mxu0 0.0
        %1281 = vmatpush1.msra.mxu0 0.0
        %1282 = vmatprep.subr.mxu0 0.0
        %1283 = vmatpush1.msra.mxu0 0.0
        %1284 = vmatprep.subr.mxu0 0.0
        %1285 = vmatpush1.msra.mxu0 0.0
        %1286 = vmatprep.subr.mxu0 0.0
        %1287 = vmatpush1.msra.mxu0 0.0
        %1288 = vmatprep.subr.mxu0 0.0
        %1289 = vmatpush1.msra.mxu0 %v905
        %1290 = vmatprep.subr.mxu0 0.0
        %1291 = vmatpush1.msra.mxu0 %v904
        %1292 = vmatprep.subr.mxu0 0.0
        %1293 = vmatpush1.msra.mxu0 %v903
        %1294 = vmatprep.subr.mxu0 0.0
        %1295 = vmatpush1.msra.mxu0 %v902
        %1296 = vmatprep.subr.mxu0 0.0
        %1297 = vmatpush2.msra.mxu0 0.0
        %1298 = vmatprep.subr.mxu0 0.0
        %1299 = vmatpush2.msra.mxu0 0.0
        %1300 = vmatprep.subr.mxu0 0.0
        %1301 = vmatpush2.msra.mxu0 0.0
        %1302 = vmatprep.subr.mxu0 0.0
        %1303 = vmatpush2.msra.mxu0 0.0
        %1304 = vmatprep.subr.mxu0 0.0
        %1305 = vmatpush2.msra.mxu0 0.0
        %1306 = vmatprep.subr.mxu0 0.0
        %1307 = vmatpush2.msra.mxu0 0.0
        %1308 = vmatprep.subr.mxu0 0.0
        %1309 = vmatpush2.msra.mxu0 0.0
        %1310 = vmatprep.subr.mxu0 0.0
        %1311 = vmatpush2.msra.mxu0 0.0
        %1312 = vmatprep.subr.mxu0 0.0
        %1313 = vmatpush2.msra.mxu0 0.0
        %1314 = vmatprep.subr.mxu0 0.0
        %1315 = vmatpush2.msra.mxu0 0.0
        %1316 = vmatprep.subr.mxu0 0.0
        %1317 = vmatpush2.msra.mxu0 0.0
        %1318 = vmatprep.subr.mxu0 0.0
        %1319 = vmatpush2.msra.mxu0 0.0
        %1320 = vmatprep.subr.mxu0 0.0
        %1321 = vmatpush2.msra.mxu0 0.0
        %1322 = vmatprep.subr.mxu0 0.0
        %1323 = vmatpush2.msra.mxu0 0.0
        %1324 = vmatprep.subr.mxu0 0.0
        %1325 = vmatpush2.msra.mxu0 0.0
        %1326 = vmatprep.subr.mxu0 0.0
        %1327 = vmatpush2.msra.mxu0 0.0
        %1328 = vmatprep.mubr.f32.mxu0 0.0
        %1329 = vmatmul.mubr.f32.gmra.mxu0 %v320
        %v1330 = vpop.f32.mrf.mxu0
        %v1331 = vadd.f32 0.0, %v1330
        %v1332 = vpop.f32.mrf.mxu0
        %1333 = vdwg.mxu0
        %1334 = vmatprep.subr.mxu0 0.0
        %1335 = vmatpush1.msra.mxu0 0.0
        %1336 = vmatprep.subr.mxu0 0.0
        %1337 = vmatpush1.msra.mxu0 0.0
        %1338 = vmatprep.subr.mxu0 0.0
        %1339 = vmatpush1.msra.mxu0 0.0
        %1340 = vmatprep.subr.mxu0 0.0
        %1341 = vmatpush1.msra.mxu0 0.0
        %1342 = vmatprep.subr.mxu0 0.0
        %1343 = vmatpush1.msra.mxu0 0.0
        %1344 = vmatprep.subr.mxu0 0.0
        %1345 = vmatpush1.msra.mxu0 0.0
        %1346 = vmatprep.subr.mxu0 0.0
        %1347 = vmatpush1.msra.mxu0 0.0
        %1348 = vmatprep.subr.mxu0 0.0
        %1349 = vmatpush1.msra.mxu0 0.0
        %1350 = vmatprep.subr.mxu0 0.0
        %1351 = vmatpush1.msra.mxu0 0.0
        %1352 = vmatprep.subr.mxu0 0.0
        %1353 = vmatpush1.msra.mxu0 0.0
        %1354 = vmatprep.subr.mxu0 0.0
        %1355 = vmatpush1.msra.mxu0 0.0
        %1356 = vmatprep.subr.mxu0 0.0
        %1357 = vmatpush1.msra.mxu0 0.0
        %1358 = vmatprep.subr.mxu0 0.0
        %1359 = vmatpush1.msra.mxu0 %v909
        %1360 = vmatprep.subr.mxu0 0.0
        %1361 = vmatpush1.msra.mxu0 %v908
        %1362 = vmatprep.subr.mxu0 0.0
        %1363 = vmatpush1.msra.mxu0 %v907
        %1364 = vmatprep.subr.mxu0 0.0
        %1365 = vmatpush1.msra.mxu0 %v906
        %1366 = vmatprep.subr.mxu0 0.0
        %1367 = vmatpush2.msra.mxu0 0.0
        %1368 = vmatprep.subr.mxu0 0.0
        %1369 = vmatpush2.msra.mxu0 0.0
        %1370 = vmatprep.subr.mxu0 0.0
        %1371 = vmatpush2.msra.mxu0 0.0
        %1372 = vmatprep.subr.mxu0 0.0
        %1373 = vmatpush2.msra.mxu0 0.0
        %1374 = vmatprep.subr.mxu0 0.0
        %1375 = vmatpush2.msra.mxu0 0.0
        %1376 = vmatprep.subr.mxu0 0.0
        %1377 = vmatpush2.msra.mxu0 0.0
        %1378 = vmatprep.subr.mxu0 0.0
        %1379 = vmatpush2.msra.mxu0 0.0
        %1380 = vmatprep.subr.mxu0 0.0
        %1381 = vmatpush2.msra.mxu0 0.0
        %1382 = vmatprep.subr.mxu0 0.0
        %1383 = vmatpush2.msra.mxu0 0.0
        %1384 = vmatprep.subr.mxu0 0.0
        %1385 = vmatpush2.msra.mxu0 0.0
        %1386 = vmatprep.subr.mxu0 0.0
        %1387 = vmatpush2.msra.mxu0 0.0
        %1388 = vmatprep.subr.mxu0 0.0
        %1389 = vmatpush2.msra.mxu0 0.0
        %1390 = vmatprep.subr.mxu0 0.0
        %1391 = vmatpush2.msra.mxu0 0.0
        %1392 = vmatprep.subr.mxu0 0.0
        %1393 = vmatpush2.msra.mxu0 0.0
        %1394 = vmatprep.subr.mxu0 0.0
        %1395 = vmatpush2.msra.mxu0 0.0
        %1396 = vmatprep.subr.mxu0 0.0
        %1397 = vmatpush2.msra.mxu0 0.0
        %1398 = vmatprep.mubr.f32.mxu0 0.0
        %1399 = vmatmul.mubr.f32.gmra.mxu0 %v320
        %v1400 = vpop.f32.mrf.mxu0
        %v1401 = vadd.f32 0.0, %v1400
        %v1402 = vpop.f32.mrf.mxu0
        %1403 = vdwg.mxu0
        %1404 = vmatprep.subr.mxu0 0.0
        %1405 = vmatpush1.msra.mxu0 0.0
        %1406 = vmatprep.subr.mxu0 0.0
        %1407 = vmatpush1.msra.mxu0 0.0
        %1408 = vmatprep.subr.mxu0 0.0
        %1409 = vmatpush1.msra.mxu0 0.0
        %1410 = vmatprep.subr.mxu0 0.0
        %1411 = vmatpush1.msra.mxu0 0.0
        %1412 = vmatprep.subr.mxu0 0.0
        %1413 = vmatpush1.msra.mxu0 0.0
        %1414 = vmatprep.subr.mxu0 0.0
        %1415 = vmatpush1.msra.mxu0 0.0
        %1416 = vmatprep.subr.mxu0 0.0
        %1417 = vmatpush1.msra.mxu0 0.0
        %1418 = vmatprep.subr.mxu0 0.0
        %1419 = vmatpush1.msra.mxu0 0.0
        %1420 = vmatprep.subr.mxu0 0.0
        %1421 = vmatpush1.msra.mxu0 0.0
        %1422 = vmatprep.subr.mxu0 0.0
        %1423 = vmatpush1.msra.mxu0 0.0
        %1424 = vmatprep.subr.mxu0 0.0
        %1425 = vmatpush1.msra.mxu0 0.0
        %1426 = vmatprep.subr.mxu0 0.0
        %1427 = vmatpush1.msra.mxu0 0.0
        %1428 = vmatprep.subr.mxu0 0.0
        %1429 = vmatpush1.msra.mxu0 %v913
        %1430 = vmatprep.subr.mxu0 0.0
        %1431 = vmatpush1.msra.mxu0 %v912
        %1432 = vmatprep.subr.mxu0 0.0
        %1433 = vmatpush1.msra.mxu0 %v911
        %1434 = vmatprep.subr.mxu0 0.0
        %1435 = vmatpush1.msra.mxu0 %v910
        %1436 = vmatprep.subr.mxu0 0.0
        %1437 = vmatpush2.msra.mxu0 0.0
        %1438 = vmatprep.subr.mxu0 0.0
        %1439 = vmatpush2.msra.mxu0 0.0
        %1440 = vmatprep.subr.mxu0 0.0
        %1441 = vmatpush2.msra.mxu0 0.0
        %1442 = vmatprep.subr.mxu0 0.0
        %1443 = vmatpush2.msra.mxu0 0.0
        %1444 = vmatprep.subr.mxu0 0.0
        %1445 = vmatpush2.msra.mxu0 0.0
        %1446 = vmatprep.subr.mxu0 0.0
        %1447 = vmatpush2.msra.mxu0 0.0
        %1448 = vmatprep.subr.mxu0 0.0
        %1449 = vmatpush2.msra.mxu0 0.0
        %1450 = vmatprep.subr.mxu0 0.0
        %1451 = vmatpush2.msra.mxu0 0.0
        %1452 = vmatprep.subr.mxu0 0.0
        %1453 = vmatpush2.msra.mxu0 0.0
        %1454 = vmatprep.subr.mxu0 0.0
        %1455 = vmatpush2.msra.mxu0 0.0
        %1456 = vmatprep.subr.mxu0 0.0
        %1457 = vmatpush2.msra.mxu0 0.0
        %1458 = vmatprep.subr.mxu0 0.0
        %1459 = vmatpush2.msra.mxu0 0.0
        %1460 = vmatprep.subr.mxu0 0.0
        %1461 = vmatpush2.msra.mxu0 0.0
        %1462 = vmatprep.subr.mxu0 0.0
        %1463 = vmatpush2.msra.mxu0 0.0
        %1464 = vmatprep.subr.mxu0 0.0
        %1465 = vmatpush2.msra.mxu0 0.0
        %1466 = vmatprep.subr.mxu0 0.0
        %1467 = vmatpush2.msra.mxu0 0.0
        %1468 = vmatprep.mubr.f32.mxu0 0.0
        %1469 = vmatmul.mubr.f32.gmra.mxu0 %v320
        %v1470 = vpop.f32.mrf.mxu0
        %v1471 = vadd.f32 0.0, %v1470
        %v1472 = vpop.f32.mrf.mxu0
        %1473 = vdwg.mxu0
        %v1474 = vld [vmem:[%s3] sm:$0xff]
        %v1475 = vld [vmem:[%s3 + $0x8] sm:$0xff]
        %v1476 = vld [vmem:[%s3 + $0x10] sm:$0xff]
        %v1477 = vld [vmem:[%s3 + $0x18] sm:$0xff]
        %v1478 = vld [vmem:[%s3 + $0x20] sm:$0xff]
        %v1479 = vld [vmem:[%s3 + $0x28] sm:$0xff]
        %v1480 = vld [vmem:[%s3 + $0x30] sm:$0xff]
        %v1481 = vld [vmem:[%s3 + $0x38] sm:$0xff]
        %v1482 = vld [vmem:[%s3 + $0x40] sm:$0xff]
        %v1483 = vld [vmem:[%s3 + $0x48] sm:$0xff]
        %v1484 = vld [vmem:[%s3 + $0x50] sm:$0xff]
        %v1485 = vld [vmem:[%s3 + $0x58] sm:$0xff]
        %v1486 = vld [vmem:[%s3 + $0x60] sm:$0xff]
        %v1487 = vld [vmem:[%s3 + $0x68] sm:$0xff]
        %v1488 = vld [vmem:[%s3 + $0x70] sm:$0xff]
        %v1489 = vld [vmem:[%s3 + $0x78] sm:$0xff]
        %v1490 = vld [vmem:[%s3 + $0x80] sm:$0xff]
        %v1491 = vld [vmem:[%s3 + $0x88] sm:$0xff]
        %v1492 = vld [vmem:[%s3 + $0x90] sm:$0xff]
        %v1493 = vld [vmem:[%s3 + $0x98] sm:$0xff]
        %v1494 = vld [vmem:[%s3 + $0xa0] sm:$0xff]
        %v1495 = vld [vmem:[%s3 + $0xa8] sm:$0xff]
        %v1496 = vld [vmem:[%s3 + $0xb0] sm:$0xff]
        %v1497 = vld [vmem:[%s3 + $0xb8] sm:$0xff]
        %v1498 = vld [vmem:[%s3 + $0xc0] sm:$0xff]
        %v1499 = vld [vmem:[%s3 + $0xc8] sm:$0xff]
        %v1500 = vld [vmem:[%s3 + $0xd0] sm:$0xff]
        %v1501 = vld [vmem:[%s3 + $0xd8] sm:$0xff]
        %v1502 = vld [vmem:[%s3 + $0xe0] sm:$0xff]
        %v1503 = vld [vmem:[%s3 + $0xe8] sm:$0xff]
        %v1504 = vld [vmem:[%s3 + $0xf0] sm:$0xff]
        %v1505 = vld [vmem:[%s3 + $0xf8] sm:$0xff]
        %1506 = vmatprep.subr.mxu0 0.0
        %1507 = vmatpush1.msra.mxu0 0.0
        %1508 = vmatprep.subr.mxu0 0.0
        %1509 = vmatpush1.msra.mxu0 0.0
        %1510 = vmatprep.subr.mxu0 0.0
        %1511 = vmatpush1.msra.mxu0 0.0
        %1512 = vmatprep.subr.mxu0 0.0
        %1513 = vmatpush1.msra.mxu0 0.0
        %1514 = vmatprep.subr.mxu0 0.0
        %1515 = vmatpush1.msra.mxu0 0.0
        %1516 = vmatprep.subr.mxu0 0.0
        %1517 = vmatpush1.msra.mxu0 0.0
        %1518 = vmatprep.subr.mxu0 0.0
        %1519 = vmatpush1.msra.mxu0 0.0
        %1520 = vmatprep.subr.mxu0 0.0
        %1521 = vmatpush1.msra.mxu0 0.0
        %1522 = vmatprep.subr.mxu0 0.0
        %1523 = vmatpush1.msra.mxu0 0.0
        %1524 = vmatprep.subr.mxu0 0.0
        %1525 = vmatpush1.msra.mxu0 0.0
        %1526 = vmatprep.subr.mxu0 0.0
        %1527 = vmatpush1.msra.mxu0 0.0
        %1528 = vmatprep.subr.mxu0 0.0
        %1529 = vmatpush1.msra.mxu0 0.0
        %1530 = vmatprep.subr.mxu0 0.0
        %1531 = vmatpush1.msra.mxu0 %v1477
        %1532 = vmatprep.subr.mxu0 0.0
        %1533 = vmatpush1.msra.mxu0 %v1476
        %1534 = vmatprep.subr.mxu0 0.0
        %1535 = vmatpush1.msra.mxu0 %v1475
        %1536 = vmatprep.subr.mxu0 0.0
        %1537 = vmatpush1.msra.mxu0 %v1474
        %1538 = vmatprep.subr.mxu0 0.0
        %1539 = vmatpush2.msra.mxu0 0.0
        %1540 = vmatprep.subr.mxu0 0.0
        %1541 = vmatpush2.msra.mxu0 0.0
        %1542 = vmatprep.subr.mxu0 0.0
        %1543 = vmatpush2.msra.mxu0 0.0
        %1544 = vmatprep.subr.mxu0 0.0
        %1545 = vmatpush2.msra.mxu0 0.0
        %1546 = vmatprep.subr.mxu0 0.0
        %1547 = vmatpush2.msra.mxu0 0.0
        %1548 = vmatprep.subr.mxu0 0.0
        %1549 = vmatpush2.msra.mxu0 0.0
        %1550 = vmatprep.subr.mxu0 0.0
        %1551 = vmatpush2.msra.mxu0 0.0
        %1552 = vmatprep.subr.mxu0 0.0
        %1553 = vmatpush2.msra.mxu0 0.0
        %1554 = vmatprep.subr.mxu0 0.0
        %1555 = vmatpush2.msra.mxu0 0.0
        %1556 = vmatprep.subr.mxu0 0.0
        %1557 = vmatpush2.msra.mxu0 0.0
        %1558 = vmatprep.subr.mxu0 0.0
        %1559 = vmatpush2.msra.mxu0 0.0
        %1560 = vmatprep.subr.mxu0 0.0
        %1561 = vmatpush2.msra.mxu0 0.0
        %1562 = vmatprep.subr.mxu0 0.0
        %1563 = vmatpush2.msra.mxu0 0.0
        %1564 = vmatprep.subr.mxu0 0.0
        %1565 = vmatpush2.msra.mxu0 0.0
        %1566 = vmatprep.subr.mxu0 0.0
        %1567 = vmatpush2.msra.mxu0 0.0
        %1568 = vmatprep.subr.mxu0 0.0
        %1569 = vmatpush2.msra.mxu0 0.0
        %1570 = vmatprep.mubr.f32.mxu0 0.0
        %1571 = vmatmul.mubr.f32.gmra.mxu0 %v320
        %v1572 = vpop.f32.mrf.mxu0
        %v1573 = vadd.f32 0.0, %v1572
        %v1574 = vpop.f32.mrf.mxu0
        %1575 = vdwg.mxu0
        %1576 = vmatprep.subr.mxu0 0.0
        %1577 = vmatpush1.msra.mxu0 0.0
        %1578 = vmatprep.subr.mxu0 0.0
        %1579 = vmatpush1.msra.mxu0 0.0
        %1580 = vmatprep.subr.mxu0 0.0
        %1581 = vmatpush1.msra.mxu0 0.0
        %1582 = vmatprep.subr.mxu0 0.0
        %1583 = vmatpush1.msra.mxu0 0.0
        %1584 = vmatprep.subr.mxu0 0.0
        %1585 = vmatpush1.msra.mxu0 0.0
        %1586 = vmatprep.subr.mxu0 0.0
        %1587 = vmatpush1.msra.mxu0 0.0
        %1588 = vmatprep.subr.mxu0 0.0
        %1589 = vmatpush1.msra.mxu0 0.0
        %1590 = vmatprep.subr.mxu0 0.0
        %1591 = vmatpush1.msra.mxu0 0.0
        %1592 = vmatprep.subr.mxu0 0.0
        %1593 = vmatpush1.msra.mxu0 0.0
        %1594 = vmatprep.subr.mxu0 0.0
        %1595 = vmatpush1.msra.mxu0 0.0
        %1596 = vmatprep.subr.mxu0 0.0
        %1597 = vmatpush1.msra.mxu0 0.0
        %1598 = vmatprep.subr.mxu0 0.0
        %1599 = vmatpush1.msra.mxu0 0.0
        %1600 = vmatprep.subr.mxu0 0.0
        %1601 = vmatpush1.msra.mxu0 %v1481
        %1602 = vmatprep.subr.mxu0 0.0
        %1603 = vmatpush1.msra.mxu0 %v1480
        %1604 = vmatprep.subr.mxu0 0.0
        %1605 = vmatpush1.msra.mxu0 %v1479
        %1606 = vmatprep.subr.mxu0 0.0
        %1607 = vmatpush1.msra.mxu0 %v1478
        %1608 = vmatprep.subr.mxu0 0.0
        %1609 = vmatpush2.msra.mxu0 0.0
        %1610 = vmatprep.subr.mxu0 0.0
        %1611 = vmatpush2.msra.mxu0 0.0
        %1612 = vmatprep.subr.mxu0 0.0
        %1613 = vmatpush2.msra.mxu0 0.0
        %1614 = vmatprep.subr.mxu0 0.0
        %1615 = vmatpush2.msra.mxu0 0.0
        %1616 = vmatprep.subr.mxu0 0.0
        %1617 = vmatpush2.msra.mxu0 0.0
        %1618 = vmatprep.subr.mxu0 0.0
        %1619 = vmatpush2.msra.mxu0 0.0
        %1620 = vmatprep.subr.mxu0 0.0
        %1621 = vmatpush2.msra.mxu0 0.0
        %1622 = vmatprep.subr.mxu0 0.0
        %1623 = vmatpush2.msra.mxu0 0.0
        %1624 = vmatprep.subr.mxu0 0.0
        %1625 = vmatpush2.msra.mxu0 0.0
        %1626 = vmatprep.subr.mxu0 0.0
        %1627 = vmatpush2.msra.mxu0 0.0
        %1628 = vmatprep.subr.mxu0 0.0
        %1629 = vmatpush2.msra.mxu0 0.0
        %1630 = vmatprep.subr.mxu0 0.0
        %1631 = vmatpush2.msra.mxu0 0.0
        %1632 = vmatprep.subr.mxu0 0.0
        %1633 = vmatpush2.msra.mxu0 0.0
        %1634 = vmatprep.subr.mxu0 0.0
        %1635 = vmatpush2.msra.mxu0 0.0
        %1636 = vmatprep.subr.mxu0 0.0
        %1637 = vmatpush2.msra.mxu0 0.0
        %1638 = vmatprep.subr.mxu0 0.0
        %1639 = vmatpush2.msra.mxu0 0.0
        %1640 = vmatprep.mubr.f32.mxu0 0.0
        %1641 = vmatmul.mubr.f32.gmra.mxu0 %v320
        %v1642 = vpop.f32.mrf.mxu0
        %v1643 = vadd.f32 0.0, %v1642
        %v1644 = vpop.f32.mrf.mxu0
        %1645 = vdwg.mxu0
        %1646 = vmatprep.subr.mxu0 0.0
        %1647 = vmatpush1.msra.mxu0 0.0
        %1648 = vmatprep.subr.mxu0 0.0
        %1649 = vmatpush1.msra.mxu0 0.0
        %1650 = vmatprep.subr.mxu0 0.0
        %1651 = vmatpush1.msra.mxu0 0.0
        %1652 = vmatprep.subr.mxu0 0.0
        %1653 = vmatpush1.msra.mxu0 0.0
        %1654 = vmatprep.subr.mxu0 0.0
        %1655 = vmatpush1.msra.mxu0 0.0
        %1656 = vmatprep.subr.mxu0 0.0
        %1657 = vmatpush1.msra.mxu0 0.0
        %1658 = vmatprep.subr.mxu0 0.0
        %1659 = vmatpush1.msra.mxu0 0.0
        %1660 = vmatprep.subr.mxu0 0.0
        %1661 = vmatpush1.msra.mxu0 0.0
        %1662 = vmatprep.subr.mxu0 0.0
        %1663 = vmatpush1.msra.mxu0 0.0
        %1664 = vmatprep.subr.mxu0 0.0
        %1665 = vmatpush1.msra.mxu0 0.0
        %1666 = vmatprep.subr.mxu0 0.0
        %1667 = vmatpush1.msra.mxu0 0.0
        %1668 = vmatprep.subr.mxu0 0.0
        %1669 = vmatpush1.msra.mxu0 0.0
        %1670 = vmatprep.subr.mxu0 0.0
        %1671 = vmatpush1.msra.mxu0 %v1485
        %1672 = vmatprep.subr.mxu0 0.0
        %1673 = vmatpush1.msra.mxu0 %v1484
        %1674 = vmatprep.subr.mxu0 0.0
        %1675 = vmatpush1.msra.mxu0 %v1483
        %1676 = vmatprep.subr.mxu0 0.0
        %1677 = vmatpush1.msra.mxu0 %v1482
        %1678 = vmatprep.subr.mxu0 0.0
        %1679 = vmatpush2.msra.mxu0 0.0
        %1680 = vmatprep.subr.mxu0 0.0
        %1681 = vmatpush2.msra.mxu0 0.0
        %1682 = vmatprep.subr.mxu0 0.0
        %1683 = vmatpush2.msra.mxu0 0.0
        %1684 = vmatprep.subr.mxu0 0.0
        %1685 = vmatpush2.msra.mxu0 0.0
        %1686 = vmatprep.subr.mxu0 0.0
        %1687 = vmatpush2.msra.mxu0 0.0
        %1688 = vmatprep.subr.mxu0 0.0
        %1689 = vmatpush2.msra.mxu0 0.0
        %1690 = vmatprep.subr.mxu0 0.0
        %1691 = vmatpush2.msra.mxu0 0.0
        %1692 = vmatprep.subr.mxu0 0.0
        %1693 = vmatpush2.msra.mxu0 0.0
        %1694 = vmatprep.subr.mxu0 0.0
        %1695 = vmatpush2.msra.mxu0 0.0
        %1696 = vmatprep.subr.mxu0 0.0
        %1697 = vmatpush2.msra.mxu0 0.0
        %1698 = vmatprep.subr.mxu0 0.0
        %1699 = vmatpush2.msra.mxu0 0.0
        %1700 = vmatprep.subr.mxu0 0.0
        %1701 = vmatpush2.msra.mxu0 0.0
        %1702 = vmatprep.subr.mxu0 0.0
        %1703 = vmatpush2.msra.mxu0 0.0
        %1704 = vmatprep.subr.mxu0 0.0
        %1705 = vmatpush2.msra.mxu0 0.0
        %1706 = vmatprep.subr.mxu0 0.0
        %1707 = vmatpush2.msra.mxu0 0.0
        %1708 = vmatprep.subr.mxu0 0.0
        %1709 = vmatpush2.msra.mxu0 0.0
        %1710 = vmatprep.mubr.f32.mxu0 0.0
        %1711 = vmatmul.mubr.f32.gmra.mxu0 %v320
        %v1712 = vpop.f32.mrf.mxu0
        %v1713 = vadd.f32 0.0, %v1712
        %v1714 = vpop.f32.mrf.mxu0
        %1715 = vdwg.mxu0
        %1716 = vmatprep.subr.mxu0 0.0
        %1717 = vmatpush1.msra.mxu0 0.0
        %1718 = vmatprep.subr.mxu0 0.0
        %1719 = vmatpush1.msra.mxu0 0.0
        %1720 = vmatprep.subr.mxu0 0.0
        %1721 = vmatpush1.msra.mxu0 0.0
        %1722 = vmatprep.subr.mxu0 0.0
        %1723 = vmatpush1.msra.mxu0 0.0
        %1724 = vmatprep.subr.mxu0 0.0
        %1725 = vmatpush1.msra.mxu0 0.0
        %1726 = vmatprep.subr.mxu0 0.0
        %1727 = vmatpush1.msra.mxu0 0.0
        %1728 = vmatprep.subr.mxu0 0.0
        %1729 = vmatpush1.msra.mxu0 0.0
        %1730 = vmatprep.subr.mxu0 0.0
        %1731 = vmatpush1.msra.mxu0 0.0
        %1732 = vmatprep.subr.mxu0 0.0
        %1733 = vmatpush1.msra.mxu0 0.0
        %1734 = vmatprep.subr.mxu0 0.0
        %1735 = vmatpush1.msra.mxu0 0.0
        %1736 = vmatprep.subr.mxu0 0.0
        %1737 = vmatpush1.msra.mxu0 0.0
        %1738 = vmatprep.subr.mxu0 0.0
        %1739 = vmatpush1.msra.mxu0 0.0
        %1740 = vmatprep.subr.mxu0 0.0
        %1741 = vmatpush1.msra.mxu0 %v1489
        %1742 = vmatprep.subr.mxu0 0.0
        %1743 = vmatpush1.msra.mxu0 %v1488
        %1744 = vmatprep.subr.mxu0 0.0
        %1745 = vmatpush1.msra.mxu0 %v1487
        %1746 = vmatprep.subr.mxu0 0.0
        %1747 = vmatpush1.msra.mxu0 %v1486
        %1748 = vmatprep.subr.mxu0 0.0
        %1749 = vmatpush2.msra.mxu0 0.0
        %1750 = vmatprep.subr.mxu0 0.0
        %1751 = vmatpush2.msra.mxu0 0.0
        %1752 = vmatprep.subr.mxu0 0.0
        %1753 = vmatpush2.msra.mxu0 0.0
        %1754 = vmatprep.subr.mxu0 0.0
        %1755 = vmatpush2.msra.mxu0 0.0
        %1756 = vmatprep.subr.mxu0 0.0
        %1757 = vmatpush2.msra.mxu0 0.0
        %1758 = vmatprep.subr.mxu0 0.0
        %1759 = vmatpush2.msra.mxu0 0.0
        %1760 = vmatprep.subr.mxu0 0.0
        %1761 = vmatpush2.msra.mxu0 0.0
        %1762 = vmatprep.subr.mxu0 0.0
        %1763 = vmatpush2.msra.mxu0 0.0
        %1764 = vmatprep.subr.mxu0 0.0
        %1765 = vmatpush2.msra.mxu0 0.0
        %1766 = vmatprep.subr.mxu0 0.0
        %1767 = vmatpush2.msra.mxu0 0.0
        %1768 = vmatprep.subr.mxu0 0.0
        %1769 = vmatpush2.msra.mxu0 0.0
        %1770 = vmatprep.subr.mxu0 0.0
        %1771 = vmatpush2.msra.mxu0 0.0
        %1772 = vmatprep.subr.mxu0 0.0
        %1773 = vmatpush2.msra.mxu0 0.0
        %1774 = vmatprep.subr.mxu0 0.0
        %1775 = vmatpush2.msra.mxu0 0.0
        %1776 = vmatprep.subr.mxu0 0.0
        %1777 = vmatpush2.msra.mxu0 0.0
        %1778 = vmatprep.subr.mxu0 0.0
        %1779 = vmatpush2.msra.mxu0 0.0
        %1780 = vmatprep.mubr.f32.mxu0 0.0
        %1781 = vmatmul.mubr.f32.gmra.mxu0 %v320
        %v1782 = vpop.f32.mrf.mxu0
        %v1783 = vadd.f32 0.0, %v1782
        %v1784 = vpop.f32.mrf.mxu0
        %1785 = vdwg.mxu0
        %1786 = vmatprep.subr.mxu0 0.0
        %1787 = vmatpush1.msra.mxu0 0.0
        %1788 = vmatprep.subr.mxu0 0.0
        %1789 = vmatpush1.msra.mxu0 0.0
        %1790 = vmatprep.subr.mxu0 0.0
        %1791 = vmatpush1.msra.mxu0 0.0
        %1792 = vmatprep.subr.mxu0 0.0
        %1793 = vmatpush1.msra.mxu0 0.0
        %1794 = vmatprep.subr.mxu0 0.0
        %1795 = vmatpush1.msra.mxu0 0.0
        %1796 = vmatprep.subr.mxu0 0.0
        %1797 = vmatpush1.msra.mxu0 0.0
        %1798 = vmatprep.subr.mxu0 0.0
        %1799 = vmatpush1.msra.mxu0 0.0
        %1800 = vmatprep.subr.mxu0 0.0
        %1801 = vmatpush1.msra.mxu0 0.0
        %1802 = vmatprep.subr.mxu0 0.0
        %1803 = vmatpush1.msra.mxu0 0.0
        %1804 = vmatprep.subr.mxu0 0.0
        %1805 = vmatpush1.msra.mxu0 0.0
        %1806 = vmatprep.subr.mxu0 0.0
        %1807 = vmatpush1.msra.mxu0 0.0
        %1808 = vmatprep.subr.mxu0 0.0
        %1809 = vmatpush1.msra.mxu0 0.0
        %1810 = vmatprep.subr.mxu0 0.0
        %1811 = vmatpush1.msra.mxu0 %v1493
        %1812 = vmatprep.subr.mxu0 0.0
        %1813 = vmatpush1.msra.mxu0 %v1492
        %1814 = vmatprep.subr.mxu0 0.0
        %1815 = vmatpush1.msra.mxu0 %v1491
        %1816 = vmatprep.subr.mxu0 0.0
        %1817 = vmatpush1.msra.mxu0 %v1490
        %1818 = vmatprep.subr.mxu0 0.0
        %1819 = vmatpush2.msra.mxu0 0.0
        %1820 = vmatprep.subr.mxu0 0.0
        %1821 = vmatpush2.msra.mxu0 0.0
        %1822 = vmatprep.subr.mxu0 0.0
        %1823 = vmatpush2.msra.mxu0 0.0
        %1824 = vmatprep.subr.mxu0 0.0
        %1825 = vmatpush2.msra.mxu0 0.0
        %1826 = vmatprep.subr.mxu0 0.0
        %1827 = vmatpush2.msra.mxu0 0.0
        %1828 = vmatprep.subr.mxu0 0.0
        %1829 = vmatpush2.msra.mxu0 0.0
        %1830 = vmatprep.subr.mxu0 0.0
        %1831 = vmatpush2.msra.mxu0 0.0
        %1832 = vmatprep.subr.mxu0 0.0
        %1833 = vmatpush2.msra.mxu0 0.0
        %1834 = vmatprep.subr.mxu0 0.0
        %1835 = vmatpush2.msra.mxu0 0.0
        %1836 = vmatprep.subr.mxu0 0.0
        %1837 = vmatpush2.msra.mxu0 0.0
        %1838 = vmatprep.subr.mxu0 0.0
        %1839 = vmatpush2.msra.mxu0 0.0
        %1840 = vmatprep.subr.mxu0 0.0
        %1841 = vmatpush2.msra.mxu0 0.0
        %1842 = vmatprep.subr.mxu0 0.0
        %1843 = vmatpush2.msra.mxu0 0.0
        %1844 = vmatprep.subr.mxu0 0.0
        %1845 = vmatpush2.msra.mxu0 0.0
        %1846 = vmatprep.subr.mxu0 0.0
        %1847 = vmatpush2.msra.mxu0 0.0
        %1848 = vmatprep.subr.mxu0 0.0
        %1849 = vmatpush2.msra.mxu0 0.0
        %1850 = vmatprep.mubr.f32.mxu0 0.0
        %1851 = vmatmul.mubr.f32.gmra.mxu0 %v320
        %v1852 = vpop.f32.mrf.mxu0
        %v1853 = vadd.f32 0.0, %v1852
        %v1854 = vpop.f32.mrf.mxu0
        %1855 = vdwg.mxu0
        %1856 = vmatprep.subr.mxu0 0.0
        %1857 = vmatpush1.msra.mxu0 0.0
        %1858 = vmatprep.subr.mxu0 0.0
        %1859 = vmatpush1.msra.mxu0 0.0
        %1860 = vmatprep.subr.mxu0 0.0
        %1861 = vmatpush1.msra.mxu0 0.0
        %1862 = vmatprep.subr.mxu0 0.0
        %1863 = vmatpush1.msra.mxu0 0.0
        %1864 = vmatprep.subr.mxu0 0.0
        %1865 = vmatpush1.msra.mxu0 0.0
        %1866 = vmatprep.subr.mxu0 0.0
        %1867 = vmatpush1.msra.mxu0 0.0
        %1868 = vmatprep.subr.mxu0 0.0
        %1869 = vmatpush1.msra.mxu0 0.0
        %1870 = vmatprep.subr.mxu0 0.0
        %1871 = vmatpush1.msra.mxu0 0.0
        %1872 = vmatprep.subr.mxu0 0.0
        %1873 = vmatpush1.msra.mxu0 0.0
        %1874 = vmatprep.subr.mxu0 0.0
        %1875 = vmatpush1.msra.mxu0 0.0
        %1876 = vmatprep.subr.mxu0 0.0
        %1877 = vmatpush1.msra.mxu0 0.0
        %1878 = vmatprep.subr.mxu0 0.0
        %1879 = vmatpush1.msra.mxu0 0.0
        %1880 = vmatprep.subr.mxu0 0.0
        %1881 = vmatpush1.msra.mxu0 %v1497
        %1882 = vmatprep.subr.mxu0 0.0
        %1883 = vmatpush1.msra.mxu0 %v1496
        %1884 = vmatprep.subr.mxu0 0.0
        %1885 = vmatpush1.msra.mxu0 %v1495
        %1886 = vmatprep.subr.mxu0 0.0
        %1887 = vmatpush1.msra.mxu0 %v1494
        %1888 = vmatprep.subr.mxu0 0.0
        %1889 = vmatpush2.msra.mxu0 0.0
        %1890 = vmatprep.subr.mxu0 0.0
        %1891 = vmatpush2.msra.mxu0 0.0
        %1892 = vmatprep.subr.mxu0 0.0
        %1893 = vmatpush2.msra.mxu0 0.0
        %1894 = vmatprep.subr.mxu0 0.0
        %1895 = vmatpush2.msra.mxu0 0.0
        %1896 = vmatprep.subr.mxu0 0.0
        %1897 = vmatpush2.msra.mxu0 0.0
        %1898 = vmatprep.subr.mxu0 0.0
        %1899 = vmatpush2.msra.mxu0 0.0
        %1900 = vmatprep.subr.mxu0 0.0
        %1901 = vmatpush2.msra.mxu0 0.0
        %1902 = vmatprep.subr.mxu0 0.0
        %1903 = vmatpush2.msra.mxu0 0.0
        %1904 = vmatprep.subr.mxu0 0.0
        %1905 = vmatpush2.msra.mxu0 0.0
        %1906 = vmatprep.subr.mxu0 0.0
        %1907 = vmatpush2.msra.mxu0 0.0
        %1908 = vmatprep.subr.mxu0 0.0
        %1909 = vmatpush2.msra.mxu0 0.0
        %1910 = vmatprep.subr.mxu0 0.0
        %1911 = vmatpush2.msra.mxu0 0.0
        %1912 = vmatprep.subr.mxu0 0.0
        %1913 = vmatpush2.msra.mxu0 0.0
        %1914 = vmatprep.subr.mxu0 0.0
        %1915 = vmatpush2.msra.mxu0 0.0
        %1916 = vmatprep.subr.mxu0 0.0
        %1917 = vmatpush2.msra.mxu0 0.0
        %1918 = vmatprep.subr.mxu0 0.0
        %1919 = vmatpush2.msra.mxu0 0.0
        %1920 = vmatprep.mubr.f32.mxu0 0.0
        %1921 = vmatmul.mubr.f32.gmra.mxu0 %v320
        %v1922 = vpop.f32.mrf.mxu0
        %v1923 = vadd.f32 0.0, %v1922
        %v1924 = vpop.f32.mrf.mxu0
        %1925 = vdwg.mxu0
        %1926 = vmatprep.subr.mxu0 0.0
        %1927 = vmatpush1.msra.mxu0 0.0
        %1928 = vmatprep.subr.mxu0 0.0
        %1929 = vmatpush1.msra.mxu0 0.0
        %1930 = vmatprep.subr.mxu0 0.0
        %1931 = vmatpush1.msra.mxu0 0.0
        %1932 = vmatprep.subr.mxu0 0.0
        %1933 = vmatpush1.msra.mxu0 0.0
        %1934 = vmatprep.subr.mxu0 0.0
        %1935 = vmatpush1.msra.mxu0 0.0
        %1936 = vmatprep.subr.mxu0 0.0
        %1937 = vmatpush1.msra.mxu0 0.0
        %1938 = vmatprep.subr.mxu0 0.0
        %1939 = vmatpush1.msra.mxu0 0.0
        %1940 = vmatprep.subr.mxu0 0.0
        %1941 = vmatpush1.msra.mxu0 0.0
        %1942 = vmatprep.subr.mxu0 0.0
        %1943 = vmatpush1.msra.mxu0 0.0
        %1944 = vmatprep.subr.mxu0 0.0
        %1945 = vmatpush1.msra.mxu0 0.0
        %1946 = vmatprep.subr.mxu0 0.0
        %1947 = vmatpush1.msra.mxu0 0.0
        %1948 = vmatprep.subr.mxu0 0.0
        %1949 = vmatpush1.msra.mxu0 0.0
        %1950 = vmatprep.subr.mxu0 0.0
        %1951 = vmatpush1.msra.mxu0 %v1501
        %1952 = vmatprep.subr.mxu0 0.0
        %1953 = vmatpush1.msra.mxu0 %v1500
        %1954 = vmatprep.subr.mxu0 0.0
        %1955 = vmatpush1.msra.mxu0 %v1499
        %1956 = vmatprep.subr.mxu0 0.0
        %1957 = vmatpush1.msra.mxu0 %v1498
        %1958 = vmatprep.subr.mxu0 0.0
        %1959 = vmatpush2.msra.mxu0 0.0
        %1960 = vmatprep.subr.mxu0 0.0
        %1961 = vmatpush2.msra.mxu0 0.0
        %1962 = vmatprep.subr.mxu0 0.0
        %1963 = vmatpush2.msra.mxu0 0.0
        %1964 = vmatprep.subr.mxu0 0.0
        %1965 = vmatpush2.msra.mxu0 0.0
        %1966 = vmatprep.subr.mxu0 0.0
        %1967 = vmatpush2.msra.mxu0 0.0
        %1968 = vmatprep.subr.mxu0 0.0
        %1969 = vmatpush2.msra.mxu0 0.0
        %1970 = vmatprep.subr.mxu0 0.0
        %1971 = vmatpush2.msra.mxu0 0.0
        %1972 = vmatprep.subr.mxu0 0.0
        %1973 = vmatpush2.msra.mxu0 0.0
        %1974 = vmatprep.subr.mxu0 0.0
        %1975 = vmatpush2.msra.mxu0 0.0
        %1976 = vmatprep.subr.mxu0 0.0
        %1977 = vmatpush2.msra.mxu0 0.0
        %1978 = vmatprep.subr.mxu0 0.0
        %1979 = vmatpush2.msra.mxu0 0.0
        %1980 = vmatprep.subr.mxu0 0.0
        %1981 = vmatpush2.msra.mxu0 0.0
        %1982 = vmatprep.subr.mxu0 0.0
        %1983 = vmatpush2.msra.mxu0 0.0
        %1984 = vmatprep.subr.mxu0 0.0
        %1985 = vmatpush2.msra.mxu0 0.0
        %1986 = vmatprep.subr.mxu0 0.0
        %1987 = vmatpush2.msra.mxu0 0.0
        %1988 = vmatprep.subr.mxu0 0.0
        %1989 = vmatpush2.msra.mxu0 0.0
        %1990 = vmatprep.mubr.f32.mxu0 0.0
        %1991 = vmatmul.mubr.f32.gmra.mxu0 %v320
        %v1992 = vpop.f32.mrf.mxu0
        %v1993 = vadd.f32 0.0, %v1992
        %v1994 = vpop.f32.mrf.mxu0
        %1995 = vdwg.mxu0
        %1996 = vmatprep.subr.mxu0 0.0
        %1997 = vmatpush1.msra.mxu0 0.0
        %1998 = vmatprep.subr.mxu0 0.0
        %1999 = vmatpush1.msra.mxu0 0.0
        %2000 = vmatprep.subr.mxu0 0.0
        %2001 = vmatpush1.msra.mxu0 0.0
        %2002 = vmatprep.subr.mxu0 0.0
        %2003 = vmatpush1.msra.mxu0 0.0
        %2004 = vmatprep.subr.mxu0 0.0
        %2005 = vmatpush1.msra.mxu0 0.0
        %2006 = vmatprep.subr.mxu0 0.0
        %2007 = vmatpush1.msra.mxu0 0.0
        %2008 = vmatprep.subr.mxu0 0.0
        %2009 = vmatpush1.msra.mxu0 0.0
        %2010 = vmatprep.subr.mxu0 0.0
        %2011 = vmatpush1.msra.mxu0 0.0
        %2012 = vmatprep.subr.mxu0 0.0
        %2013 = vmatpush1.msra.mxu0 0.0
        %2014 = vmatprep.subr.mxu0 0.0
        %2015 = vmatpush1.msra.mxu0 0.0
        %2016 = vmatprep.subr.mxu0 0.0
        %2017 = vmatpush1.msra.mxu0 0.0
        %2018 = vmatprep.subr.mxu0 0.0
        %2019 = vmatpush1.msra.mxu0 0.0
        %2020 = vmatprep.subr.mxu0 0.0
        %2021 = vmatpush1.msra.mxu0 %v1505
        %2022 = vmatprep.subr.mxu0 0.0
        %2023 = vmatpush1.msra.mxu0 %v1504
        %2024 = vmatprep.subr.mxu0 0.0
        %2025 = vmatpush1.msra.mxu0 %v1503
        %2026 = vmatprep.subr.mxu0 0.0
        %2027 = vmatpush1.msra.mxu0 %v1502
        %2028 = vmatprep.subr.mxu0 0.0
        %2029 = vmatpush2.msra.mxu0 0.0
        %2030 = vmatprep.subr.mxu0 0.0
        %2031 = vmatpush2.msra.mxu0 0.0
        %2032 = vmatprep.subr.mxu0 0.0
        %2033 = vmatpush2.msra.mxu0 0.0
        %2034 = vmatprep.subr.mxu0 0.0
        %2035 = vmatpush2.msra.mxu0 0.0
        %2036 = vmatprep.subr.mxu0 0.0
        %2037 = vmatpush2.msra.mxu0 0.0
        %2038 = vmatprep.subr.mxu0 0.0
        %2039 = vmatpush2.msra.mxu0 0.0
        %2040 = vmatprep.subr.mxu0 0.0
        %2041 = vmatpush2.msra.mxu0 0.0
        %2042 = vmatprep.subr.mxu0 0.0
        %2043 = vmatpush2.msra.mxu0 0.0
        %2044 = vmatprep.subr.mxu0 0.0
        %2045 = vmatpush2.msra.mxu0 0.0
        %2046 = vmatprep.subr.mxu0 0.0
        %2047 = vmatpush2.msra.mxu0 0.0
        %2048 = vmatprep.subr.mxu0 0.0
        %2049 = vmatpush2.msra.mxu0 0.0
        %2050 = vmatprep.subr.mxu0 0.0
        %2051 = vmatpush2.msra.mxu0 0.0
        %2052 = vmatprep.subr.mxu0 0.0
        %2053 = vmatpush2.msra.mxu0 0.0
        %2054 = vmatprep.subr.mxu0 0.0
        %2055 = vmatpush2.msra.mxu0 0.0
        %2056 = vmatprep.subr.mxu0 0.0
        %2057 = vmatpush2.msra.mxu0 0.0
        %2058 = vmatprep.subr.mxu0 0.0
        %2059 = vmatpush2.msra.mxu0 0.0
        %2060 = vmatprep.mubr.f32.mxu0 0.0
        %2061 = vmatmul.mubr.f32.gmra.mxu0 %v320
        %v2062 = vpop.f32.mrf.mxu0
        %v2063 = vadd.f32 0.0, %v2062
        %v2064 = vpop.f32.mrf.mxu0
        %2065 = vdwg.mxu0
        %vm2066 = vcmask 130048
        %v2068 = vsel %vm2066, %v389, 0
        %v2071 = vsel %vm2066, %v981, 0
        %2073 = vmatprep.subr.mxu0 0.0
        %2074 = vmatpush1.xpose.msra.mxu0 0.0
        %2075 = vmatprep.subr.mxu0 0.0
        %2076 = vmatpush1.xpose.msra.mxu0 0.0
        %2077 = vmatprep.subr.mxu0 0.0
        %2078 = vmatpush1.xpose.msra.mxu0 0.0
        %2079 = vmatprep.subr.mxu0 0.0
        %2080 = vmatpush1.xpose.msra.mxu0 0.0
        %2081 = vmatprep.subr.mxu0 0.0
        %2082 = vmatpush1.xpose.msra.mxu0 0.0
        %2083 = vmatprep.subr.mxu0 0.0
        %2084 = vmatpush1.xpose.msra.mxu0 0.0
        %2085 = vmatprep.subr.mxu0 0.0
        %2086 = vmatpush1.xpose.msra.mxu0 0.0
        %2087 = vmatprep.subr.mxu0 0.0
        %2088 = vmatpush1.xpose.msra.mxu0 0.0
        %2089 = vmatprep.subr.mxu0 0.0
        %2090 = vmatpush1.xpose.msra.mxu0 0.0
        %2091 = vmatprep.subr.mxu0 0.0
        %2092 = vmatpush1.xpose.msra.mxu0 0.0
        %2093 = vmatprep.subr.mxu0 0.0
        %2094 = vmatpush1.xpose.msra.mxu0 0.0
        %2095 = vmatprep.subr.mxu0 0.0
        %2096 = vmatpush1.xpose.msra.mxu0 0.0
        %2097 = vmatprep.subr.mxu0 0.0
        %2098 = vmatpush1.xpose.msra.mxu0 0.0
        %2099 = vmatprep.subr.mxu0 0.0
        %2100 = vmatpush1.xpose.msra.mxu0 0.0
        %2101 = vmatprep.subr.mxu0 0.0
        %2102 = vmatpush1.xpose.msra.mxu0 0.0
        %2103 = vmatprep.subr.mxu0 0.0
        %2104 = vmatpush1.xpose.msra.mxu0 %v2071
        %2105 = vmatprep.subr.mxu0 0.0
        %2106 = vmatpush2.xpose.msra.mxu0 0.0
        %2107 = vmatprep.subr.mxu0 0.0
        %2108 = vmatpush2.xpose.msra.mxu0 0.0
        %2109 = vmatprep.subr.mxu0 0.0
        %2110 = vmatpush2.xpose.msra.mxu0 0.0
        %2111 = vmatprep.subr.mxu0 0.0
        %2112 = vmatpush2.xpose.msra.mxu0 0.0
        %2113 = vmatprep.subr.mxu0 0.0
        %2114 = vmatpush2.xpose.msra.mxu0 0.0
        %2115 = vmatprep.subr.mxu0 0.0
        %2116 = vmatpush2.xpose.msra.mxu0 0.0
        %2117 = vmatprep.subr.mxu0 0.0
        %2118 = vmatpush2.xpose.msra.mxu0 0.0
        %2119 = vmatprep.subr.mxu0 0.0
        %2120 = vmatpush2.xpose.msra.mxu0 0.0
        %2121 = vmatprep.subr.mxu0 0.0
        %2122 = vmatpush2.xpose.msra.mxu0 0.0
        %2123 = vmatprep.subr.mxu0 0.0
        %2124 = vmatpush2.xpose.msra.mxu0 0.0
        %2125 = vmatprep.subr.mxu0 0.0
        %2126 = vmatpush2.xpose.msra.mxu0 0.0
        %2127 = vmatprep.subr.mxu0 0.0
        %2128 = vmatpush2.xpose.msra.mxu0 0.0
        %2129 = vmatprep.subr.mxu0 0.0
        %2130 = vmatpush2.xpose.msra.mxu0 0.0
        %2131 = vmatprep.subr.mxu0 0.0
        %2132 = vmatpush2.xpose.msra.mxu0 0.0
        %2133 = vmatprep.subr.mxu0 0.0
        %2134 = vmatpush2.xpose.msra.mxu0 0.0
        %2135 = vmatprep.subr.mxu0 0.0
        %2136 = vmatpush2.xpose.msra.mxu0 0.0
        %2137 = vmatprep.mubr.f32.mxu0 0.0
        %2138 = vmatmul.mubr.f32.gmra.mxu0 %v2068
        %v2139 = vpop.f32.mrf.mxu0
        %v2140 = vadd.f32 0.0, %v2139
        %v2141 = vpop.f32.mrf.mxu0
        %2142 = vdwg.mxu0
        %v2144 = vsel %vm2066, %v459, 0
        %v2147 = vsel %vm2066, %v1051, 0
        %2149 = vmatprep.subr.mxu0 0.0
        %2150 = vmatpush1.xpose.msra.mxu0 0.0
        %2151 = vmatprep.subr.mxu0 0.0
        %2152 = vmatpush1.xpose.msra.mxu0 0.0
        %2153 = vmatprep.subr.mxu0 0.0
        %2154 = vmatpush1.xpose.msra.mxu0 0.0
        %2155 = vmatprep.subr.mxu0 0.0
        %2156 = vmatpush1.xpose.msra.mxu0 0.0
        %2157 = vmatprep.subr.mxu0 0.0
        %2158 = vmatpush1.xpose.msra.mxu0 0.0
        %2159 = vmatprep.subr.mxu0 0.0
        %2160 = vmatpush1.xpose.msra.mxu0 0.0
        %2161 = vmatprep.subr.mxu0 0.0
        %2162 = vmatpush1.xpose.msra.mxu0 0.0
        %2163 = vmatprep.subr.mxu0 0.0
        %2164 = vmatpush1.xpose.msra.mxu0 0.0
        %2165 = vmatprep.subr.mxu0 0.0
        %2166 = vmatpush1.xpose.msra.mxu0 0.0
        %2167 = vmatprep.subr.mxu0 0.0
        %2168 = vmatpush1.xpose.msra.mxu0 0.0
        %2169 = vmatprep.subr.mxu0 0.0
        %2170 = vmatpush1.xpose.msra.mxu0 0.0
        %2171 = vmatprep.subr.mxu0 0.0
        %2172 = vmatpush1.xpose.msra.mxu0 0.0
        %2173 = vmatprep.subr.mxu0 0.0
        %2174 = vmatpush1.xpose.msra.mxu0 0.0
        %2175 = vmatprep.subr.mxu0 0.0
        %2176 = vmatpush1.xpose.msra.mxu0 0.0
        %2177 = vmatprep.subr.mxu0 0.0
        %2178 = vmatpush1.xpose.msra.mxu0 0.0
        %2179 = vmatprep.subr.mxu0 0.0
        %2180 = vmatpush1.xpose.msra.mxu0 %v2147
        %2181 = vmatprep.subr.mxu0 0.0
        %2182 = vmatpush2.xpose.msra.mxu0 0.0
        %2183 = vmatprep.subr.mxu0 0.0
        %2184 = vmatpush2.xpose.msra.mxu0 0.0
        %2185 = vmatprep.subr.mxu0 0.0
        %2186 = vmatpush2.xpose.msra.mxu0 0.0
        %2187 = vmatprep.subr.mxu0 0.0
        %2188 = vmatpush2.xpose.msra.mxu0 0.0
        %2189 = vmatprep.subr.mxu0 0.0
        %2190 = vmatpush2.xpose.msra.mxu0 0.0
        %2191 = vmatprep.subr.mxu0 0.0
        %2192 = vmatpush2.xpose.msra.mxu0 0.0
        %2193 = vmatprep.subr.mxu0 0.0
        %2194 = vmatpush2.xpose.msra.mxu0 0.0
        %2195 = vmatprep.subr.mxu0 0.0
        %2196 = vmatpush2.xpose.msra.mxu0 0.0
        %2197 = vmatprep.subr.mxu0 0.0
        %2198 = vmatpush2.xpose.msra.mxu0 0.0
        %2199 = vmatprep.subr.mxu0 0.0
        %2200 = vmatpush2.xpose.msra.mxu0 0.0
        %2201 = vmatprep.subr.mxu0 0.0
        %2202 = vmatpush2.xpose.msra.mxu0 0.0
        %2203 = vmatprep.subr.mxu0 0.0
        %2204 = vmatpush2.xpose.msra.mxu0 0.0
        %2205 = vmatprep.subr.mxu0 0.0
        %2206 = vmatpush2.xpose.msra.mxu0 0.0
        %2207 = vmatprep.subr.mxu0 0.0
        %2208 = vmatpush2.xpose.msra.mxu0 0.0
        %2209 = vmatprep.subr.mxu0 0.0
        %2210 = vmatpush2.xpose.msra.mxu0 0.0
        %2211 = vmatprep.subr.mxu0 0.0
        %2212 = vmatpush2.xpose.msra.mxu0 0.0
        %2213 = vmatprep.mubr.f32.mxu0 0.0
        %2214 = vmatmul.mubr.f32.gmra.mxu0 %v2144
        %v2215 = vpop.f32.mrf.mxu0
        %v2216 = vadd.f32 0.0, %v2215
        %v2217 = vpop.f32.mrf.mxu0
        %2218 = vdwg.mxu0
        %v2220 = vsel %vm2066, %v529, 0
        %v2223 = vsel %vm2066, %v1121, 0
        %2225 = vmatprep.subr.mxu0 0.0
        %2226 = vmatpush1.xpose.msra.mxu0 0.0
        %2227 = vmatprep.subr.mxu0 0.0
        %2228 = vmatpush1.xpose.msra.mxu0 0.0
        %2229 = vmatprep.subr.mxu0 0.0
        %2230 = vmatpush1.xpose.msra.mxu0 0.0
        %2231 = vmatprep.subr.mxu0 0.0
        %2232 = vmatpush1.xpose.msra.mxu0 0.0
        %2233 = vmatprep.subr.mxu0 0.0
        %2234 = vmatpush1.xpose.msra.mxu0 0.0
        %2235 = vmatprep.subr.mxu0 0.0
        %2236 = vmatpush1.xpose.msra.mxu0 0.0
        %2237 = vmatprep.subr.mxu0 0.0
        %2238 = vmatpush1.xpose.msra.mxu0 0.0
        %2239 = vmatprep.subr.mxu0 0.0
        %2240 = vmatpush1.xpose.msra.mxu0 0.0
        %2241 = vmatprep.subr.mxu0 0.0
        %2242 = vmatpush1.xpose.msra.mxu0 0.0
        %2243 = vmatprep.subr.mxu0 0.0
        %2244 = vmatpush1.xpose.msra.mxu0 0.0
        %2245 = vmatprep.subr.mxu0 0.0
        %2246 = vmatpush1.xpose.msra.mxu0 0.0
        %2247 = vmatprep.subr.mxu0 0.0
        %2248 = vmatpush1.xpose.msra.mxu0 0.0
        %2249 = vmatprep.subr.mxu0 0.0
        %2250 = vmatpush1.xpose.msra.mxu0 0.0
        %2251 = vmatprep.subr.mxu0 0.0
        %2252 = vmatpush1.xpose.msra.mxu0 0.0
        %2253 = vmatprep.subr.mxu0 0.0
        %2254 = vmatpush1.xpose.msra.mxu0 0.0
        %2255 = vmatprep.subr.mxu0 0.0
        %2256 = vmatpush1.xpose.msra.mxu0 %v2223
        %2257 = vmatprep.subr.mxu0 0.0
        %2258 = vmatpush2.xpose.msra.mxu0 0.0
        %2259 = vmatprep.subr.mxu0 0.0
        %2260 = vmatpush2.xpose.msra.mxu0 0.0
        %2261 = vmatprep.subr.mxu0 0.0
        %2262 = vmatpush2.xpose.msra.mxu0 0.0
        %2263 = vmatprep.subr.mxu0 0.0
        %2264 = vmatpush2.xpose.msra.mxu0 0.0
        %2265 = vmatprep.subr.mxu0 0.0
        %2266 = vmatpush2.xpose.msra.mxu0 0.0
        %2267 = vmatprep.subr.mxu0 0.0
        %2268 = vmatpush2.xpose.msra.mxu0 0.0
        %2269 = vmatprep.subr.mxu0 0.0
        %2270 = vmatpush2.xpose.msra.mxu0 0.0
        %2271 = vmatprep.subr.mxu0 0.0
        %2272 = vmatpush2.xpose.msra.mxu0 0.0
        %2273 = vmatprep.subr.mxu0 0.0
        %2274 = vmatpush2.xpose.msra.mxu0 0.0
        %2275 = vmatprep.subr.mxu0 0.0
        %2276 = vmatpush2.xpose.msra.mxu0 0.0
        %2277 = vmatprep.subr.mxu0 0.0
        %2278 = vmatpush2.xpose.msra.mxu0 0.0
        %2279 = vmatprep.subr.mxu0 0.0
        %2280 = vmatpush2.xpose.msra.mxu0 0.0
        %2281 = vmatprep.subr.mxu0 0.0
        %2282 = vmatpush2.xpose.msra.mxu0 0.0
        %2283 = vmatprep.subr.mxu0 0.0
        %2284 = vmatpush2.xpose.msra.mxu0 0.0
        %2285 = vmatprep.subr.mxu0 0.0
        %2286 = vmatpush2.xpose.msra.mxu0 0.0
        %2287 = vmatprep.subr.mxu0 0.0
        %2288 = vmatpush2.xpose.msra.mxu0 0.0
        %2289 = vmatprep.mubr.f32.mxu0 0.0
        %2290 = vmatmul.mubr.f32.gmra.mxu0 %v2220
        %v2291 = vpop.f32.mrf.mxu0
        %v2292 = vadd.f32 0.0, %v2291
        %v2293 = vpop.f32.mrf.mxu0
        %2294 = vdwg.mxu0
        %v2296 = vsel %vm2066, %v599, 0
        %v2299 = vsel %vm2066, %v1191, 0
        %2301 = vmatprep.subr.mxu0 0.0
        %2302 = vmatpush1.xpose.msra.mxu0 0.0
        %2303 = vmatprep.subr.mxu0 0.0
        %2304 = vmatpush1.xpose.msra.mxu0 0.0
        %2305 = vmatprep.subr.mxu0 0.0
        %2306 = vmatpush1.xpose.msra.mxu0 0.0
        %2307 = vmatprep.subr.mxu0 0.0
        %2308 = vmatpush1.xpose.msra.mxu0 0.0
        %2309 = vmatprep.subr.mxu0 0.0
        %2310 = vmatpush1.xpose.msra.mxu0 0.0
        %2311 = vmatprep.subr.mxu0 0.0
        %2312 = vmatpush1.xpose.msra.mxu0 0.0
        %2313 = vmatprep.subr.mxu0 0.0
        %2314 = vmatpush1.xpose.msra.mxu0 0.0
        %2315 = vmatprep.subr.mxu0 0.0
        %2316 = vmatpush1.xpose.msra.mxu0 0.0
        %2317 = vmatprep.subr.mxu0 0.0
        %2318 = vmatpush1.xpose.msra.mxu0 0.0
        %2319 = vmatprep.subr.mxu0 0.0
        %2320 = vmatpush1.xpose.msra.mxu0 0.0
        %2321 = vmatprep.subr.mxu0 0.0
        %2322 = vmatpush1.xpose.msra.mxu0 0.0
        %2323 = vmatprep.subr.mxu0 0.0
        %2324 = vmatpush1.xpose.msra.mxu0 0.0
        %2325 = vmatprep.subr.mxu0 0.0
        %2326 = vmatpush1.xpose.msra.mxu0 0.0
        %2327 = vmatprep.subr.mxu0 0.0
        %2328 = vmatpush1.xpose.msra.mxu0 0.0
        %2329 = vmatprep.subr.mxu0 0.0
        %2330 = vmatpush1.xpose.msra.mxu0 0.0
        %2331 = vmatprep.subr.mxu0 0.0
        %2332 = vmatpush1.xpose.msra.mxu0 %v2299
        %2333 = vmatprep.subr.mxu0 0.0
        %2334 = vmatpush2.xpose.msra.mxu0 0.0
        %2335 = vmatprep.subr.mxu0 0.0
        %2336 = vmatpush2.xpose.msra.mxu0 0.0
        %2337 = vmatprep.subr.mxu0 0.0
        %2338 = vmatpush2.xpose.msra.mxu0 0.0
        %2339 = vmatprep.subr.mxu0 0.0
        %2340 = vmatpush2.xpose.msra.mxu0 0.0
        %2341 = vmatprep.subr.mxu0 0.0
        %2342 = vmatpush2.xpose.msra.mxu0 0.0
        %2343 = vmatprep.subr.mxu0 0.0
        %2344 = vmatpush2.xpose.msra.mxu0 0.0
        %2345 = vmatprep.subr.mxu0 0.0
        %2346 = vmatpush2.xpose.msra.mxu0 0.0
        %2347 = vmatprep.subr.mxu0 0.0
        %2348 = vmatpush2.xpose.msra.mxu0 0.0
        %2349 = vmatprep.subr.mxu0 0.0
        %2350 = vmatpush2.xpose.msra.mxu0 0.0
        %2351 = vmatprep.subr.mxu0 0.0
        %2352 = vmatpush2.xpose.msra.mxu0 0.0
        %2353 = vmatprep.subr.mxu0 0.0
        %2354 = vmatpush2.xpose.msra.mxu0 0.0
        %2355 = vmatprep.subr.mxu0 0.0
        %2356 = vmatpush2.xpose.msra.mxu0 0.0
        %2357 = vmatprep.subr.mxu0 0.0
        %2358 = vmatpush2.xpose.msra.mxu0 0.0
        %2359 = vmatprep.subr.mxu0 0.0
        %2360 = vmatpush2.xpose.msra.mxu0 0.0
        %2361 = vmatprep.subr.mxu0 0.0
        %2362 = vmatpush2.xpose.msra.mxu0 0.0
        %2363 = vmatprep.subr.mxu0 0.0
        %2364 = vmatpush2.xpose.msra.mxu0 0.0
        %2365 = vmatprep.mubr.f32.mxu0 0.0
        %2366 = vmatmul.mubr.f32.gmra.mxu0 %v2296
        %v2367 = vpop.f32.mrf.mxu0
        %v2368 = vadd.f32 0.0, %v2367
        %v2369 = vpop.f32.mrf.mxu0
        %2370 = vdwg.mxu0
        %v2372 = vsel %vm2066, %v669, 0
        %v2375 = vsel %vm2066, %v1261, 0
        %2377 = vmatprep.subr.mxu0 0.0
        %2378 = vmatpush1.xpose.msra.mxu0 0.0
        %2379 = vmatprep.subr.mxu0 0.0
        %2380 = vmatpush1.xpose.msra.mxu0 0.0
        %2381 = vmatprep.subr.mxu0 0.0
        %2382 = vmatpush1.xpose.msra.mxu0 0.0
        %2383 = vmatprep.subr.mxu0 0.0
        %2384 = vmatpush1.xpose.msra.mxu0 0.0
        %2385 = vmatprep.subr.mxu0 0.0
        %2386 = vmatpush1.xpose.msra.mxu0 0.0
        %2387 = vmatprep.subr.mxu0 0.0
        %2388 = vmatpush1.xpose.msra.mxu0 0.0
        %2389 = vmatprep.subr.mxu0 0.0
        %2390 = vmatpush1.xpose.msra.mxu0 0.0
        %2391 = vmatprep.subr.mxu0 0.0
        %2392 = vmatpush1.xpose.msra.mxu0 0.0
        %2393 = vmatprep.subr.mxu0 0.0
        %2394 = vmatpush1.xpose.msra.mxu0 0.0
        %2395 = vmatprep.subr.mxu0 0.0
        %2396 = vmatpush1.xpose.msra.mxu0 0.0
        %2397 = vmatprep.subr.mxu0 0.0
        %2398 = vmatpush1.xpose.msra.mxu0 0.0
        %2399 = vmatprep.subr.mxu0 0.0
        %2400 = vmatpush1.xpose.msra.mxu0 0.0
        %2401 = vmatprep.subr.mxu0 0.0
        %2402 = vmatpush1.xpose.msra.mxu0 0.0
        %2403 = vmatprep.subr.mxu0 0.0
        %2404 = vmatpush1.xpose.msra.mxu0 0.0
        %2405 = vmatprep.subr.mxu0 0.0
        %2406 = vmatpush1.xpose.msra.mxu0 0.0
        %2407 = vmatprep.subr.mxu0 0.0
        %2408 = vmatpush1.xpose.msra.mxu0 %v2375
        %2409 = vmatprep.subr.mxu0 0.0
        %2410 = vmatpush2.xpose.msra.mxu0 0.0
        %2411 = vmatprep.subr.mxu0 0.0
        %2412 = vmatpush2.xpose.msra.mxu0 0.0
        %2413 = vmatprep.subr.mxu0 0.0
        %2414 = vmatpush2.xpose.msra.mxu0 0.0
        %2415 = vmatprep.subr.mxu0 0.0
        %2416 = vmatpush2.xpose.msra.mxu0 0.0
        %2417 = vmatprep.subr.mxu0 0.0
        %2418 = vmatpush2.xpose.msra.mxu0 0.0
        %2419 = vmatprep.subr.mxu0 0.0
        %2420 = vmatpush2.xpose.msra.mxu0 0.0
        %2421 = vmatprep.subr.mxu0 0.0
        %2422 = vmatpush2.xpose.msra.mxu0 0.0
        %2423 = vmatprep.subr.mxu0 0.0
        %2424 = vmatpush2.xpose.msra.mxu0 0.0
        %2425 = vmatprep.subr.mxu0 0.0
        %2426 = vmatpush2.xpose.msra.mxu0 0.0
        %2427 = vmatprep.subr.mxu0 0.0
        %2428 = vmatpush2.xpose.msra.mxu0 0.0
        %2429 = vmatprep.subr.mxu0 0.0
        %2430 = vmatpush2.xpose.msra.mxu0 0.0
        %2431 = vmatprep.subr.mxu0 0.0
        %2432 = vmatpush2.xpose.msra.mxu0 0.0
        %2433 = vmatprep.subr.mxu0 0.0
        %2434 = vmatpush2.xpose.msra.mxu0 0.0
        %2435 = vmatprep.subr.mxu0 0.0
        %2436 = vmatpush2.xpose.msra.mxu0 0.0
        %2437 = vmatprep.subr.mxu0 0.0
        %2438 = vmatpush2.xpose.msra.mxu0 0.0
        %2439 = vmatprep.subr.mxu0 0.0
        %2440 = vmatpush2.xpose.msra.mxu0 0.0
        %2441 = vmatprep.mubr.f32.mxu0 0.0
        %2442 = vmatmul.mubr.f32.gmra.mxu0 %v2372
        %v2443 = vpop.f32.mrf.mxu0
        %v2444 = vadd.f32 0.0, %v2443
        %v2445 = vpop.f32.mrf.mxu0
        %2446 = vdwg.mxu0
        %v2448 = vsel %vm2066, %v739, 0
        %v2451 = vsel %vm2066, %v1331, 0
        %2453 = vmatprep.subr.mxu0 0.0
        %2454 = vmatpush1.xpose.msra.mxu0 0.0
        %2455 = vmatprep.subr.mxu0 0.0
        %2456 = vmatpush1.xpose.msra.mxu0 0.0
        %2457 = vmatprep.subr.mxu0 0.0
        %2458 = vmatpush1.xpose.msra.mxu0 0.0
        %2459 = vmatprep.subr.mxu0 0.0
        %2460 = vmatpush1.xpose.msra.mxu0 0.0
        %2461 = vmatprep.subr.mxu0 0.0
        %2462 = vmatpush1.xpose.msra.mxu0 0.0
        %2463 = vmatprep.subr.mxu0 0.0
        %2464 = vmatpush1.xpose.msra.mxu0 0.0
        %2465 = vmatprep.subr.mxu0 0.0
        %2466 = vmatpush1.xpose.msra.mxu0 0.0
        %2467 = vmatprep.subr.mxu0 0.0
        %2468 = vmatpush1.xpose.msra.mxu0 0.0
        %2469 = vmatprep.subr.mxu0 0.0
        %2470 = vmatpush1.xpose.msra.mxu0 0.0
        %2471 = vmatprep.subr.mxu0 0.0
        %2472 = vmatpush1.xpose.msra.mxu0 0.0
        %2473 = vmatprep.subr.mxu0 0.0
        %2474 = vmatpush1.xpose.msra.mxu0 0.0
        %2475 = vmatprep.subr.mxu0 0.0
        %2476 = vmatpush1.xpose.msra.mxu0 0.0
        %2477 = vmatprep.subr.mxu0 0.0
        %2478 = vmatpush1.xpose.msra.mxu0 0.0
        %2479 = vmatprep.subr.mxu0 0.0
        %2480 = vmatpush1.xpose.msra.mxu0 0.0
        %2481 = vmatprep.subr.mxu0 0.0
        %2482 = vmatpush1.xpose.msra.mxu0 0.0
        %2483 = vmatprep.subr.mxu0 0.0
        %2484 = vmatpush1.xpose.msra.mxu0 %v2451
        %2485 = vmatprep.subr.mxu0 0.0
        %2486 = vmatpush2.xpose.msra.mxu0 0.0
        %2487 = vmatprep.subr.mxu0 0.0
        %2488 = vmatpush2.xpose.msra.mxu0 0.0
        %2489 = vmatprep.subr.mxu0 0.0
        %2490 = vmatpush2.xpose.msra.mxu0 0.0
        %2491 = vmatprep.subr.mxu0 0.0
        %2492 = vmatpush2.xpose.msra.mxu0 0.0
        %2493 = vmatprep.subr.mxu0 0.0
        %2494 = vmatpush2.xpose.msra.mxu0 0.0
        %2495 = vmatprep.subr.mxu0 0.0
        %2496 = vmatpush2.xpose.msra.mxu0 0.0
        %2497 = vmatprep.subr.mxu0 0.0
        %2498 = vmatpush2.xpose.msra.mxu0 0.0
        %2499 = vmatprep.subr.mxu0 0.0
        %2500 = vmatpush2.xpose.msra.mxu0 0.0
        %2501 = vmatprep.subr.mxu0 0.0
        %2502 = vmatpush2.xpose.msra.mxu0 0.0
        %2503 = vmatprep.subr.mxu0 0.0
        %2504 = vmatpush2.xpose.msra.mxu0 0.0
        %2505 = vmatprep.subr.mxu0 0.0
        %2506 = vmatpush2.xpose.msra.mxu0 0.0
        %2507 = vmatprep.subr.mxu0 0.0
        %2508 = vmatpush2.xpose.msra.mxu0 0.0
        %2509 = vmatprep.subr.mxu0 0.0
        %2510 = vmatpush2.xpose.msra.mxu0 0.0
        %2511 = vmatprep.subr.mxu0 0.0
        %2512 = vmatpush2.xpose.msra.mxu0 0.0
        %2513 = vmatprep.subr.mxu0 0.0
        %2514 = vmatpush2.xpose.msra.mxu0 0.0
        %2515 = vmatprep.subr.mxu0 0.0
        %2516 = vmatpush2.xpose.msra.mxu0 0.0
        %2517 = vmatprep.mubr.f32.mxu0 0.0
        %2518 = vmatmul.mubr.f32.gmra.mxu0 %v2448
        %v2519 = vpop.f32.mrf.mxu0
        %v2520 = vadd.f32 0.0, %v2519
        %v2521 = vpop.f32.mrf.mxu0
        %2522 = vdwg.mxu0
        %v2524 = vsel %vm2066, %v809, 0
        %v2527 = vsel %vm2066, %v1401, 0
        %2529 = vmatprep.subr.mxu0 0.0
        %2530 = vmatpush1.xpose.msra.mxu0 0.0
        %2531 = vmatprep.subr.mxu0 0.0
        %2532 = vmatpush1.xpose.msra.mxu0 0.0
        %2533 = vmatprep.subr.mxu0 0.0
        %2534 = vmatpush1.xpose.msra.mxu0 0.0
        %2535 = vmatprep.subr.mxu0 0.0
        %2536 = vmatpush1.xpose.msra.mxu0 0.0
        %2537 = vmatprep.subr.mxu0 0.0
        %2538 = vmatpush1.xpose.msra.mxu0 0.0
        %2539 = vmatprep.subr.mxu0 0.0
        %2540 = vmatpush1.xpose.msra.mxu0 0.0
        %2541 = vmatprep.subr.mxu0 0.0
        %2542 = vmatpush1.xpose.msra.mxu0 0.0
        %2543 = vmatprep.subr.mxu0 0.0
        %2544 = vmatpush1.xpose.msra.mxu0 0.0
        %2545 = vmatprep.subr.mxu0 0.0
        %2546 = vmatpush1.xpose.msra.mxu0 0.0
        %2547 = vmatprep.subr.mxu0 0.0
        %2548 = vmatpush1.xpose.msra.mxu0 0.0
        %2549 = vmatprep.subr.mxu0 0.0
        %2550 = vmatpush1.xpose.msra.mxu0 0.0
        %2551 = vmatprep.subr.mxu0 0.0
        %2552 = vmatpush1.xpose.msra.mxu0 0.0
        %2553 = vmatprep.subr.mxu0 0.0
        %2554 = vmatpush1.xpose.msra.mxu0 0.0
        %2555 = vmatprep.subr.mxu0 0.0
        %2556 = vmatpush1.xpose.msra.mxu0 0.0
        %2557 = vmatprep.subr.mxu0 0.0
        %2558 = vmatpush1.xpose.msra.mxu0 0.0
        %2559 = vmatprep.subr.mxu0 0.0
        %2560 = vmatpush1.xpose.msra.mxu0 %v2527
        %2561 = vmatprep.subr.mxu0 0.0
        %2562 = vmatpush2.xpose.msra.mxu0 0.0
        %2563 = vmatprep.subr.mxu0 0.0
        %2564 = vmatpush2.xpose.msra.mxu0 0.0
        %2565 = vmatprep.subr.mxu0 0.0
        %2566 = vmatpush2.xpose.msra.mxu0 0.0
        %2567 = vmatprep.subr.mxu0 0.0
        %2568 = vmatpush2.xpose.msra.mxu0 0.0
        %2569 = vmatprep.subr.mxu0 0.0
        %2570 = vmatpush2.xpose.msra.mxu0 0.0
        %2571 = vmatprep.subr.mxu0 0.0
        %2572 = vmatpush2.xpose.msra.mxu0 0.0
        %2573 = vmatprep.subr.mxu0 0.0
        %2574 = vmatpush2.xpose.msra.mxu0 0.0
        %2575 = vmatprep.subr.mxu0 0.0
        %2576 = vmatpush2.xpose.msra.mxu0 0.0
        %2577 = vmatprep.subr.mxu0 0.0
        %2578 = vmatpush2.xpose.msra.mxu0 0.0
        %2579 = vmatprep.subr.mxu0 0.0
        %2580 = vmatpush2.xpose.msra.mxu0 0.0
        %2581 = vmatprep.subr.mxu0 0.0
        %2582 = vmatpush2.xpose.msra.mxu0 0.0
        %2583 = vmatprep.subr.mxu0 0.0
        %2584 = vmatpush2.xpose.msra.mxu0 0.0
        %2585 = vmatprep.subr.mxu0 0.0
        %2586 = vmatpush2.xpose.msra.mxu0 0.0
        %2587 = vmatprep.subr.mxu0 0.0
        %2588 = vmatpush2.xpose.msra.mxu0 0.0
        %2589 = vmatprep.subr.mxu0 0.0
        %2590 = vmatpush2.xpose.msra.mxu0 0.0
        %2591 = vmatprep.subr.mxu0 0.0
        %2592 = vmatpush2.xpose.msra.mxu0 0.0
        %2593 = vmatprep.mubr.f32.mxu0 0.0
        %2594 = vmatmul.mubr.f32.gmra.mxu0 %v2524
        %v2595 = vpop.f32.mrf.mxu0
        %v2596 = vadd.f32 0.0, %v2595
        %v2597 = vpop.f32.mrf.mxu0
        %2598 = vdwg.mxu0
        %v2600 = vsel %vm2066, %v879, 0
        %v2603 = vsel %vm2066, %v1471, 0
        %2605 = vmatprep.subr.mxu0 0.0
        %2606 = vmatpush1.xpose.msra.mxu0 0.0
        %2607 = vmatprep.subr.mxu0 0.0
        %2608 = vmatpush1.xpose.msra.mxu0 0.0
        %2609 = vmatprep.subr.mxu0 0.0
        %2610 = vmatpush1.xpose.msra.mxu0 0.0
        %2611 = vmatprep.subr.mxu0 0.0
        %2612 = vmatpush1.xpose.msra.mxu0 0.0
        %2613 = vmatprep.subr.mxu0 0.0
        %2614 = vmatpush1.xpose.msra.mxu0 0.0
        %2615 = vmatprep.subr.mxu0 0.0
        %2616 = vmatpush1.xpose.msra.mxu0 0.0
        %2617 = vmatprep.subr.mxu0 0.0
        %2618 = vmatpush1.xpose.msra.mxu0 0.0
        %2619 = vmatprep.subr.mxu0 0.0
        %2620 = vmatpush1.xpose.msra.mxu0 0.0
        %2621 = vmatprep.subr.mxu0 0.0
        %2622 = vmatpush1.xpose.msra.mxu0 0.0
        %2623 = vmatprep.subr.mxu0 0.0
        %2624 = vmatpush1.xpose.msra.mxu0 0.0
        %2625 = vmatprep.subr.mxu0 0.0
        %2626 = vmatpush1.xpose.msra.mxu0 0.0
        %2627 = vmatprep.subr.mxu0 0.0
        %2628 = vmatpush1.xpose.msra.mxu0 0.0
        %2629 = vmatprep.subr.mxu0 0.0
        %2630 = vmatpush1.xpose.msra.mxu0 0.0
        %2631 = vmatprep.subr.mxu0 0.0
        %2632 = vmatpush1.xpose.msra.mxu0 0.0
        %2633 = vmatprep.subr.mxu0 0.0
        %2634 = vmatpush1.xpose.msra.mxu0 0.0
        %2635 = vmatprep.subr.mxu0 0.0
        %2636 = vmatpush1.xpose.msra.mxu0 %v2603
        %2637 = vmatprep.subr.mxu0 0.0
        %2638 = vmatpush2.xpose.msra.mxu0 0.0
        %2639 = vmatprep.subr.mxu0 0.0
        %2640 = vmatpush2.xpose.msra.mxu0 0.0
        %2641 = vmatprep.subr.mxu0 0.0
        %2642 = vmatpush2.xpose.msra.mxu0 0.0
        %2643 = vmatprep.subr.mxu0 0.0
        %2644 = vmatpush2.xpose.msra.mxu0 0.0
        %2645 = vmatprep.subr.mxu0 0.0
        %2646 = vmatpush2.xpose.msra.mxu0 0.0
        %2647 = vmatprep.subr.mxu0 0.0
        %2648 = vmatpush2.xpose.msra.mxu0 0.0
        %2649 = vmatprep.subr.mxu0 0.0
        %2650 = vmatpush2.xpose.msra.mxu0 0.0
        %2651 = vmatprep.subr.mxu0 0.0
        %2652 = vmatpush2.xpose.msra.mxu0 0.0
        %2653 = vmatprep.subr.mxu0 0.0
        %2654 = vmatpush2.xpose.msra.mxu0 0.0
        %2655 = vmatprep.subr.mxu0 0.0
        %2656 = vmatpush2.xpose.msra.mxu0 0.0
        %2657 = vmatprep.subr.mxu0 0.0
        %2658 = vmatpush2.xpose.msra.mxu0 0.0
        %2659 = vmatprep.subr.mxu0 0.0
        %2660 = vmatpush2.xpose.msra.mxu0 0.0
        %2661 = vmatprep.subr.mxu0 0.0
        %2662 = vmatpush2.xpose.msra.mxu0 0.0
        %2663 = vmatprep.subr.mxu0 0.0
        %2664 = vmatpush2.xpose.msra.mxu0 0.0
        %2665 = vmatprep.subr.mxu0 0.0
        %2666 = vmatpush2.xpose.msra.mxu0 0.0
        %2667 = vmatprep.subr.mxu0 0.0
        %2668 = vmatpush2.xpose.msra.mxu0 0.0
        %2669 = vmatprep.mubr.f32.mxu0 0.0
        %2670 = vmatmul.mubr.f32.gmra.mxu0 %v2600
        %v2671 = vpop.f32.mrf.mxu0
        %v2672 = vadd.f32 0.0, %v2671
        %v2673 = vpop.f32.mrf.mxu0
        %2674 = vdwg.mxu0
        %vm2675 = vcmask 64512
        %v2676 = vsel %vm2675, %v2140, -inf
        %2677 = vmax.xlane.f32.xlu0 %v2676
        %v2678 = vpop.xlane.xlu0 %2677
        %v2679 = vsel %vm2675, %v2216, -inf
        %2680 = vmax.xlane.f32.xlu0 %v2679
        %v2681 = vpop.xlane.xlu0 %2680
        %v2682 = vsel %vm2675, %v2292, -inf
        %2683 = vmax.xlane.f32.xlu0 %v2682
        %v2684 = vpop.xlane.xlu0 %2683
        %v2685 = vsel %vm2675, %v2368, -inf
        %2686 = vmax.xlane.f32.xlu0 %v2685
        %v2687 = vpop.xlane.xlu0 %2686
        %v2688 = vsel %vm2675, %v2444, -inf
        %2689 = vmax.xlane.f32.xlu0 %v2688
        %v2690 = vpop.xlane.xlu0 %2689
        %v2691 = vsel %vm2675, %v2520, -inf
        %2692 = vmax.xlane.f32.xlu0 %v2691
        %v2693 = vpop.xlane.xlu0 %2692
        %v2694 = vsel %vm2675, %v2596, -inf
        %2695 = vmax.xlane.f32.xlu0 %v2694
        %v2696 = vpop.xlane.xlu0 %2695
        %v2697 = vsel %vm2675, %v2672, -inf
        %2698 = vmax.xlane.f32.xlu0 %v2697
        %v2699 = vpop.xlane.xlu0 %2698
        %v2700 = vsub.f32 %v2140, %v2678
        %v2701 = vsub.f32 %v2216, %v2681
        %v2702 = vsub.f32 %v2292, %v2684
        %v2703 = vsub.f32 %v2368, %v2687
        %v2704 = vsub.f32 %v2444, %v2690
        %v2705 = vsub.f32 %v2520, %v2693
        %v2706 = vsub.f32 %v2596, %v2696
        %v2707 = vsub.f32 %v2672, %v2699
        %v2708 = vmul.f32 %v2700, 1.442695
        %v2709 = vpow.pop %v2708
        %v2710 = vmul.f32 %v2701, 1.442695
        %v2711 = vpow.pop %v2710
        %v2712 = vmul.f32 %v2702, 1.442695
        %v2713 = vpow.pop %v2712
        %v2714 = vmul.f32 %v2703, 1.442695
        %v2715 = vpow.pop %v2714
        %v2716 = vmul.f32 %v2704, 1.442695
        %v2717 = vpow.pop %v2716
        %v2718 = vmul.f32 %v2705, 1.442695
        %v2719 = vpow.pop %v2718
        %v2720 = vmul.f32 %v2706, 1.442695
        %v2721 = vpow.pop %v2720
        %v2722 = vmul.f32 %v2707, 1.442695
        %v2723 = vpow.pop %v2722
        %v2724 = vsel %vm2675, %v2709, 0.0
        %2725 = vadd.xlane.f32.xlu0 %v2724
        %v2726 = vpop.xlane.xlu0 %2725
        %v2727 = vsel %vm2675, %v2711, 0.0
        %2728 = vadd.xlane.f32.xlu0 %v2727
        %v2729 = vpop.xlane.xlu0 %2728
        %v2730 = vsel %vm2675, %v2713, 0.0
        %2731 = vadd.xlane.f32.xlu0 %v2730
        %v2732 = vpop.xlane.xlu0 %2731
        %v2733 = vsel %vm2675, %v2715, 0.0
        %2734 = vadd.xlane.f32.xlu0 %v2733
        %v2735 = vpop.xlane.xlu0 %2734
        %v2736 = vsel %vm2675, %v2717, 0.0
        %2737 = vadd.xlane.f32.xlu0 %v2736
        %v2738 = vpop.xlane.xlu0 %2737
        %v2739 = vsel %vm2675, %v2719, 0.0
        %2740 = vadd.xlane.f32.xlu0 %v2739
        %v2741 = vpop.xlane.xlu0 %2740
        %v2742 = vsel %vm2675, %v2721, 0.0
        %2743 = vadd.xlane.f32.xlu0 %v2742
        %v2744 = vpop.xlane.xlu0 %2743
        %v2745 = vsel %vm2675, %v2723, 0.0
        %2746 = vadd.xlane.f32.xlu0 %v2745
        %v2747 = vpop.xlane.xlu0 %2746
        %v2748 = vrcp.pop %v2726
        %v2749 = vrcp.pop %v2729
        %v2750 = vrcp.pop %v2732
        %v2751 = vrcp.pop %v2735
        %v2752 = vrcp.pop %v2738
        %v2753 = vrcp.pop %v2741
        %v2754 = vrcp.pop %v2744
        %v2755 = vrcp.pop %v2747
        %v2756 = vmul.f32 %v2709, %v2748
        %v2757 = vmul.f32 %v2711, %v2749
        %v2758 = vmul.f32 %v2713, %v2750
        %v2759 = vmul.f32 %v2715, %v2751
        %v2760 = vmul.f32 %v2717, %v2752
        %v2761 = vmul.f32 %v2719, %v2753
        %v2762 = vmul.f32 %v2721, %v2754
        %v2763 = vmul.f32 %v2723, %v2755
        %2764 = vst.msk [vmem:[%s280] sm:$0xff] %vm2675, %v2756
        %2765 = vst.msk [vmem:[%s280 + $0x8] sm:$0xff] %vm2675, %v2757
        %2766 = vst.msk [vmem:[%s280 + $0x10] sm:$0xff] %vm2675, %v2758
        %2767 = vst.msk [vmem:[%s280 + $0x18] sm:$0xff] %vm2675, %v2759
        %2768 = vst.msk [vmem:[%s280 + $0x20] sm:$0xff] %vm2675, %v2760
        %2769 = vst.msk [vmem:[%s280 + $0x28] sm:$0xff] %vm2675, %v2761
        %2770 = vst.msk [vmem:[%s280 + $0x30] sm:$0xff] %vm2675, %v2762
        %2771 = vst.msk [vmem:[%s280 + $0x38] sm:$0xff] %vm2675, %v2763
        %v2773 = vsel %vm2675, %v2756, 0
        %2775 = vmatprep.subr.mxu0 0.0
        %2776 = vmatpush1.msra.mxu0 0.0
        %2777 = vmatprep.subr.mxu0 0.0
        %2778 = vmatpush1.msra.mxu0 0.0
        %2779 = vmatprep.subr.mxu0 0.0
        %2780 = vmatpush1.msra.mxu0 0.0
        %2781 = vmatprep.subr.mxu0 0.0
        %2782 = vmatpush1.msra.mxu0 0.0
        %2783 = vmatprep.subr.mxu0 0.0
        %2784 = vmatpush1.msra.mxu0 0.0
        %2785 = vmatprep.subr.mxu0 0.0
        %2786 = vmatpush1.msra.mxu0 0.0
        %2787 = vmatprep.subr.mxu0 0.0
        %2788 = vmatpush1.msra.mxu0 0.0
        %2789 = vmatprep.subr.mxu0 0.0
        %2790 = vmatpush1.msra.mxu0 0.0
        %2791 = vmatprep.subr.mxu0 0.0
        %2792 = vmatpush1.msra.mxu0 0.0
        %2793 = vmatprep.subr.mxu0 0.0
        %2794 = vmatpush1.msra.mxu0 0.0
        %2795 = vmatprep.subr.mxu0 0.0
        %2796 = vmatpush1.msra.mxu0 0.0
        %2797 = vmatprep.subr.mxu0 0.0
        %2798 = vmatpush1.msra.mxu0 0.0
        %2799 = vmatprep.subr.mxu0 0.0
        %2800 = vmatpush1.msra.mxu0 0.0
        %2801 = vmatprep.subr.mxu0 0.0
        %2802 = vmatpush1.msra.mxu0 0.0
        %2803 = vmatprep.subr.mxu0 0.0
        %2804 = vmatpush1.msra.mxu0 0.0
        %2805 = vmatprep.subr.mxu0 0.0
        %2806 = vmatpush1.msra.mxu0 %v1573
        %2807 = vmatprep.subr.mxu0 0.0
        %2808 = vmatpush2.msra.mxu0 0.0
        %2809 = vmatprep.subr.mxu0 0.0
        %2810 = vmatpush2.msra.mxu0 0.0
        %2811 = vmatprep.subr.mxu0 0.0
        %2812 = vmatpush2.msra.mxu0 0.0
        %2813 = vmatprep.subr.mxu0 0.0
        %2814 = vmatpush2.msra.mxu0 0.0
        %2815 = vmatprep.subr.mxu0 0.0
        %2816 = vmatpush2.msra.mxu0 0.0
        %2817 = vmatprep.subr.mxu0 0.0
        %2818 = vmatpush2.msra.mxu0 0.0
        %2819 = vmatprep.subr.mxu0 0.0
        %2820 = vmatpush2.msra.mxu0 0.0
        %2821 = vmatprep.subr.mxu0 0.0
        %2822 = vmatpush2.msra.mxu0 0.0
        %2823 = vmatprep.subr.mxu0 0.0
        %2824 = vmatpush2.msra.mxu0 0.0
        %2825 = vmatprep.subr.mxu0 0.0
        %2826 = vmatpush2.msra.mxu0 0.0
        %2827 = vmatprep.subr.mxu0 0.0
        %2828 = vmatpush2.msra.mxu0 0.0
        %2829 = vmatprep.subr.mxu0 0.0
        %2830 = vmatpush2.msra.mxu0 0.0
        %2831 = vmatprep.subr.mxu0 0.0
        %2832 = vmatpush2.msra.mxu0 0.0
        %2833 = vmatprep.subr.mxu0 0.0
        %2834 = vmatpush2.msra.mxu0 0.0
        %2835 = vmatprep.subr.mxu0 0.0
        %2836 = vmatpush2.msra.mxu0 0.0
        %2837 = vmatprep.subr.mxu0 0.0
        %2838 = vmatpush2.msra.mxu0 0.0
        %2839 = vmatprep.mubr.f32.mxu0 0.0
        %2840 = vmatmul.mubr.f32.gmra.mxu0 %v2773
        %v2841 = vpop.f32.mrf.mxu0
        %v2842 = vadd.f32 0.0, %v2841
        %v2843 = vpop.f32.mrf.mxu0
        %2844 = vdwg.mxu0
        %v2846 = vsel %vm2675, %v2757, 0
        %2848 = vmatprep.subr.mxu0 0.0
        %2849 = vmatpush1.msra.mxu0 0.0
        %2850 = vmatprep.subr.mxu0 0.0
        %2851 = vmatpush1.msra.mxu0 0.0
        %2852 = vmatprep.subr.mxu0 0.0
        %2853 = vmatpush1.msra.mxu0 0.0
        %2854 = vmatprep.subr.mxu0 0.0
        %2855 = vmatpush1.msra.mxu0 0.0
        %2856 = vmatprep.subr.mxu0 0.0
        %2857 = vmatpush1.msra.mxu0 0.0
        %2858 = vmatprep.subr.mxu0 0.0
        %2859 = vmatpush1.msra.mxu0 0.0
        %2860 = vmatprep.subr.mxu0 0.0
        %2861 = vmatpush1.msra.mxu0 0.0
        %2862 = vmatprep.subr.mxu0 0.0
        %2863 = vmatpush1.msra.mxu0 0.0
        %2864 = vmatprep.subr.mxu0 0.0
        %2865 = vmatpush1.msra.mxu0 0.0
        %2866 = vmatprep.subr.mxu0 0.0
        %2867 = vmatpush1.msra.mxu0 0.0
        %2868 = vmatprep.subr.mxu0 0.0
        %2869 = vmatpush1.msra.mxu0 0.0
        %2870 = vmatprep.subr.mxu0 0.0
        %2871 = vmatpush1.msra.mxu0 0.0
        %2872 = vmatprep.subr.mxu0 0.0
        %2873 = vmatpush1.msra.mxu0 0.0
        %2874 = vmatprep.subr.mxu0 0.0
        %2875 = vmatpush1.msra.mxu0 0.0
        %2876 = vmatprep.subr.mxu0 0.0
        %2877 = vmatpush1.msra.mxu0 0.0
        %2878 = vmatprep.subr.mxu0 0.0
        %2879 = vmatpush1.msra.mxu0 %v1643
        %2880 = vmatprep.subr.mxu0 0.0
        %2881 = vmatpush2.msra.mxu0 0.0
        %2882 = vmatprep.subr.mxu0 0.0
        %2883 = vmatpush2.msra.mxu0 0.0
        %2884 = vmatprep.subr.mxu0 0.0
        %2885 = vmatpush2.msra.mxu0 0.0
        %2886 = vmatprep.subr.mxu0 0.0
        %2887 = vmatpush2.msra.mxu0 0.0
        %2888 = vmatprep.subr.mxu0 0.0
        %2889 = vmatpush2.msra.mxu0 0.0
        %2890 = vmatprep.subr.mxu0 0.0
        %2891 = vmatpush2.msra.mxu0 0.0
        %2892 = vmatprep.subr.mxu0 0.0
        %2893 = vmatpush2.msra.mxu0 0.0
        %2894 = vmatprep.subr.mxu0 0.0
        %2895 = vmatpush2.msra.mxu0 0.0
        %2896 = vmatprep.subr.mxu0 0.0
        %2897 = vmatpush2.msra.mxu0 0.0
        %2898 = vmatprep.subr.mxu0 0.0
        %2899 = vmatpush2.msra.mxu0 0.0
        %2900 = vmatprep.subr.mxu0 0.0
        %2901 = vmatpush2.msra.mxu0 0.0
        %2902 = vmatprep.subr.mxu0 0.0
        %2903 = vmatpush2.msra.mxu0 0.0
        %2904 = vmatprep.subr.mxu0 0.0
        %2905 = vmatpush2.msra.mxu0 0.0
        %2906 = vmatprep.subr.mxu0 0.0
        %2907 = vmatpush2.msra.mxu0 0.0
        %2908 = vmatprep.subr.mxu0 0.0
        %2909 = vmatpush2.msra.mxu0 0.0
        %2910 = vmatprep.subr.mxu0 0.0
        %2911 = vmatpush2.msra.mxu0 0.0
        %2912 = vmatprep.mubr.f32.mxu0 0.0
        %2913 = vmatmul.mubr.f32.gmra.mxu0 %v2846
        %v2914 = vpop.f32.mrf.mxu0
        %v2915 = vadd.f32 0.0, %v2914
        %v2916 = vpop.f32.mrf.mxu0
        %2917 = vdwg.mxu0
        %v2919 = vsel %vm2675, %v2758, 0
        %2921 = vmatprep.subr.mxu0 0.0
        %2922 = vmatpush1.msra.mxu0 0.0
        %2923 = vmatprep.subr.mxu0 0.0
        %2924 = vmatpush1.msra.mxu0 0.0
        %2925 = vmatprep.subr.mxu0 0.0
        %2926 = vmatpush1.msra.mxu0 0.0
        %2927 = vmatprep.subr.mxu0 0.0
        %2928 = vmatpush1.msra.mxu0 0.0
        %2929 = vmatprep.subr.mxu0 0.0
        %2930 = vmatpush1.msra.mxu0 0.0
        %2931 = vmatprep.subr.mxu0 0.0
        %2932 = vmatpush1.msra.mxu0 0.0
        %2933 = vmatprep.subr.mxu0 0.0
        %2934 = vmatpush1.msra.mxu0 0.0
        %2935 = vmatprep.subr.mxu0 0.0
        %2936 = vmatpush1.msra.mxu0 0.0
        %2937 = vmatprep.subr.mxu0 0.0
        %2938 = vmatpush1.msra.mxu0 0.0
        %2939 = vmatprep.subr.mxu0 0.0
        %2940 = vmatpush1.msra.mxu0 0.0
        %2941 = vmatprep.subr.mxu0 0.0
        %2942 = vmatpush1.msra.mxu0 0.0
        %2943 = vmatprep.subr.mxu0 0.0
        %2944 = vmatpush1.msra.mxu0 0.0
        %2945 = vmatprep.subr.mxu0 0.0
        %2946 = vmatpush1.msra.mxu0 0.0
        %2947 = vmatprep.subr.mxu0 0.0
        %2948 = vmatpush1.msra.mxu0 0.0
        %2949 = vmatprep.subr.mxu0 0.0
        %2950 = vmatpush1.msra.mxu0 0.0
        %2951 = vmatprep.subr.mxu0 0.0
        %2952 = vmatpush1.msra.mxu0 %v1713
        %2953 = vmatprep.subr.mxu0 0.0
        %2954 = vmatpush2.msra.mxu0 0.0
        %2955 = vmatprep.subr.mxu0 0.0
        %2956 = vmatpush2.msra.mxu0 0.0
        %2957 = vmatprep.subr.mxu0 0.0
        %2958 = vmatpush2.msra.mxu0 0.0
        %2959 = vmatprep.subr.mxu0 0.0
        %2960 = vmatpush2.msra.mxu0 0.0
        %2961 = vmatprep.subr.mxu0 0.0
        %2962 = vmatpush2.msra.mxu0 0.0
        %2963 = vmatprep.subr.mxu0 0.0
        %2964 = vmatpush2.msra.mxu0 0.0
        %2965 = vmatprep.subr.mxu0 0.0
        %2966 = vmatpush2.msra.mxu0 0.0
        %2967 = vmatprep.subr.mxu0 0.0
        %2968 = vmatpush2.msra.mxu0 0.0
        %2969 = vmatprep.subr.mxu0 0.0
        %2970 = vmatpush2.msra.mxu0 0.0
        %2971 = vmatprep.subr.mxu0 0.0
        %2972 = vmatpush2.msra.mxu0 0.0
        %2973 = vmatprep.subr.mxu0 0.0
        %2974 = vmatpush2.msra.mxu0 0.0
        %2975 = vmatprep.subr.mxu0 0.0
        %2976 = vmatpush2.msra.mxu0 0.0
        %2977 = vmatprep.subr.mxu0 0.0
        %2978 = vmatpush2.msra.mxu0 0.0
        %2979 = vmatprep.subr.mxu0 0.0
        %2980 = vmatpush2.msra.mxu0 0.0
        %2981 = vmatprep.subr.mxu0 0.0
        %2982 = vmatpush2.msra.mxu0 0.0
        %2983 = vmatprep.subr.mxu0 0.0
        %2984 = vmatpush2.msra.mxu0 0.0
        %2985 = vmatprep.mubr.f32.mxu0 0.0
        %2986 = vmatmul.mubr.f32.gmra.mxu0 %v2919
        %v2987 = vpop.f32.mrf.mxu0
        %v2988 = vadd.f32 0.0, %v2987
        %v2989 = vpop.f32.mrf.mxu0
        %2990 = vdwg.mxu0
        %v2992 = vsel %vm2675, %v2759, 0
        %2994 = vmatprep.subr.mxu0 0.0
        %2995 = vmatpush1.msra.mxu0 0.0
        %2996 = vmatprep.subr.mxu0 0.0
        %2997 = vmatpush1.msra.mxu0 0.0
        %2998 = vmatprep.subr.mxu0 0.0
        %2999 = vmatpush1.msra.mxu0 0.0
        %3000 = vmatprep.subr.mxu0 0.0
        %3001 = vmatpush1.msra.mxu0 0.0
        %3002 = vmatprep.subr.mxu0 0.0
        %3003 = vmatpush1.msra.mxu0 0.0
        %3004 = vmatprep.subr.mxu0 0.0
        %3005 = vmatpush1.msra.mxu0 0.0
        %3006 = vmatprep.subr.mxu0 0.0
        %3007 = vmatpush1.msra.mxu0 0.0
        %3008 = vmatprep.subr.mxu0 0.0
        %3009 = vmatpush1.msra.mxu0 0.0
        %3010 = vmatprep.subr.mxu0 0.0
        %3011 = vmatpush1.msra.mxu0 0.0
        %3012 = vmatprep.subr.mxu0 0.0
        %3013 = vmatpush1.msra.mxu0 0.0
        %3014 = vmatprep.subr.mxu0 0.0
        %3015 = vmatpush1.msra.mxu0 0.0
        %3016 = vmatprep.subr.mxu0 0.0
        %3017 = vmatpush1.msra.mxu0 0.0
        %3018 = vmatprep.subr.mxu0 0.0
        %3019 = vmatpush1.msra.mxu0 0.0
        %3020 = vmatprep.subr.mxu0 0.0
        %3021 = vmatpush1.msra.mxu0 0.0
        %3022 = vmatprep.subr.mxu0 0.0
        %3023 = vmatpush1.msra.mxu0 0.0
        %3024 = vmatprep.subr.mxu0 0.0
        %3025 = vmatpush1.msra.mxu0 %v1783
        %3026 = vmatprep.subr.mxu0 0.0
        %3027 = vmatpush2.msra.mxu0 0.0
        %3028 = vmatprep.subr.mxu0 0.0
        %3029 = vmatpush2.msra.mxu0 0.0
        %3030 = vmatprep.subr.mxu0 0.0
        %3031 = vmatpush2.msra.mxu0 0.0
        %3032 = vmatprep.subr.mxu0 0.0
        %3033 = vmatpush2.msra.mxu0 0.0
        %3034 = vmatprep.subr.mxu0 0.0
        %3035 = vmatpush2.msra.mxu0 0.0
        %3036 = vmatprep.subr.mxu0 0.0
        %3037 = vmatpush2.msra.mxu0 0.0
        %3038 = vmatprep.subr.mxu0 0.0
        %3039 = vmatpush2.msra.mxu0 0.0
        %3040 = vmatprep.subr.mxu0 0.0
        %3041 = vmatpush2.msra.mxu0 0.0
        %3042 = vmatprep.subr.mxu0 0.0
        %3043 = vmatpush2.msra.mxu0 0.0
        %3044 = vmatprep.subr.mxu0 0.0
        %3045 = vmatpush2.msra.mxu0 0.0
        %3046 = vmatprep.subr.mxu0 0.0
        %3047 = vmatpush2.msra.mxu0 0.0
        %3048 = vmatprep.subr.mxu0 0.0
        %3049 = vmatpush2.msra.mxu0 0.0
        %3050 = vmatprep.subr.mxu0 0.0
        %3051 = vmatpush2.msra.mxu0 0.0
        %3052 = vmatprep.subr.mxu0 0.0
        %3053 = vmatpush2.msra.mxu0 0.0
        %3054 = vmatprep.subr.mxu0 0.0
        %3055 = vmatpush2.msra.mxu0 0.0
        %3056 = vmatprep.subr.mxu0 0.0
        %3057 = vmatpush2.msra.mxu0 0.0
        %3058 = vmatprep.mubr.f32.mxu0 0.0
        %3059 = vmatmul.mubr.f32.gmra.mxu0 %v2992
        %v3060 = vpop.f32.mrf.mxu0
        %v3061 = vadd.f32 0.0, %v3060
        %v3062 = vpop.f32.mrf.mxu0
        %3063 = vdwg.mxu0
        %v3065 = vsel %vm2675, %v2760, 0
        %3067 = vmatprep.subr.mxu0 0.0
        %3068 = vmatpush1.msra.mxu0 0.0
        %3069 = vmatprep.subr.mxu0 0.0
        %3070 = vmatpush1.msra.mxu0 0.0
        %3071 = vmatprep.subr.mxu0 0.0
        %3072 = vmatpush1.msra.mxu0 0.0
        %3073 = vmatprep.subr.mxu0 0.0
        %3074 = vmatpush1.msra.mxu0 0.0
        %3075 = vmatprep.subr.mxu0 0.0
        %3076 = vmatpush1.msra.mxu0 0.0
        %3077 = vmatprep.subr.mxu0 0.0
        %3078 = vmatpush1.msra.mxu0 0.0
        %3079 = vmatprep.subr.mxu0 0.0
        %3080 = vmatpush1.msra.mxu0 0.0
        %3081 = vmatprep.subr.mxu0 0.0
        %3082 = vmatpush1.msra.mxu0 0.0
        %3083 = vmatprep.subr.mxu0 0.0
        %3084 = vmatpush1.msra.mxu0 0.0
        %3085 = vmatprep.subr.mxu0 0.0
        %3086 = vmatpush1.msra.mxu0 0.0
        %3087 = vmatprep.subr.mxu0 0.0
        %3088 = vmatpush1.msra.mxu0 0.0
        %3089 = vmatprep.subr.mxu0 0.0
        %3090 = vmatpush1.msra.mxu0 0.0
        %3091 = vmatprep.subr.mxu0 0.0
        %3092 = vmatpush1.msra.mxu0 0.0
        %3093 = vmatprep.subr.mxu0 0.0
        %3094 = vmatpush1.msra.mxu0 0.0
        %3095 = vmatprep.subr.mxu0 0.0
        %3096 = vmatpush1.msra.mxu0 0.0
        %3097 = vmatprep.subr.mxu0 0.0
        %3098 = vmatpush1.msra.mxu0 %v1853
        %3099 = vmatprep.subr.mxu0 0.0
        %3100 = vmatpush2.msra.mxu0 0.0
        %3101 = vmatprep.subr.mxu0 0.0
        %3102 = vmatpush2.msra.mxu0 0.0
        %3103 = vmatprep.subr.mxu0 0.0
        %3104 = vmatpush2.msra.mxu0 0.0
        %3105 = vmatprep.subr.mxu0 0.0
        %3106 = vmatpush2.msra.mxu0 0.0
        %3107 = vmatprep.subr.mxu0 0.0
        %3108 = vmatpush2.msra.mxu0 0.0
        %3109 = vmatprep.subr.mxu0 0.0
        %3110 = vmatpush2.msra.mxu0 0.0
        %3111 = vmatprep.subr.mxu0 0.0
        %3112 = vmatpush2.msra.mxu0 0.0
        %3113 = vmatprep.subr.mxu0 0.0
        %3114 = vmatpush2.msra.mxu0 0.0
        %3115 = vmatprep.subr.mxu0 0.0
        %3116 = vmatpush2.msra.mxu0 0.0
        %3117 = vmatprep.subr.mxu0 0.0
        %3118 = vmatpush2.msra.mxu0 0.0
        %3119 = vmatprep.subr.mxu0 0.0
        %3120 = vmatpush2.msra.mxu0 0.0
        %3121 = vmatprep.subr.mxu0 0.0
        %3122 = vmatpush2.msra.mxu0 0.0
        %3123 = vmatprep.subr.mxu0 0.0
        %3124 = vmatpush2.msra.mxu0 0.0
        %3125 = vmatprep.subr.mxu0 0.0
        %3126 = vmatpush2.msra.mxu0 0.0
        %3127 = vmatprep.subr.mxu0 0.0
        %3128 = vmatpush2.msra.mxu0 0.0
        %3129 = vmatprep.subr.mxu0 0.0
        %3130 = vmatpush2.msra.mxu0 0.0
        %3131 = vmatprep.mubr.f32.mxu0 0.0
        %3132 = vmatmul.mubr.f32.gmra.mxu0 %v3065
        %v3133 = vpop.f32.mrf.mxu0
        %v3134 = vadd.f32 0.0, %v3133
        %v3135 = vpop.f32.mrf.mxu0
        %3136 = vdwg.mxu0
        %v3138 = vsel %vm2675, %v2761, 0
        %3140 = vmatprep.subr.mxu0 0.0
        %3141 = vmatpush1.msra.mxu0 0.0
        %3142 = vmatprep.subr.mxu0 0.0
        %3143 = vmatpush1.msra.mxu0 0.0
        %3144 = vmatprep.subr.mxu0 0.0
        %3145 = vmatpush1.msra.mxu0 0.0
        %3146 = vmatprep.subr.mxu0 0.0
        %3147 = vmatpush1.msra.mxu0 0.0
        %3148 = vmatprep.subr.mxu0 0.0
        %3149 = vmatpush1.msra.mxu0 0.0
        %3150 = vmatprep.subr.mxu0 0.0
        %3151 = vmatpush1.msra.mxu0 0.0
        %3152 = vmatprep.subr.mxu0 0.0
        %3153 = vmatpush1.msra.mxu0 0.0
        %3154 = vmatprep.subr.mxu0 0.0
        %3155 = vmatpush1.msra.mxu0 0.0
        %3156 = vmatprep.subr.mxu0 0.0
        %3157 = vmatpush1.msra.mxu0 0.0
        %3158 = vmatprep.subr.mxu0 0.0
        %3159 = vmatpush1.msra.mxu0 0.0
        %3160 = vmatprep.subr.mxu0 0.0
        %3161 = vmatpush1.msra.mxu0 0.0
        %3162 = vmatprep.subr.mxu0 0.0
        %3163 = vmatpush1.msra.mxu0 0.0
        %3164 = vmatprep.subr.mxu0 0.0
        %3165 = vmatpush1.msra.mxu0 0.0
        %3166 = vmatprep.subr.mxu0 0.0
        %3167 = vmatpush1.msra.mxu0 0.0
        %3168 = vmatprep.subr.mxu0 0.0
        %3169 = vmatpush1.msra.mxu0 0.0
        %3170 = vmatprep.subr.mxu0 0.0
        %3171 = vmatpush1.msra.mxu0 %v1923
        %3172 = vmatprep.subr.mxu0 0.0
        %3173 = vmatpush2.msra.mxu0 0.0
        %3174 = vmatprep.subr.mxu0 0.0
        %3175 = vmatpush2.msra.mxu0 0.0
        %3176 = vmatprep.subr.mxu0 0.0
        %3177 = vmatpush2.msra.mxu0 0.0
        %3178 = vmatprep.subr.mxu0 0.0
        %3179 = vmatpush2.msra.mxu0 0.0
        %3180 = vmatprep.subr.mxu0 0.0
        %3181 = vmatpush2.msra.mxu0 0.0
        %3182 = vmatprep.subr.mxu0 0.0
        %3183 = vmatpush2.msra.mxu0 0.0
        %3184 = vmatprep.subr.mxu0 0.0
        %3185 = vmatpush2.msra.mxu0 0.0
        %3186 = vmatprep.subr.mxu0 0.0
        %3187 = vmatpush2.msra.mxu0 0.0
        %3188 = vmatprep.subr.mxu0 0.0
        %3189 = vmatpush2.msra.mxu0 0.0
        %3190 = vmatprep.subr.mxu0 0.0
        %3191 = vmatpush2.msra.mxu0 0.0
        %3192 = vmatprep.subr.mxu0 0.0
        %3193 = vmatpush2.msra.mxu0 0.0
        %3194 = vmatprep.subr.mxu0 0.0
        %3195 = vmatpush2.msra.mxu0 0.0
        %3196 = vmatprep.subr.mxu0 0.0
        %3197 = vmatpush2.msra.mxu0 0.0
        %3198 = vmatprep.subr.mxu0 0.0
        %3199 = vmatpush2.msra.mxu0 0.0
        %3200 = vmatprep.subr.mxu0 0.0
        %3201 = vmatpush2.msra.mxu0 0.0
        %3202 = vmatprep.subr.mxu0 0.0
        %3203 = vmatpush2.msra.mxu0 0.0
        %3204 = vmatprep.mubr.f32.mxu0 0.0
        %3205 = vmatmul.mubr.f32.gmra.mxu0 %v3138
        %v3206 = vpop.f32.mrf.mxu0
        %v3207 = vadd.f32 0.0, %v3206
        %v3208 = vpop.f32.mrf.mxu0
        %3209 = vdwg.mxu0
        %v3211 = vsel %vm2675, %v2762, 0
        %3213 = vmatprep.subr.mxu0 0.0
        %3214 = vmatpush1.msra.mxu0 0.0
        %3215 = vmatprep.subr.mxu0 0.0
        %3216 = vmatpush1.msra.mxu0 0.0
        %3217 = vmatprep.subr.mxu0 0.0
        %3218 = vmatpush1.msra.mxu0 0.0
        %3219 = vmatprep.subr.mxu0 0.0
        %3220 = vmatpush1.msra.mxu0 0.0
        %3221 = vmatprep.subr.mxu0 0.0
        %3222 = vmatpush1.msra.mxu0 0.0
        %3223 = vmatprep.subr.mxu0 0.0
        %3224 = vmatpush1.msra.mxu0 0.0
        %3225 = vmatprep.subr.mxu0 0.0
        %3226 = vmatpush1.msra.mxu0 0.0
        %3227 = vmatprep.subr.mxu0 0.0
        %3228 = vmatpush1.msra.mxu0 0.0
        %3229 = vmatprep.subr.mxu0 0.0
        %3230 = vmatpush1.msra.mxu0 0.0
        %3231 = vmatprep.subr.mxu0 0.0
        %3232 = vmatpush1.msra.mxu0 0.0
        %3233 = vmatprep.subr.mxu0 0.0
        %3234 = vmatpush1.msra.mxu0 0.0
        %3235 = vmatprep.subr.mxu0 0.0
        %3236 = vmatpush1.msra.mxu0 0.0
        %3237 = vmatprep.subr.mxu0 0.0
        %3238 = vmatpush1.msra.mxu0 0.0
        %3239 = vmatprep.subr.mxu0 0.0
        %3240 = vmatpush1.msra.mxu0 0.0
        %3241 = vmatprep.subr.mxu0 0.0
        %3242 = vmatpush1.msra.mxu0 0.0
        %3243 = vmatprep.subr.mxu0 0.0
        %3244 = vmatpush1.msra.mxu0 %v1993
        %3245 = vmatprep.subr.mxu0 0.0
        %3246 = vmatpush2.msra.mxu0 0.0
        %3247 = vmatprep.subr.mxu0 0.0
        %3248 = vmatpush2.msra.mxu0 0.0
        %3249 = vmatprep.subr.mxu0 0.0
        %3250 = vmatpush2.msra.mxu0 0.0
        %3251 = vmatprep.subr.mxu0 0.0
        %3252 = vmatpush2.msra.mxu0 0.0
        %3253 = vmatprep.subr.mxu0 0.0
        %3254 = vmatpush2.msra.mxu0 0.0
        %3255 = vmatprep.subr.mxu0 0.0
        %3256 = vmatpush2.msra.mxu0 0.0
        %3257 = vmatprep.subr.mxu0 0.0
        %3258 = vmatpush2.msra.mxu0 0.0
        %3259 = vmatprep.subr.mxu0 0.0
        %3260 = vmatpush2.msra.mxu0 0.0
        %3261 = vmatprep.subr.mxu0 0.0
        %3262 = vmatpush2.msra.mxu0 0.0
        %3263 = vmatprep.subr.mxu0 0.0
        %3264 = vmatpush2.msra.mxu0 0.0
        %3265 = vmatprep.subr.mxu0 0.0
        %3266 = vmatpush2.msra.mxu0 0.0
        %3267 = vmatprep.subr.mxu0 0.0
        %3268 = vmatpush2.msra.mxu0 0.0
        %3269 = vmatprep.subr.mxu0 0.0
        %3270 = vmatpush2.msra.mxu0 0.0
        %3271 = vmatprep.subr.mxu0 0.0
        %3272 = vmatpush2.msra.mxu0 0.0
        %3273 = vmatprep.subr.mxu0 0.0
        %3274 = vmatpush2.msra.mxu0 0.0
        %3275 = vmatprep.subr.mxu0 0.0
        %3276 = vmatpush2.msra.mxu0 0.0
        %3277 = vmatprep.mubr.f32.mxu0 0.0
        %3278 = vmatmul.mubr.f32.gmra.mxu0 %v3211
        %v3279 = vpop.f32.mrf.mxu0
        %v3280 = vadd.f32 0.0, %v3279
        %v3281 = vpop.f32.mrf.mxu0
        %3282 = vdwg.mxu0
        %v3284 = vsel %vm2675, %v2763, 0
        %3286 = vmatprep.subr.mxu0 0.0
        %3287 = vmatpush1.msra.mxu0 0.0
        %3288 = vmatprep.subr.mxu0 0.0
        %3289 = vmatpush1.msra.mxu0 0.0
        %3290 = vmatprep.subr.mxu0 0.0
        %3291 = vmatpush1.msra.mxu0 0.0
        %3292 = vmatprep.subr.mxu0 0.0
        %3293 = vmatpush1.msra.mxu0 0.0
        %3294 = vmatprep.subr.mxu0 0.0
        %3295 = vmatpush1.msra.mxu0 0.0
        %3296 = vmatprep.subr.mxu0 0.0
        %3297 = vmatpush1.msra.mxu0 0.0
        %3298 = vmatprep.subr.mxu0 0.0
        %3299 = vmatpush1.msra.mxu0 0.0
        %3300 = vmatprep.subr.mxu0 0.0
        %3301 = vmatpush1.msra.mxu0 0.0
        %3302 = vmatprep.subr.mxu0 0.0
        %3303 = vmatpush1.msra.mxu0 0.0
        %3304 = vmatprep.subr.mxu0 0.0
        %3305 = vmatpush1.msra.mxu0 0.0
        %3306 = vmatprep.subr.mxu0 0.0
        %3307 = vmatpush1.msra.mxu0 0.0
        %3308 = vmatprep.subr.mxu0 0.0
        %3309 = vmatpush1.msra.mxu0 0.0
        %3310 = vmatprep.subr.mxu0 0.0
        %3311 = vmatpush1.msra.mxu0 0.0
        %3312 = vmatprep.subr.mxu0 0.0
        %3313 = vmatpush1.msra.mxu0 0.0
        %3314 = vmatprep.subr.mxu0 0.0
        %3315 = vmatpush1.msra.mxu0 0.0
        %3316 = vmatprep.subr.mxu0 0.0
        %3317 = vmatpush1.msra.mxu0 %v2063
        %3318 = vmatprep.subr.mxu0 0.0
        %3319 = vmatpush2.msra.mxu0 0.0
        %3320 = vmatprep.subr.mxu0 0.0
        %3321 = vmatpush2.msra.mxu0 0.0
        %3322 = vmatprep.subr.mxu0 0.0
        %3323 = vmatpush2.msra.mxu0 0.0
        %3324 = vmatprep.subr.mxu0 0.0
        %3325 = vmatpush2.msra.mxu0 0.0
        %3326 = vmatprep.subr.mxu0 0.0
        %3327 = vmatpush2.msra.mxu0 0.0
        %3328 = vmatprep.subr.mxu0 0.0
        %3329 = vmatpush2.msra.mxu0 0.0
        %3330 = vmatprep.subr.mxu0 0.0
        %3331 = vmatpush2.msra.mxu0 0.0
        %3332 = vmatprep.subr.mxu0 0.0
        %3333 = vmatpush2.msra.mxu0 0.0
        %3334 = vmatprep.subr.mxu0 0.0
        %3335 = vmatpush2.msra.mxu0 0.0
        %3336 = vmatprep.subr.mxu0 0.0
        %3337 = vmatpush2.msra.mxu0 0.0
        %3338 = vmatprep.subr.mxu0 0.0
        %3339 = vmatpush2.msra.mxu0 0.0
        %3340 = vmatprep.subr.mxu0 0.0
        %3341 = vmatpush2.msra.mxu0 0.0
        %3342 = vmatprep.subr.mxu0 0.0
        %3343 = vmatpush2.msra.mxu0 0.0
        %3344 = vmatprep.subr.mxu0 0.0
        %3345 = vmatpush2.msra.mxu0 0.0
        %3346 = vmatprep.subr.mxu0 0.0
        %3347 = vmatpush2.msra.mxu0 0.0
        %3348 = vmatprep.subr.mxu0 0.0
        %3349 = vmatpush2.msra.mxu0 0.0
        %3350 = vmatprep.mubr.f32.mxu0 0.0
        %3351 = vmatmul.mubr.f32.gmra.mxu0 %v3284
        %v3352 = vpop.f32.mrf.mxu0
        %v3353 = vadd.f32 0.0, %v3352
        %v3354 = vpop.f32.mrf.mxu0
        %3355 = vdwg.mxu0
        %v3356 = vld [vmem:[%s4] sm:$0xff]
        %v3357 = vld [vmem:[%s4 + $0x8] sm:$0xff]
        %v3358 = vld [vmem:[%s4 + $0x10] sm:$0xff]
        %v3359 = vld [vmem:[%s4 + $0x18] sm:$0xff]
        %v3360 = vld [vmem:[%s4 + $0x20] sm:$0xff]
        %v3361 = vld [vmem:[%s4 + $0x28] sm:$0xff]
        %v3362 = vld [vmem:[%s4 + $0x30] sm:$0xff]
        %v3363 = vld [vmem:[%s4 + $0x38] sm:$0xff]
        %v3364 = vld [vmem:[%s4 + $0x40] sm:$0xff]
        %v3365 = vld [vmem:[%s4 + $0x48] sm:$0xff]
        %v3366 = vld [vmem:[%s4 + $0x50] sm:$0xff]
        %v3367 = vld [vmem:[%s4 + $0x58] sm:$0xff]
        %v3368 = vld [vmem:[%s4 + $0x60] sm:$0xff]
        %v3369 = vld [vmem:[%s4 + $0x68] sm:$0xff]
        %v3370 = vld [vmem:[%s4 + $0x70] sm:$0xff]
        %v3371 = vld [vmem:[%s4 + $0x78] sm:$0xff]
        %v3373 = vsel %vm2066, %v2842, 0
        %3375 = vmatprep.subr.mxu0 0.0
        %3376 = vmatpush1.msra.mxu0 0.0
        %3377 = vmatprep.subr.mxu0 0.0
        %3378 = vmatpush1.msra.mxu0 0.0
        %3379 = vmatprep.subr.mxu0 0.0
        %3380 = vmatpush1.msra.mxu0 0.0
        %3381 = vmatprep.subr.mxu0 0.0
        %3382 = vmatpush1.msra.mxu0 0.0
        %3383 = vmatprep.subr.mxu0 0.0
        %3384 = vmatpush1.msra.mxu0 0.0
        %3385 = vmatprep.subr.mxu0 0.0
        %3386 = vmatpush1.msra.mxu0 0.0
        %3387 = vmatprep.subr.mxu0 0.0
        %3388 = vmatpush1.msra.mxu0 0.0
        %3389 = vmatprep.subr.mxu0 0.0
        %3390 = vmatpush1.msra.mxu0 0.0
        %3391 = vmatprep.subr.mxu0 0.0
        %3392 = vmatpush1.msra.mxu0 0.0
        %3393 = vmatprep.subr.mxu0 0.0
        %3394 = vmatpush1.msra.mxu0 0.0
        %3395 = vmatprep.subr.mxu0 0.0
        %3396 = vmatpush1.msra.mxu0 0.0
        %3397 = vmatprep.subr.mxu0 0.0
        %3398 = vmatpush1.msra.mxu0 0.0
        %3399 = vmatprep.subr.mxu0 0.0
        %3400 = vmatpush1.msra.mxu0 0.0
        %3401 = vmatprep.subr.mxu0 0.0
        %3402 = vmatpush1.msra.mxu0 0.0
        %3403 = vmatprep.subr.mxu0 0.0
        %3404 = vmatpush1.msra.mxu0 %v3357
        %3405 = vmatprep.subr.mxu0 0.0
        %3406 = vmatpush1.msra.mxu0 %v3356
        %3407 = vmatprep.subr.mxu0 0.0
        %3408 = vmatpush2.msra.mxu0 0.0
        %3409 = vmatprep.subr.mxu0 0.0
        %3410 = vmatpush2.msra.mxu0 0.0
        %3411 = vmatprep.subr.mxu0 0.0
        %3412 = vmatpush2.msra.mxu0 0.0
        %3413 = vmatprep.subr.mxu0 0.0
        %3414 = vmatpush2.msra.mxu0 0.0
        %3415 = vmatprep.subr.mxu0 0.0
        %3416 = vmatpush2.msra.mxu0 0.0
        %3417 = vmatprep.subr.mxu0 0.0
        %3418 = vmatpush2.msra.mxu0 0.0
        %3419 = vmatprep.subr.mxu0 0.0
        %3420 = vmatpush2.msra.mxu0 0.0
        %3421 = vmatprep.subr.mxu0 0.0
        %3422 = vmatpush2.msra.mxu0 0.0
        %3423 = vmatprep.subr.mxu0 0.0
        %3424 = vmatpush2.msra.mxu0 0.0
        %3425 = vmatprep.subr.mxu0 0.0
        %3426 = vmatpush2.msra.mxu0 0.0
        %3427 = vmatprep.subr.mxu0 0.0
        %3428 = vmatpush2.msra.mxu0 0.0
        %3429 = vmatprep.subr.mxu0 0.0
        %3430 = vmatpush2.msra.mxu0 0.0
        %3431 = vmatprep.subr.mxu0 0.0
        %3432 = vmatpush2.msra.mxu0 0.0
        %3433 = vmatprep.subr.mxu0 0.0
        %3434 = vmatpush2.msra.mxu0 0.0
        %3435 = vmatprep.subr.mxu0 0.0
        %3436 = vmatpush2.msra.mxu0 0.0
        %3437 = vmatprep.subr.mxu0 0.0
        %3438 = vmatpush2.msra.mxu0 0.0
        %3439 = vmatprep.mubr.f32.mxu0 0.0
        %3440 = vmatmul.mubr.f32.gmra.mxu0 %v3373
        %v3441 = vpop.f32.mrf.mxu0
        %v3442 = vadd.f32 0.0, %v3441
        %v3443 = vpop.f32.mrf.mxu0
        %3444 = vdwg.mxu0
        %v3446 = vsel %vm2066, %v2915, 0
        %3448 = vmatprep.subr.mxu0 0.0
        %3449 = vmatpush1.msra.mxu0 0.0
        %3450 = vmatprep.subr.mxu0 0.0
        %3451 = vmatpush1.msra.mxu0 0.0
        %3452 = vmatprep.subr.mxu0 0.0
        %3453 = vmatpush1.msra.mxu0 0.0
        %3454 = vmatprep.subr.mxu0 0.0
        %3455 = vmatpush1.msra.mxu0 0.0
        %3456 = vmatprep.subr.mxu0 0.0
        %3457 = vmatpush1.msra.mxu0 0.0
        %3458 = vmatprep.subr.mxu0 0.0
        %3459 = vmatpush1.msra.mxu0 0.0
        %3460 = vmatprep.subr.mxu0 0.0
        %3461 = vmatpush1.msra.mxu0 0.0
        %3462 = vmatprep.subr.mxu0 0.0
        %3463 = vmatpush1.msra.mxu0 0.0
        %3464 = vmatprep.subr.mxu0 0.0
        %3465 = vmatpush1.msra.mxu0 0.0
        %3466 = vmatprep.subr.mxu0 0.0
        %3467 = vmatpush1.msra.mxu0 0.0
        %3468 = vmatprep.subr.mxu0 0.0
        %3469 = vmatpush1.msra.mxu0 0.0
        %3470 = vmatprep.subr.mxu0 0.0
        %3471 = vmatpush1.msra.mxu0 0.0
        %3472 = vmatprep.subr.mxu0 0.0
        %3473 = vmatpush1.msra.mxu0 0.0
        %3474 = vmatprep.subr.mxu0 0.0
        %3475 = vmatpush1.msra.mxu0 0.0
        %3476 = vmatprep.subr.mxu0 0.0
        %3477 = vmatpush1.msra.mxu0 %v3359
        %3478 = vmatprep.subr.mxu0 0.0
        %3479 = vmatpush1.msra.mxu0 %v3358
        %3480 = vmatprep.subr.mxu0 0.0
        %3481 = vmatpush2.msra.mxu0 0.0
        %3482 = vmatprep.subr.mxu0 0.0
        %3483 = vmatpush2.msra.mxu0 0.0
        %3484 = vmatprep.subr.mxu0 0.0
        %3485 = vmatpush2.msra.mxu0 0.0
        %3486 = vmatprep.subr.mxu0 0.0
        %3487 = vmatpush2.msra.mxu0 0.0
        %3488 = vmatprep.subr.mxu0 0.0
        %3489 = vmatpush2.msra.mxu0 0.0
        %3490 = vmatprep.subr.mxu0 0.0
        %3491 = vmatpush2.msra.mxu0 0.0
        %3492 = vmatprep.subr.mxu0 0.0
        %3493 = vmatpush2.msra.mxu0 0.0
        %3494 = vmatprep.subr.mxu0 0.0
        %3495 = vmatpush2.msra.mxu0 0.0
        %3496 = vmatprep.subr.mxu0 0.0
        %3497 = vmatpush2.msra.mxu0 0.0
        %3498 = vmatprep.subr.mxu0 0.0
        %3499 = vmatpush2.msra.mxu0 0.0
        %3500 = vmatprep.subr.mxu0 0.0
        %3501 = vmatpush2.msra.mxu0 0.0
        %3502 = vmatprep.subr.mxu0 0.0
        %3503 = vmatpush2.msra.mxu0 0.0
        %3504 = vmatprep.subr.mxu0 0.0
        %3505 = vmatpush2.msra.mxu0 0.0
        %3506 = vmatprep.subr.mxu0 0.0
        %3507 = vmatpush2.msra.mxu0 0.0
        %3508 = vmatprep.subr.mxu0 0.0
        %3509 = vmatpush2.msra.mxu0 0.0
        %3510 = vmatprep.subr.mxu0 0.0
        %3511 = vmatpush2.msra.mxu0 0.0
        %3512 = vmatprep.mubr.f32.mxu0 0.0
        %3513 = vmatmul.mubr.f32.gmra.mxu0 %v3446
        %v3514 = vpop.f32.mrf.mxu0
        %v3515 = vadd.f32 0.0, %v3514
        %v3516 = vpop.f32.mrf.mxu0
        %3517 = vdwg.mxu0
        %v3519 = vsel %vm2066, %v2988, 0
        %3521 = vmatprep.subr.mxu0 0.0
        %3522 = vmatpush1.msra.mxu0 0.0
        %3523 = vmatprep.subr.mxu0 0.0
        %3524 = vmatpush1.msra.mxu0 0.0
        %3525 = vmatprep.subr.mxu0 0.0
        %3526 = vmatpush1.msra.mxu0 0.0
        %3527 = vmatprep.subr.mxu0 0.0
        %3528 = vmatpush1.msra.mxu0 0.0
        %3529 = vmatprep.subr.mxu0 0.0
        %3530 = vmatpush1.msra.mxu0 0.0
        %3531 = vmatprep.subr.mxu0 0.0
        %3532 = vmatpush1.msra.mxu0 0.0
        %3533 = vmatprep.subr.mxu0 0.0
        %3534 = vmatpush1.msra.mxu0 0.0
        %3535 = vmatprep.subr.mxu0 0.0
        %3536 = vmatpush1.msra.mxu0 0.0
        %3537 = vmatprep.subr.mxu0 0.0
        %3538 = vmatpush1.msra.mxu0 0.0
        %3539 = vmatprep.subr.mxu0 0.0
        %3540 = vmatpush1.msra.mxu0 0.0
        %3541 = vmatprep.subr.mxu0 0.0
        %3542 = vmatpush1.msra.mxu0 0.0
        %3543 = vmatprep.subr.mxu0 0.0
        %3544 = vmatpush1.msra.mxu0 0.0
        %3545 = vmatprep.subr.mxu0 0.0
        %3546 = vmatpush1.msra.mxu0 0.0
        %3547 = vmatprep.subr.mxu0 0.0
        %3548 = vmatpush1.msra.mxu0 0.0
        %3549 = vmatprep.subr.mxu0 0.0
        %3550 = vmatpush1.msra.mxu0 %v3361
        %3551 = vmatprep.subr.mxu0 0.0
        %3552 = vmatpush1.msra.mxu0 %v3360
        %3553 = vmatprep.subr.mxu0 0.0
        %3554 = vmatpush2.msra.mxu0 0.0
        %3555 = vmatprep.subr.mxu0 0.0
        %3556 = vmatpush2.msra.mxu0 0.0
        %3557 = vmatprep.subr.mxu0 0.0
        %3558 = vmatpush2.msra.mxu0 0.0
        %3559 = vmatprep.subr.mxu0 0.0
        %3560 = vmatpush2.msra.mxu0 0.0
        %3561 = vmatprep.subr.mxu0 0.0
        %3562 = vmatpush2.msra.mxu0 0.0
        %3563 = vmatprep.subr.mxu0 0.0
        %3564 = vmatpush2.msra.mxu0 0.0
        %3565 = vmatprep.subr.mxu0 0.0
        %3566 = vmatpush2.msra.mxu0 0.0
        %3567 = vmatprep.subr.mxu0 0.0
        %3568 = vmatpush2.msra.mxu0 0.0
        %3569 = vmatprep.subr.mxu0 0.0
        %3570 = vmatpush2.msra.mxu0 0.0
        %3571 = vmatprep.subr.mxu0 0.0
        %3572 = vmatpush2.msra.mxu0 0.0
        %3573 = vmatprep.subr.mxu0 0.0
        %3574 = vmatpush2.msra.mxu0 0.0
        %3575 = vmatprep.subr.mxu0 0.0
        %3576 = vmatpush2.msra.mxu0 0.0
        %3577 = vmatprep.subr.mxu0 0.0
        %3578 = vmatpush2.msra.mxu0 0.0
        %3579 = vmatprep.subr.mxu0 0.0
        %3580 = vmatpush2.msra.mxu0 0.0
        %3581 = vmatprep.subr.mxu0 0.0
        %3582 = vmatpush2.msra.mxu0 0.0
        %3583 = vmatprep.subr.mxu0 0.0
        %3584 = vmatpush2.msra.mxu0 0.0
        %3585 = vmatprep.mubr.f32.mxu0 0.0
        %3586 = vmatmul.mubr.f32.gmra.mxu0 %v3519
        %v3587 = vpop.f32.mrf.mxu0
        %v3588 = vadd.f32 0.0, %v3587
        %v3589 = vpop.f32.mrf.mxu0
        %3590 = vdwg.mxu0
        %v3592 = vsel %vm2066, %v3061, 0
        %3594 = vmatprep.subr.mxu0 0.0
        %3595 = vmatpush1.msra.mxu0 0.0
        %3596 = vmatprep.subr.mxu0 0.0
        %3597 = vmatpush1.msra.mxu0 0.0
        %3598 = vmatprep.subr.mxu0 0.0
        %3599 = vmatpush1.msra.mxu0 0.0
        %3600 = vmatprep.subr.mxu0 0.0
        %3601 = vmatpush1.msra.mxu0 0.0
        %3602 = vmatprep.subr.mxu0 0.0
        %3603 = vmatpush1.msra.mxu0 0.0
        %3604 = vmatprep.subr.mxu0 0.0
        %3605 = vmatpush1.msra.mxu0 0.0
        %3606 = vmatprep.subr.mxu0 0.0
        %3607 = vmatpush1.msra.mxu0 0.0
        %3608 = vmatprep.subr.mxu0 0.0
        %3609 = vmatpush1.msra.mxu0 0.0
        %3610 = vmatprep.subr.mxu0 0.0
        %3611 = vmatpush1.msra.mxu0 0.0
        %3612 = vmatprep.subr.mxu0 0.0
        %3613 = vmatpush1.msra.mxu0 0.0
        %3614 = vmatprep.subr.mxu0 0.0
        %3615 = vmatpush1.msra.mxu0 0.0
        %3616 = vmatprep.subr.mxu0 0.0
        %3617 = vmatpush1.msra.mxu0 0.0
        %3618 = vmatprep.subr.mxu0 0.0
        %3619 = vmatpush1.msra.mxu0 0.0
        %3620 = vmatprep.subr.mxu0 0.0
        %3621 = vmatpush1.msra.mxu0 0.0
        %3622 = vmatprep.subr.mxu0 0.0
        %3623 = vmatpush1.msra.mxu0 %v3363
        %3624 = vmatprep.subr.mxu0 0.0
        %3625 = vmatpush1.msra.mxu0 %v3362
        %3626 = vmatprep.subr.mxu0 0.0
        %3627 = vmatpush2.msra.mxu0 0.0
        %3628 = vmatprep.subr.mxu0 0.0
        %3629 = vmatpush2.msra.mxu0 0.0
        %3630 = vmatprep.subr.mxu0 0.0
        %3631 = vmatpush2.msra.mxu0 0.0
        %3632 = vmatprep.subr.mxu0 0.0
        %3633 = vmatpush2.msra.mxu0 0.0
        %3634 = vmatprep.subr.mxu0 0.0
        %3635 = vmatpush2.msra.mxu0 0.0
        %3636 = vmatprep.subr.mxu0 0.0
        %3637 = vmatpush2.msra.mxu0 0.0
        %3638 = vmatprep.subr.mxu0 0.0
        %3639 = vmatpush2.msra.mxu0 0.0
        %3640 = vmatprep.subr.mxu0 0.0
        %3641 = vmatpush2.msra.mxu0 0.0
        %3642 = vmatprep.subr.mxu0 0.0
        %3643 = vmatpush2.msra.mxu0 0.0
        %3644 = vmatprep.subr.mxu0 0.0
        %3645 = vmatpush2.msra.mxu0 0.0
        %3646 = vmatprep.subr.mxu0 0.0
        %3647 = vmatpush2.msra.mxu0 0.0
        %3648 = vmatprep.subr.mxu0 0.0
        %3649 = vmatpush2.msra.mxu0 0.0
        %3650 = vmatprep.subr.mxu0 0.0
        %3651 = vmatpush2.msra.mxu0 0.0
        %3652 = vmatprep.subr.mxu0 0.0
        %3653 = vmatpush2.msra.mxu0 0.0
        %3654 = vmatprep.subr.mxu0 0.0
        %3655 = vmatpush2.msra.mxu0 0.0
        %3656 = vmatprep.subr.mxu0 0.0
        %3657 = vmatpush2.msra.mxu0 0.0
        %3658 = vmatprep.mubr.f32.mxu0 0.0
        %3659 = vmatmul.mubr.f32.gmra.mxu0 %v3592
        %v3660 = vpop.f32.mrf.mxu0
        %v3661 = vadd.f32 0.0, %v3660
        %v3662 = vpop.f32.mrf.mxu0
        %3663 = vdwg.mxu0
        %v3665 = vsel %vm2066, %v3134, 0
        %3667 = vmatprep.subr.mxu0 0.0
        %3668 = vmatpush1.msra.mxu0 0.0
        %3669 = vmatprep.subr.mxu0 0.0
        %3670 = vmatpush1.msra.mxu0 0.0
        %3671 = vmatprep.subr.mxu0 0.0
        %3672 = vmatpush1.msra.mxu0 0.0
        %3673 = vmatprep.subr.mxu0 0.0
        %3674 = vmatpush1.msra.mxu0 0.0
        %3675 = vmatprep.subr.mxu0 0.0
        %3676 = vmatpush1.msra.mxu0 0.0
        %3677 = vmatprep.subr.mxu0 0.0
        %3678 = vmatpush1.msra.mxu0 0.0
        %3679 = vmatprep.subr.mxu0 0.0
        %3680 = vmatpush1.msra.mxu0 0.0
        %3681 = vmatprep.subr.mxu0 0.0
        %3682 = vmatpush1.msra.mxu0 0.0
        %3683 = vmatprep.subr.mxu0 0.0
        %3684 = vmatpush1.msra.mxu0 0.0
        %3685 = vmatprep.subr.mxu0 0.0
        %3686 = vmatpush1.msra.mxu0 0.0
        %3687 = vmatprep.subr.mxu0 0.0
        %3688 = vmatpush1.msra.mxu0 0.0
        %3689 = vmatprep.subr.mxu0 0.0
        %3690 = vmatpush1.msra.mxu0 0.0
        %3691 = vmatprep.subr.mxu0 0.0
        %3692 = vmatpush1.msra.mxu0 0.0
        %3693 = vmatprep.subr.mxu0 0.0
        %3694 = vmatpush1.msra.mxu0 0.0
        %3695 = vmatprep.subr.mxu0 0.0
        %3696 = vmatpush1.msra.mxu0 %v3365
        %3697 = vmatprep.subr.mxu0 0.0
        %3698 = vmatpush1.msra.mxu0 %v3364
        %3699 = vmatprep.subr.mxu0 0.0
        %3700 = vmatpush2.msra.mxu0 0.0
        %3701 = vmatprep.subr.mxu0 0.0
        %3702 = vmatpush2.msra.mxu0 0.0
        %3703 = vmatprep.subr.mxu0 0.0
        %3704 = vmatpush2.msra.mxu0 0.0
        %3705 = vmatprep.subr.mxu0 0.0
        %3706 = vmatpush2.msra.mxu0 0.0
        %3707 = vmatprep.subr.mxu0 0.0
        %3708 = vmatpush2.msra.mxu0 0.0
        %3709 = vmatprep.subr.mxu0 0.0
        %3710 = vmatpush2.msra.mxu0 0.0
        %3711 = vmatprep.subr.mxu0 0.0
        %3712 = vmatpush2.msra.mxu0 0.0
        %3713 = vmatprep.subr.mxu0 0.0
        %3714 = vmatpush2.msra.mxu0 0.0
        %3715 = vmatprep.subr.mxu0 0.0
        %3716 = vmatpush2.msra.mxu0 0.0
        %3717 = vmatprep.subr.mxu0 0.0
        %3718 = vmatpush2.msra.mxu0 0.0
        %3719 = vmatprep.subr.mxu0 0.0
        %3720 = vmatpush2.msra.mxu0 0.0
        %3721 = vmatprep.subr.mxu0 0.0
        %3722 = vmatpush2.msra.mxu0 0.0
        %3723 = vmatprep.subr.mxu0 0.0
        %3724 = vmatpush2.msra.mxu0 0.0
        %3725 = vmatprep.subr.mxu0 0.0
        %3726 = vmatpush2.msra.mxu0 0.0
        %3727 = vmatprep.subr.mxu0 0.0
        %3728 = vmatpush2.msra.mxu0 0.0
        %3729 = vmatprep.subr.mxu0 0.0
        %3730 = vmatpush2.msra.mxu0 0.0
        %3731 = vmatprep.mubr.f32.mxu0 0.0
        %3732 = vmatmul.mubr.f32.gmra.mxu0 %v3665
        %v3733 = vpop.f32.mrf.mxu0
        %v3734 = vadd.f32 0.0, %v3733
        %v3735 = vpop.f32.mrf.mxu0
        %3736 = vdwg.mxu0
        %v3738 = vsel %vm2066, %v3207, 0
        %3740 = vmatprep.subr.mxu0 0.0
        %3741 = vmatpush1.msra.mxu0 0.0
        %3742 = vmatprep.subr.mxu0 0.0
        %3743 = vmatpush1.msra.mxu0 0.0
        %3744 = vmatprep.subr.mxu0 0.0
        %3745 = vmatpush1.msra.mxu0 0.0
        %3746 = vmatprep.subr.mxu0 0.0
        %3747 = vmatpush1.msra.mxu0 0.0
        %3748 = vmatprep.subr.mxu0 0.0
        %3749 = vmatpush1.msra.mxu0 0.0
        %3750 = vmatprep.subr.mxu0 0.0
        %3751 = vmatpush1.msra.mxu0 0.0
        %3752 = vmatprep.subr.mxu0 0.0
        %3753 = vmatpush1.msra.mxu0 0.0
        %3754 = vmatprep.subr.mxu0 0.0
        %3755 = vmatpush1.msra.mxu0 0.0
        %3756 = vmatprep.subr.mxu0 0.0
        %3757 = vmatpush1.msra.mxu0 0.0
        %3758 = vmatprep.subr.mxu0 0.0
        %3759 = vmatpush1.msra.mxu0 0.0
        %3760 = vmatprep.subr.mxu0 0.0
        %3761 = vmatpush1.msra.mxu0 0.0
        %3762 = vmatprep.subr.mxu0 0.0
        %3763 = vmatpush1.msra.mxu0 0.0
        %3764 = vmatprep.subr.mxu0 0.0
        %3765 = vmatpush1.msra.mxu0 0.0
        %3766 = vmatprep.subr.mxu0 0.0
        %3767 = vmatpush1.msra.mxu0 0.0
        %3768 = vmatprep.subr.mxu0 0.0
        %3769 = vmatpush1.msra.mxu0 %v3367
        %3770 = vmatprep.subr.mxu0 0.0
        %3771 = vmatpush1.msra.mxu0 %v3366
        %3772 = vmatprep.subr.mxu0 0.0
        %3773 = vmatpush2.msra.mxu0 0.0
        %3774 = vmatprep.subr.mxu0 0.0
        %3775 = vmatpush2.msra.mxu0 0.0
        %3776 = vmatprep.subr.mxu0 0.0
        %3777 = vmatpush2.msra.mxu0 0.0
        %3778 = vmatprep.subr.mxu0 0.0
        %3779 = vmatpush2.msra.mxu0 0.0
        %3780 = vmatprep.subr.mxu0 0.0
        %3781 = vmatpush2.msra.mxu0 0.0
        %3782 = vmatprep.subr.mxu0 0.0
        %3783 = vmatpush2.msra.mxu0 0.0
        %3784 = vmatprep.subr.mxu0 0.0
        %3785 = vmatpush2.msra.mxu0 0.0
        %3786 = vmatprep.subr.mxu0 0.0
        %3787 = vmatpush2.msra.mxu0 0.0
        %3788 = vmatprep.subr.mxu0 0.0
        %3789 = vmatpush2.msra.mxu0 0.0
        %3790 = vmatprep.subr.mxu0 0.0
        %3791 = vmatpush2.msra.mxu0 0.0
        %3792 = vmatprep.subr.mxu0 0.0
        %3793 = vmatpush2.msra.mxu0 0.0
        %3794 = vmatprep.subr.mxu0 0.0
        %3795 = vmatpush2.msra.mxu0 0.0
        %3796 = vmatprep.subr.mxu0 0.0
        %3797 = vmatpush2.msra.mxu0 0.0
        %3798 = vmatprep.subr.mxu0 0.0
        %3799 = vmatpush2.msra.mxu0 0.0
        %3800 = vmatprep.subr.mxu0 0.0
        %3801 = vmatpush2.msra.mxu0 0.0
        %3802 = vmatprep.subr.mxu0 0.0
        %3803 = vmatpush2.msra.mxu0 0.0
        %3804 = vmatprep.mubr.f32.mxu0 0.0
        %3805 = vmatmul.mubr.f32.gmra.mxu0 %v3738
        %v3806 = vpop.f32.mrf.mxu0
        %v3807 = vadd.f32 0.0, %v3806
        %v3808 = vpop.f32.mrf.mxu0
        %3809 = vdwg.mxu0
        %v3811 = vsel %vm2066, %v3280, 0
        %3813 = vmatprep.subr.mxu0 0.0
        %3814 = vmatpush1.msra.mxu0 0.0
        %3815 = vmatprep.subr.mxu0 0.0
        %3816 = vmatpush1.msra.mxu0 0.0
        %3817 = vmatprep.subr.mxu0 0.0
        %3818 = vmatpush1.msra.mxu0 0.0
        %3819 = vmatprep.subr.mxu0 0.0
        %3820 = vmatpush1.msra.mxu0 0.0
        %3821 = vmatprep.subr.mxu0 0.0
        %3822 = vmatpush1.msra.mxu0 0.0
        %3823 = vmatprep.subr.mxu0 0.0
        %3824 = vmatpush1.msra.mxu0 0.0
        %3825 = vmatprep.subr.mxu0 0.0
        %3826 = vmatpush1.msra.mxu0 0.0
        %3827 = vmatprep.subr.mxu0 0.0
        %3828 = vmatpush1.msra.mxu0 0.0
        %3829 = vmatprep.subr.mxu0 0.0
        %3830 = vmatpush1.msra.mxu0 0.0
        %3831 = vmatprep.subr.mxu0 0.0
        %3832 = vmatpush1.msra.mxu0 0.0
        %3833 = vmatprep.subr.mxu0 0.0
        %3834 = vmatpush1.msra.mxu0 0.0
        %3835 = vmatprep.subr.mxu0 0.0
        %3836 = vmatpush1.msra.mxu0 0.0
        %3837 = vmatprep.subr.mxu0 0.0
        %3838 = vmatpush1.msra.mxu0 0.0
        %3839 = vmatprep.subr.mxu0 0.0
        %3840 = vmatpush1.msra.mxu0 0.0
        %3841 = vmatprep.subr.mxu0 0.0
        %3842 = vmatpush1.msra.mxu0 %v3369
        %3843 = vmatprep.subr.mxu0 0.0
        %3844 = vmatpush1.msra.mxu0 %v3368
        %3845 = vmatprep.subr.mxu0 0.0
        %3846 = vmatpush2.msra.mxu0 0.0
        %3847 = vmatprep.subr.mxu0 0.0
        %3848 = vmatpush2.msra.mxu0 0.0
        %3849 = vmatprep.subr.mxu0 0.0
        %3850 = vmatpush2.msra.mxu0 0.0
        %3851 = vmatprep.subr.mxu0 0.0
        %3852 = vmatpush2.msra.mxu0 0.0
        %3853 = vmatprep.subr.mxu0 0.0
        %3854 = vmatpush2.msra.mxu0 0.0
        %3855 = vmatprep.subr.mxu0 0.0
        %3856 = vmatpush2.msra.mxu0 0.0
        %3857 = vmatprep.subr.mxu0 0.0
        %3858 = vmatpush2.msra.mxu0 0.0
        %3859 = vmatprep.subr.mxu0 0.0
        %3860 = vmatpush2.msra.mxu0 0.0
        %3861 = vmatprep.subr.mxu0 0.0
        %3862 = vmatpush2.msra.mxu0 0.0
        %3863 = vmatprep.subr.mxu0 0.0
        %3864 = vmatpush2.msra.mxu0 0.0
        %3865 = vmatprep.subr.mxu0 0.0
        %3866 = vmatpush2.msra.mxu0 0.0
        %3867 = vmatprep.subr.mxu0 0.0
        %3868 = vmatpush2.msra.mxu0 0.0
        %3869 = vmatprep.subr.mxu0 0.0
        %3870 = vmatpush2.msra.mxu0 0.0
        %3871 = vmatprep.subr.mxu0 0.0
        %3872 = vmatpush2.msra.mxu0 0.0
        %3873 = vmatprep.subr.mxu0 0.0
        %3874 = vmatpush2.msra.mxu0 0.0
        %3875 = vmatprep.subr.mxu0 0.0
        %3876 = vmatpush2.msra.mxu0 0.0
        %3877 = vmatprep.mubr.f32.mxu0 0.0
        %3878 = vmatmul.mubr.f32.gmra.mxu0 %v3811
        %v3879 = vpop.f32.mrf.mxu0
        %v3880 = vadd.f32 0.0, %v3879
        %v3881 = vpop.f32.mrf.mxu0
        %3882 = vdwg.mxu0
        %v3884 = vsel %vm2066, %v3353, 0
        %3886 = vmatprep.subr.mxu0 0.0
        %3887 = vmatpush1.msra.mxu0 0.0
        %3888 = vmatprep.subr.mxu0 0.0
        %3889 = vmatpush1.msra.mxu0 0.0
        %3890 = vmatprep.subr.mxu0 0.0
        %3891 = vmatpush1.msra.mxu0 0.0
        %3892 = vmatprep.subr.mxu0 0.0
        %3893 = vmatpush1.msra.mxu0 0.0
        %3894 = vmatprep.subr.mxu0 0.0
        %3895 = vmatpush1.msra.mxu0 0.0
        %3896 = vmatprep.subr.mxu0 0.0
        %3897 = vmatpush1.msra.mxu0 0.0
        %3898 = vmatprep.subr.mxu0 0.0
        %3899 = vmatpush1.msra.mxu0 0.0
        %3900 = vmatprep.subr.mxu0 0.0
        %3901 = vmatpush1.msra.mxu0 0.0
        %3902 = vmatprep.subr.mxu0 0.0
        %3903 = vmatpush1.msra.mxu0 0.0
        %3904 = vmatprep.subr.mxu0 0.0
        %3905 = vmatpush1.msra.mxu0 0.0
        %3906 = vmatprep.subr.mxu0 0.0
        %3907 = vmatpush1.msra.mxu0 0.0
        %3908 = vmatprep.subr.mxu0 0.0
        %3909 = vmatpush1.msra.mxu0 0.0
        %3910 = vmatprep.subr.mxu0 0.0
        %3911 = vmatpush1.msra.mxu0 0.0
        %3912 = vmatprep.subr.mxu0 0.0
        %3913 = vmatpush1.msra.mxu0 0.0
        %3914 = vmatprep.subr.mxu0 0.0
        %3915 = vmatpush1.msra.mxu0 %v3371
        %3916 = vmatprep.subr.mxu0 0.0
        %3917 = vmatpush1.msra.mxu0 %v3370
        %3918 = vmatprep.subr.mxu0 0.0
        %3919 = vmatpush2.msra.mxu0 0.0
        %3920 = vmatprep.subr.mxu0 0.0
        %3921 = vmatpush2.msra.mxu0 0.0
        %3922 = vmatprep.subr.mxu0 0.0
        %3923 = vmatpush2.msra.mxu0 0.0
        %3924 = vmatprep.subr.mxu0 0.0
        %3925 = vmatpush2.msra.mxu0 0.0
        %3926 = vmatprep.subr.mxu0 0.0
        %3927 = vmatpush2.msra.mxu0 0.0
        %3928 = vmatprep.subr.mxu0 0.0
        %3929 = vmatpush2.msra.mxu0 0.0
        %3930 = vmatprep.subr.mxu0 0.0
        %3931 = vmatpush2.msra.mxu0 0.0
        %3932 = vmatprep.subr.mxu0 0.0
        %3933 = vmatpush2.msra.mxu0 0.0
        %3934 = vmatprep.subr.mxu0 0.0
        %3935 = vmatpush2.msra.mxu0 0.0
        %3936 = vmatprep.subr.mxu0 0.0
        %3937 = vmatpush2.msra.mxu0 0.0
        %3938 = vmatprep.subr.mxu0 0.0
        %3939 = vmatpush2.msra.mxu0 0.0
        %3940 = vmatprep.subr.mxu0 0.0
        %3941 = vmatpush2.msra.mxu0 0.0
        %3942 = vmatprep.subr.mxu0 0.0
        %3943 = vmatpush2.msra.mxu0 0.0
        %3944 = vmatprep.subr.mxu0 0.0
        %3945 = vmatpush2.msra.mxu0 0.0
        %3946 = vmatprep.subr.mxu0 0.0
        %3947 = vmatpush2.msra.mxu0 0.0
        %3948 = vmatprep.subr.mxu0 0.0
        %3949 = vmatpush2.msra.mxu0 0.0
        %3950 = vmatprep.mubr.f32.mxu0 0.0
        %3951 = vmatmul.mubr.f32.gmra.mxu0 %v3884
        %v3952 = vpop.f32.mrf.mxu0
        %v3953 = vadd.f32 0.0, %v3952
        %v3954 = vpop.f32.mrf.mxu0
        %3955 = vdwg.mxu0
        %v3956 = vsel %vm318, %v3442, 0.0
        %v3957 = vsel %vm318, %v3515, 0.0
        %v3958 = vadd.f32 %v3956, %v3957
        %v3959 = vsel %vm318, %v3588, 0.0
        %v3960 = vadd.f32 %v3958, %v3959
        %v3961 = vsel %vm318, %v3661, 0.0
        %v3962 = vadd.f32 %v3960, %v3961
        %v3963 = vsel %vm318, %v3734, 0.0
        %v3964 = vadd.f32 %v3962, %v3963
        %v3965 = vsel %vm318, %v3807, 0.0
        %v3966 = vadd.f32 %v3964, %v3965
        %v3967 = vsel %vm318, %v3880, 0.0
        %v3968 = vadd.f32 %v3966, %v3967
        %v3969 = vsel %vm318, %v3953, 0.0
        %v3970 = vadd.f32 %v3968, %v3969
        %v3971 = vld [vmem:[%s5] sm:$0x1]
        %v3973 = vlaneseq
        %v3974 = vshrl.u32 %v3973, 7
        %v3975 = vsub.s32 0, %v3974
        %v3976 = vrot.slane %v3971, %v3975
        %v3978 = vadd.f32 %v3970, %v3976
        %3979 = vst.msk [vmem:[%s273] sm:$0xff] %vm318, %v3978
        %s3980 = sand.u32 %s164, 1
        %s3981 = scalar_lea.sflag [#allocation3], %s3980
        %s3982 = sand.u32 %s164, 1
        %s3983 = smul.addr %s3982, 8
        %s3984 = scalar_lea.vmem [#allocation2], %s3983
        %s3985 = sand.u32 %s190, 1
        %s3986 = scalar_lea.sflag [#allocation5], %s3985
        %s3987 = sand.u32 %s190, 1
        %s3988 = smul.addr %s3987, 64
        %s3989 = scalar_lea.vmem [#allocation4], %s3988
        // Predicated region
        $region45: #{tpu_custom_call.1} parent=43 // pred_check
          %p3990 = pneg %p174
        $region46: #{tpu_custom_call.1} parent=43 // pred_check_branch
          %3992 = sbr.rel (%p3990) target = $region48
        $region47: #{tpu_custom_call.1} parent=43 // pred_region
          %s3994 = ssub.s32 128, 128
          %3995 = vsyncadd %s3981, %s3994
          %s3996 = smul.addr %s25, 128
          %s3997 = scalar_lea.hbm %s6, %s3996
          %s3999 = sshll.u32 %s3984, 4
          %s4000 = int_to_ptr.vmem [resolvable:$true] %s3999
          %4002 = dma.vmem_to_hbm [thread:$0]  %s4000, 128, %s3997, %s3981
        $region48: #{tpu_custom_call.1} parent=43 // pred_fallthru
          _
        // Predicated region
        $region49: #{tpu_custom_call.1} parent=43 // pred_check
          %p4003 = pneg %p200
        $region50: #{tpu_custom_call.1} parent=43 // pred_check_branch
          %4005 = sbr.rel (%p4003) target = $region52
        $region51: #{tpu_custom_call.1} parent=43 // pred_region
          %s4007 = ssub.s32 1024, 1024
          %4008 = vsyncadd %s3986, %s4007
          %s4009 = smul.addr %s25, 8
          %s4010 = smul.addr %s4009, 128
          %s4011 = scalar_lea.hbm %s7, %s4010
          %s4012 = sshll.u32 %s3989, 4
          %s4013 = int_to_ptr.vmem [resolvable:$true] %s4012
          %4018 = dma.vmem_to_hbm [thread:$0]  %s4013, 1024, %s4011, %s3986, 128, 128, 8
        $region52: #{tpu_custom_call.1} parent=43 // pred_fallthru
          _
      $region44: #{tpu_custom_call.1} parent=5 // pred_fallthru
        _
      %p4019 = scmp.le.s32.totalorder 2, %s20
      // Predicated region
      $region53: #{tpu_custom_call.1} parent=5 // pred_check
        %p4020 = pneg %p4019
      $region54: #{tpu_custom_call.1} parent=5 // pred_check_branch
        %4022 = sbr.rel (%p4020) target = $region56
      $region55: #{tpu_custom_call.1} parent=5 // pred_region
        %s4023 = ssub.s32 %s20, 2
        // Predicated region
        $region57: #{tpu_custom_call.1} parent=55 // pred_check
          %p4024 = pneg %p180
        $region58: #{tpu_custom_call.1} parent=55 // pred_check_branch
          %4026 = sbr.rel (%p4024) target = $region60
        $region59: #{tpu_custom_call.1} parent=55 // pred_region
          %s4027 = sand.u32 %s165, 1
          %s4028 = scalar_lea.sflag [#allocation3], %s4027
          %s4029 = sand.u32 %s165, 1
          %s4030 = smul.addr %s4029, 8
          %s4031 = scalar_lea.vmem [#allocation2], %s4030
          %4032 = dma.done %s4028, 128
        $region60: #{tpu_custom_call.1} parent=55 // pred_fallthru
          _
        // Predicated region
        $region61: #{tpu_custom_call.1} parent=55 // pred_check
          %p4033 = pneg %p206
        $region62: #{tpu_custom_call.1} parent=55 // pred_check_branch
          %4035 = sbr.rel (%p4033) target = $region64
        $region63: #{tpu_custom_call.1} parent=55 // pred_region
          %s4036 = sand.u32 %s191, 1
          %s4037 = scalar_lea.sflag [#allocation5], %s4036
          %s4038 = sand.u32 %s191, 1
          %s4039 = smul.addr %s4038, 64
          %s4040 = scalar_lea.vmem [#allocation4], %s4039
          %4041 = dma.done %s4037, 1024
        $region64: #{tpu_custom_call.1} parent=55 // pred_fallthru
          _
      $region56: #{tpu_custom_call.1} parent=5 // pred_fallthru
        _
    $region6: #{tpu_custom_call.1} parent=1 // loop_footer
      %s24 = sadd.s32 1, %s20
    $region7: #{tpu_custom_call.1} parent=1 // loop_footer_branch
      %19 = sbr.rel target = $region3
    $region8: #{tpu_custom_call.1} parent=1 // loop_exit
      _
    %4042 = vsyncpa [#allocation3], 1
    %s4043 = scalar_lea.sflag [#allocation3], 1
    %4044 = vsyncpa %s4043, 1
    %4045 = vsyncpa [#allocation5], 1
    %s4046 = scalar_lea.sflag [#allocation5], 1
    %4047 = vsyncpa %s4046, 1

</llo_original>
